<compile_context>
chip_gen: v7x
topology: tpu7x:2x2x1
jax: 0.10.0
libtpu: 0.0.40
codegen_flags: <defaults>
</compile_context>

<pallas_src>
import jax
import jax.numpy as jnp
from jax import lax
from jax.experimental import pallas as pl
from jax.experimental.pallas import tpu as pltpu


# ----------------------------------------------------------------------------
# Fused whole-network Pallas kernel (lane-dense (H, W*C) activation layout)
# ----------------------------------------------------------------------------

def _conv3x3_lane_dense(pad_ref, x, w_ref, H, W, C):
    """3x3 conv (stride 1, pad 1) on a lane-dense (H, W*C) activation value.

    The activation is stored once into the interior of the zero-halo scratch
    `pad_ref` (H+2, (W+2)*C); the nine im2col taps are windowed reads of that
    ref, concatenated along lanes in registers into an (H, 9*W*C) patch value,
    and contracted in a single bf16 MXU matmul with a block-diagonal-expanded
    weight matrix (9*W*C, W*Cout).  The result is lane-dense (H, W*Cout) f32.
    """
    WC = W * C
    pad_ref[1:H + 1, C:C + WC] = x                      # interior only; halo stays zero
    taps = [pad_ref[kh:kh + H, kw * C:kw * C + WC]      # 9 windowed reads (register taps)
            for kh in range(3) for kw in range(3)]
    patches = jnp.concatenate(taps, axis=-1).astype(jnp.bfloat16)   # (H, 9*W*C)
    return jnp.dot(patches, w_ref[...], preferred_element_type=jnp.float32)


def _fused_net_kernel(
        # ---- inputs ---------------------------------------------------------
        x_ref,                                   # (1, H, W*C) lane-dense image
        w0_ref, cb0_ref, bns_ref, bnb_ref,       # stem conv weight/bias, BN (folded, per-lane)
        w1_ref, s1_ref, b1_ref,                  # block conv1 (+ folded bn1)
        w2_ref, s2_ref, b2_ref,                  # block conv2 (+ folded bn2)
        pool_ref, fcw_ref, fcb_ref,              # pooling matrix, linear
        # ---- outputs: stored activations + logits ---------------------------
        conv_out_ref,   # stem conv output      -> BatchNorm2d.activation
        bn_out_ref,     # stem BN output        -> ReLU.activation
        relu_out_ref,   # stem ReLU output      -> block.conv1.activation
        blk_mid_ref,    # relu(bn1(conv1))      -> block.conv2.activation
        blk_pre_ref,    # bn2(conv2)            -> block.activation (pre-residual, like PyTorch)
        blk_out_ref,    # relu(pre + identity)  -> AdaptiveAvgPool2d.activation
        pooled_ref,     # flattened pooled      -> Linear.activation
        logits_ref,     # final network output
        # ---- scratch ---------------------------------------------------------
        pad_ref):
    _, H, WC = x_ref.shape
    C = pool_ref.shape[-1]
    W = WC // C
    PW = (W + 2) * C

    # Zero ONLY the 1-pixel halo (top/bottom rows, left/right channel groups).
    # Every conv rewrites the interior, so a full memset would be pure masked-
    # store filler.  Done every grid step (not pl.when(step==0)) so it stays
    # correct if the "parallel" axis is split across TensorCores, each with
    # its own scratch instance.
    zrow = jnp.zeros((1, PW), jnp.float32)
    zcol = jnp.zeros((H + 2, C), jnp.float32)
    pad_ref[0:1, :] = zrow
    pad_ref[H + 1:H + 2, :] = zrow
    pad_ref[:, 0:C] = zcol
    pad_ref[:, PW - C:PW] = zcol

    x = x_ref[0]                                             # (H, W*C) f32

    # --- stem: Conv2d(+bias) -> BatchNorm2d -> ReLU.  Each intermediate is the
    #     stored activation of the *next* module; the affine/ReLU epilogues
    #     stay fused in VMEM and operate on full 128-lane vregs.
    conv = _conv3x3_lane_dense(pad_ref, x, w0_ref, H, W, C) + cb0_ref[...]
    conv_out_ref[...] = conv.reshape(1, H, WC)
    bn = conv * bns_ref[...] + bnb_ref[...]
    bn_out_ref[...] = bn.reshape(1, H, WC)
    act = jnp.maximum(bn, 0.0)
    relu_out_ref[...] = act.reshape(1, H, WC)

    # --- BasicBlock (identity shortcut); BNs folded into conv epilogues.
    #     Live values feed the next conv -- no re-read of output refs.
    h = _conv3x3_lane_dense(pad_ref, act, w1_ref, H, W, C)
    h = jnp.maximum(h * s1_ref[...] + b1_ref[...], 0.0)
    blk_mid_ref[...] = h.reshape(1, H, WC)
    h = _conv3x3_lane_dense(pad_ref, h, w2_ref, H, W, C)
    h = h * s2_ref[...] + b2_ref[...]
    blk_pre_ref[...] = h.reshape(1, H, WC)        # PyTorch: block.activation = bn2(conv2)
    blk = jnp.maximum(h + act, 0.0)               # residual add + ReLU
    blk_out_ref[...] = blk.reshape(1, H, WC)

    # --- AdaptiveAvgPool2d((1,1)) + .view(N,-1) + Linear, fused.
    #     16-row sublane reduce, then the per-channel lane grouping as a small
    #     matmul against a constant pooling matrix (1/(H*W) folded in).
    rowsum = jnp.sum(blk, axis=0, keepdims=True)             # (1, W*C)
    pooled = jnp.dot(rowsum, pool_ref[...],
                     preferred_element_type=jnp.float32)     # (1, C)
    pooled_ref[...] = pooled.reshape(1, 1, C)
    logits = jnp.dot(pooled, fcw_ref[...],
                     preferred_element_type=jnp.float32) + fcb_ref[...]
    logits_ref[...] = logits.reshape(1, 1, fcb_ref.shape[-1])


def _run_fused_net(x_lane, p):
    N, H, WC = x_lane.shape
    C = p["pool"].shape[-1]
    W = WC // C
    OUT = p["fcw"].shape[-1]
    f32 = jnp.float32

    act_shape = jax.ShapeDtypeStruct((N, H, WC), f32)
    act_spec = pl.BlockSpec((1, H, WC), lambda n: (n, 0, 0))   # lane-dense, unmasked vst

    def full2d(arr):   # whole (small) parameter array, constant block index
        return pl.BlockSpec(arr.shape, lambda n: (0, 0))

    return pl.pallas_call(
        _fused_net_kernel,
        out_shape=(act_shape,) * 6 + (
            jax.ShapeDtypeStruct((N, 1, C), f32),
            jax.ShapeDtypeStruct((N, 1, OUT), f32),
        ),
        grid=(N,),
        in_specs=[
            pl.BlockSpec((1, H, WC), lambda n: (n, 0, 0)),
            full2d(p["w0"]), full2d(p["cb0"]), full2d(p["bns"]), full2d(p["bnb"]),
            full2d(p["w1"]), full2d(p["s1"]), full2d(p["b1"]),
            full2d(p["w2"]), full2d(p["s2"]), full2d(p["b2"]),
            full2d(p["pool"]), full2d(p["fcw"]), full2d(p["fcb"]),
        ],
        out_specs=(act_spec,) * 6 + (
            pl.BlockSpec((1, 1, C), lambda n: (n, 0, 0)),
            pl.BlockSpec((1, 1, OUT), lambda n: (n, 0, 0)),
        ),
        scratch_shapes=[
            pltpu.VMEM((H + 2, (W + 2) * C), f32),   # tiny zero-halo conv scratch (~10 KB)
        ],
        compiler_params=pltpu.CompilerParams(
            dimension_semantics=("parallel",)),       # keep N even -> both v7x TCs busy
    )(x_lane, p["w0"], p["cb0"], p["bns"], p["bnb"],
      p["w1"], p["s1"], p["b1"], p["w2"], p["s2"], p["b2"],
      p["pool"], p["fcw"], p["fcb"])


# ----------------------------------------------------------------------------
# Parameter containers (deterministic synthetic init, eval-mode semantics)
# ----------------------------------------------------------------------------

def _blockdiag_conv_weight(w_oihw, W, c_slot):
    """(Cout, Cin, 3, 3) -> (9*W*c_slot, W*Cout) bf16 block-diagonal weight.

    Tap order is (kh, kw); within a tap, rows are laid out lane-dense as
    (w, cin) and columns as (w, cout), so one MXU matmul against the
    concatenated taps yields the lane-dense conv output directly.  Input
    channels are zero-padded up to c_slot (stem: 4 -> 8)."""
    cin = w_oihw.shape[1]
    w = jnp.transpose(w_oihw, (2, 3, 1, 0)).astype(jnp.float32)   # (3,3,cin,cout)
    if cin < c_slot:
        w = jnp.pad(w, ((0, 0), (0, 0), (0, c_slot - cin), (0, 0)))
    eye = jnp.eye(W, dtype=jnp.float32)
    blocks = [jnp.kron(eye, w[kh, kw]) for kh in range(3) for kw in range(3)]
    return jnp.concatenate(blocks, axis=0).astype(jnp.bfloat16)


def _per_lane(v, W):
    """(C,) channel vector -> (1, W*C) per-lane vector (lane = w*C + c)."""
    return jnp.tile(v.astype(jnp.float32), W).reshape(1, -1)


def _fold_bn(bn):
    scale = bn.gamma / jnp.sqrt(bn.var + bn.eps)
    bias = bn.beta - bn.mean * scale
    return scale, bias


class Conv2dP:
    """Conv2d(cin -> cout, 3x3, stride 1, pad 1, bias=True)."""
    def __init__(self, key, cin, cout):
        kw_, kb_ = jax.random.split(key)
        self.w_oihw = jax.random.normal(kw_, (cout, cin, 3, 3), jnp.float32) * 0.1
        self.bias = jax.random.normal(kb_, (cout,), jnp.float32) * 0.1


class BatchNorm2dP:
    """Eval-mode BatchNorm2d parameters."""
    def __init__(self, key, c):
        kg, kb, km, kv = jax.random.split(key, 4)
        self.gamma = 1.0 + 0.1 * jax.random.normal(kg, (c,), jnp.float32)
        self.beta = 0.1 * jax.random.normal(kb, (c,), jnp.float32)
        self.mean = 0.1 * jax.random.normal(km, (c,), jnp.float32)
        self.var = 1.0 + 0.1 * jax.random.uniform(kv, (c,), jnp.float32)
        self.eps = 1e-5


class ReLUP:
    pass


class BasicBlockP:
    """ResNet BasicBlock (identity shortcut, bias-free 3x3 convs, eval BN)."""
    def __init__(self, key, c):
        k1, k2, k3, k4 = jax.random.split(key, 4)
        self.w1_oihw = jax.random.normal(k1, (c, c, 3, 3), jnp.float32) * 0.1
        self.w2_oihw = jax.random.normal(k2, (c, c, 3, 3), jnp.float32) * 0.1
        self.bn1 = BatchNorm2dP(k3, c)
        self.bn2 = BatchNorm2dP(k4, c)
        self.downsample = None  # TODO(synk): strided 1x1 downsample not implemented
        self.c = c


class AdaptiveAvgPool2dP:
    pass


class LinearP:
    def __init__(self, key, in_f, out_f):
        kw_, kb_ = jax.random.split(key)
        self.w = jax.random.normal(kw_, (out_f, in_f), jnp.float32) * 0.1
        self.b = jax.random.normal(kb_, (out_f,), jnp.float32) * 0.1


# ----------------------------------------------------------------------------
# ActivationStoringNet forward (same stored-activation semantics as PyTorch)
# ----------------------------------------------------------------------------

def activation_storing_forward(module_list, x_nchw):
    """Mirror of ActivationStoringNet.forward for the canonical
    Conv2d -> BatchNorm2d -> ReLU -> BasicBlock -> AdaptiveAvgPool2d -> Linear
    module list, executed as a single fused Pallas kernel.  Stored activations
    are converted NCHW <-> lane-dense once, outside the kernel."""
    expected = (Conv2dP, BatchNorm2dP, ReLUP, BasicBlockP,
                AdaptiveAvgPool2dP, LinearP)
    if len(module_list) != len(expected) or not all(
            isinstance(m, t) for m, t in zip(module_list, expected)):
        # TODO(synk): general module orderings / Bottleneck fall outside the fused path.
        raise NotImplementedError(
            "fused path supports conv->bn->relu->BasicBlock->avgpool->linear")
    conv, bn, _, block, _, fc = module_list

    N, cin, H, W = x_nchw.shape
    C = block.c
    bns, bnb = _fold_bn(bn)
    s1, b1 = _fold_bn(block.bn1)   # folded into block conv1 epilogue (+ReLU)
    s2, b2 = _fold_bn(block.bn2)   # folded into block conv2 epilogue
    params = dict(
        w0=_blockdiag_conv_weight(conv.w_oihw, W, C),
        cb0=_per_lane(conv.bias, W),
        bns=_per_lane(bns, W), bnb=_per_lane(bnb, W),
        w1=_blockdiag_conv_weight(block.w1_oihw, W, C),
        s1=_per_lane(s1, W), b1=_per_lane(b1, W),
        w2=_blockdiag_conv_weight(block.w2_oihw, W, C),
        s2=_per_lane(s2, W), b2=_per_lane(b2, W),
        pool=jnp.tile(jnp.eye(C, dtype=jnp.float32), (W, 1)) / float(H * W),
        fcw=fc.w.T.astype(jnp.float32), fcb=fc.b.reshape(1, -1),
    )

    # Single NCHW -> lane-dense (N, H, W*C) conversion, channels zero-padded
    # to the pipeline width C (the padded stem weight rows are zero).
    x_nhwc = jnp.transpose(x_nchw, (0, 2, 3, 1))
    if cin < C:
        x_nhwc = jnp.pad(x_nhwc, ((0, 0), (0, 0), (0, 0), (0, C - cin)))
    x_lane = x_nhwc.reshape(N, H, W * C)

    (conv_out, bn_out, relu_out, blk_mid, blk_pre, blk_out,
     pooled, logits) = _run_fused_net(x_lane, params)

    def nchw(a):                                        # once per stored act, after the kernel
        return jnp.transpose(a.reshape(N, H, W, C), (0, 3, 1, 2))

    module_stack = [
        {"type": "Conv2d", "activation": x_nchw},
        {"type": "BatchNorm2d", "activation": nchw(conv_out)},
        {"type": "ReLU", "activation": nchw(bn_out)},
        {"type": "BasicBlock",
         "conv1_activation": nchw(relu_out),
         "conv2_activation": nchw(blk_mid),
         "activation": nchw(blk_pre)},                  # bn2(conv2), pre-residual (as in PyTorch)
        {"type": "AdaptiveAvgPool2d", "activation": nchw(blk_out)},
        {"type": "Linear", "activation": pooled.reshape(N, -1)},
    ]
    return module_stack, logits.reshape(N, -1)


# ----------------------------------------------------------------------------
# Pure-XLA reference (numerical sanity check only)
# ----------------------------------------------------------------------------

def _reference_forward(module_list, x_nchw):
    conv, bn, _, block, _, fc = module_list
    x = jnp.transpose(x_nchw, (0, 2, 3, 1))
    dn = ("NHWC", "HWIO", "NHWC")

    def conv3x3(a, w_oihw):
        return lax.conv_general_dilated(
            a, jnp.transpose(w_oihw, (2, 3, 1, 0)), (1, 1), "SAME",
            dimension_numbers=dn, precision=lax.Precision.HIGHEST)

    def bn_apply(a, b):
        s = b.gamma / jnp.sqrt(b.var + b.eps)
        return a * s + (b.beta - b.mean * s)

    a = conv3x3(x, conv.w_oihw) + conv.bias
    a = jnp.maximum(bn_apply(a, bn), 0.0)
    identity = a
    h = jnp.maximum(bn_apply(conv3x3(a, block.w1_oihw), block.bn1), 0.0)
    h = bn_apply(conv3x3(h, block.w2_oihw), block.bn2)
    blk = jnp.maximum(h + identity, 0.0)
    pooled = jnp.mean(blk, axis=(1, 2))
    logits = jnp.dot(pooled, fc.w.T, precision=lax.Precision.HIGHEST) + fc.b
    return blk, logits


# ----------------------------------------------------------------------------
# main
# ----------------------------------------------------------------------------

if __name__ == "__main__":
    key = jax.random.PRNGKey(0)
    k_conv, k_bn, k_blk, k_fc, k_x = jax.random.split(key, 5)

    module_list = [
        Conv2dP(k_conv, cin=4, cout=8),
        BatchNorm2dP(k_bn, c=8),
        ReLUP(),
        BasicBlockP(k_blk, c=8),
        AdaptiveAvgPool2dP(),
        LinearP(k_fc, in_f=8, out_f=10),
    ]
    x = jax.random.normal(k_x, (2, 4, 16, 16), jnp.float32)   # NCHW like PyTorch

    module_stack, output = activation_storing_forward(module_list, x)
    jax.block_until_ready(output)

    assert output.shape == (2, 10)
    assert len(module_stack) == len(module_list)
    assert module_stack[4]["activation"].shape == (2, 8, 16, 16)
    assert module_stack[5]["activation"].shape == (2, 8)

    # Numerical sanity check against a HIGHEST-precision XLA reference.
    # bf16 MXU operands are a deliberate accuracy choice -> tolerance set accordingly.
    ref_blk_nhwc, ref_out = _reference_forward(module_list, x)
    ref_blk_nchw = jnp.transpose(ref_blk_nhwc, (0, 3, 1, 2))
    assert jnp.allclose(module_stack[4]["activation"], ref_blk_nchw,
                        atol=3e-2, rtol=3e-2)
    assert jnp.allclose(output, ref_out, atol=2e-2, rtol=2e-2)

    print("KERNEL_OK")
</pallas_src>

<mosaic_0001>
module attributes {stable_mosaic.version = 11 : i64} {
  func.func @_fused_net_kernel(%arg0: i32, %arg1: memref<1x16x128xf32, #tpu.memory_space<vmem>>, %arg2: memref<1152x128xbf16, #tpu.memory_space<vmem>>, %arg3: memref<1x128xf32, #tpu.memory_space<vmem>>, %arg4: memref<1x128xf32, #tpu.memory_space<vmem>>, %arg5: memref<1x128xf32, #tpu.memory_space<vmem>>, %arg6: memref<1152x128xbf16, #tpu.memory_space<vmem>>, %arg7: memref<1x128xf32, #tpu.memory_space<vmem>>, %arg8: memref<1x128xf32, #tpu.memory_space<vmem>>, %arg9: memref<1152x128xbf16, #tpu.memory_space<vmem>>, %arg10: memref<1x128xf32, #tpu.memory_space<vmem>>, %arg11: memref<1x128xf32, #tpu.memory_space<vmem>>, %arg12: memref<128x8xf32, #tpu.memory_space<vmem>>, %arg13: memref<8x10xf32, #tpu.memory_space<vmem>>, %arg14: memref<1x10xf32, #tpu.memory_space<vmem>>, %arg15: memref<1x16x128xf32, #tpu.memory_space<vmem>>, %arg16: memref<1x16x128xf32, #tpu.memory_space<vmem>>, %arg17: memref<1x16x128xf32, #tpu.memory_space<vmem>>, %arg18: memref<1x16x128xf32, #tpu.memory_space<vmem>>, %arg19: memref<1x16x128xf32, #tpu.memory_space<vmem>>, %arg20: memref<1x16x128xf32, #tpu.memory_space<vmem>>, %arg21: memref<1x1x8xf32, #tpu.memory_space<vmem>>, %arg22: memref<1x1x10xf32, #tpu.memory_space<vmem>>, %arg23: memref<18x144xf32, #tpu.memory_space<vmem>>) attributes {dimension_semantics = [#tpu.dimension_semantics<parallel>], iteration_bounds = array<i64: 2>, scalar_prefetch = 0 : i64, scratch_operands = 1 : i64, tpu.core_type = #tpu.core_type<tc>, window_params = [{transform_indices = @transform_0, window_bounds = array<i64: 1, 16, 128>}, {pipeline_mode = #tpu.pipeline_mode<synchronous>, transform_indices = @transform_1, window_bounds = array<i64: 1152, 128>}, {pipeline_mode = #tpu.pipeline_mode<synchronous>, transform_indices = @transform_2, window_bounds = array<i64: 1, 128>}, {pipeline_mode = #tpu.pipeline_mode<synchronous>, transform_indices = @transform_3, window_bounds = array<i64: 1, 128>}, {pipeline_mode = #tpu.pipeline_mode<synchronous>, transform_indices = @transform_4, window_bounds = array<i64: 1, 128>}, {pipeline_mode = #tpu.pipeline_mode<synchronous>, transform_indices = @transform_5, window_bounds = array<i64: 1152, 128>}, {pipeline_mode = #tpu.pipeline_mode<synchronous>, transform_indices = @transform_6, window_bounds = array<i64: 1, 128>}, {pipeline_mode = #tpu.pipeline_mode<synchronous>, transform_indices = @transform_7, window_bounds = array<i64: 1, 128>}, {pipeline_mode = #tpu.pipeline_mode<synchronous>, transform_indices = @transform_8, window_bounds = array<i64: 1152, 128>}, {pipeline_mode = #tpu.pipeline_mode<synchronous>, transform_indices = @transform_9, window_bounds = array<i64: 1, 128>}, {pipeline_mode = #tpu.pipeline_mode<synchronous>, transform_indices = @transform_10, window_bounds = array<i64: 1, 128>}, {pipeline_mode = #tpu.pipeline_mode<synchronous>, transform_indices = @transform_11, window_bounds = array<i64: 128, 8>}, {pipeline_mode = #tpu.pipeline_mode<synchronous>, transform_indices = @transform_12, window_bounds = array<i64: 8, 10>}, {pipeline_mode = #tpu.pipeline_mode<synchronous>, transform_indices = @transform_13, window_bounds = array<i64: 1, 10>}, {transform_indices = @transform_14, window_bounds = array<i64: 1, 16, 128>}, {transform_indices = @transform_15, window_bounds = array<i64: 1, 16, 128>}, {transform_indices = @transform_16, window_bounds = array<i64: 1, 16, 128>}, {transform_indices = @transform_17, window_bounds = array<i64: 1, 16, 128>}, {transform_indices = @transform_18, window_bounds = array<i64: 1, 16, 128>}, {transform_indices = @transform_19, window_bounds = array<i64: 1, 16, 128>}, {transform_indices = @transform_20, window_bounds = array<i64: 1, 1, 8>}, {transform_indices = @transform_21, window_bounds = array<i64: 1, 1, 10>}]} {
    %cst = arith.constant 0.000000e+00 : f32
    %0 = vector.broadcast %cst : f32 to vector<1x144xf32>
    %cst_0 = arith.constant 0.000000e+00 : f32
    %1 = vector.broadcast %cst_0 : f32 to vector<18x8xf32>
    %c0 = arith.constant 0 : index
    %c0_1 = arith.constant 0 : index
    %2 = vector.load %arg23[%c0, %c0_1] : memref<18x144xf32, #tpu.memory_space<vmem>>, vector<1x144xf32>
    tpu.vector_store %arg23[%c0, %c0_1], %0 {strides = array<i32>} : memref<18x144xf32, #tpu.memory_space<vmem>>, vector<1x144xf32>,
    %c17 = arith.constant 17 : index
    %c0_2 = arith.constant 0 : index
    %3 = vector.load %arg23[%c17, %c0_2] : memref<18x144xf32, #tpu.memory_space<vmem>>, vector<1x144xf32>
    tpu.vector_store %arg23[%c17, %c0_2], %0 {strides = array<i32>} : memref<18x144xf32, #tpu.memory_space<vmem>>, vector<1x144xf32>,
    %c0_3 = arith.constant 0 : index
    %c0_4 = arith.constant 0 : index
    %4 = vector.load %arg23[%c0_3, %c0_4] : memref<18x144xf32, #tpu.memory_space<vmem>>, vector<18x8xf32>
    tpu.vector_store %arg23[%c0_3, %c0_4], %1 {strides = array<i32>} : memref<18x144xf32, #tpu.memory_space<vmem>>, vector<18x8xf32>,
    %c0_5 = arith.constant 0 : index
    %c136 = arith.constant 136 : index
    %5 = vector.load %arg23[%c0_5, %c136] : memref<18x144xf32, #tpu.memory_space<vmem>>, vector<18x8xf32>
    tpu.vector_store %arg23[%c0_5, %c136], %1 {strides = array<i32>} : memref<18x144xf32, #tpu.memory_space<vmem>>, vector<18x8xf32>,
    %c0_6 = arith.constant 0 : index
    %c0_7 = arith.constant 0 : index
    %c0_8 = arith.constant 0 : index
    %6 = vector.load %arg1[%c0_6, %c0_7, %c0_8] : memref<1x16x128xf32, #tpu.memory_space<vmem>>, vector<1x16x128xf32>
    %7 = vector.shape_cast %6 : vector<1x16x128xf32> to vector<16x128xf32>
    %c1 = arith.constant 1 : index
    %c8 = arith.constant 8 : index
    %8 = vector.load %arg23[%c1, %c8] : memref<18x144xf32, #tpu.memory_space<vmem>>, vector<16x128xf32>
    tpu.vector_store %arg23[%c1, %c8], %7 {strides = array<i32>} : memref<18x144xf32, #tpu.memory_space<vmem>>, vector<16x128xf32>,
    %c0_9 = arith.constant 0 : index
    %c0_10 = arith.constant 0 : index
    %9 = vector.load %arg23[%c0_9, %c0_10] : memref<18x144xf32, #tpu.memory_space<vmem>>, vector<16x128xf32>
    %c0_11 = arith.constant 0 : index
    %c8_12 = arith.constant 8 : index
    %10 = vector.load %arg23[%c0_11, %c8_12] : memref<18x144xf32, #tpu.memory_space<vmem>>, vector<16x128xf32>
    %c0_13 = arith.constant 0 : index
    %c16 = arith.constant 16 : index
    %11 = vector.load %arg23[%c0_13, %c16] : memref<18x144xf32, #tpu.memory_space<vmem>>, vector<16x128xf32>
    %c1_14 = arith.constant 1 : index
    %c0_15 = arith.constant 0 : index
    %12 = vector.load %arg23[%c1_14, %c0_15] : memref<18x144xf32, #tpu.memory_space<vmem>>, vector<16x128xf32>
    %c1_16 = arith.constant 1 : index
    %c8_17 = arith.constant 8 : index
    %13 = vector.load %arg23[%c1_16, %c8_17] : memref<18x144xf32, #tpu.memory_space<vmem>>, vector<16x128xf32>
    %c1_18 = arith.constant 1 : index
    %c16_19 = arith.constant 16 : index
    %14 = vector.load %arg23[%c1_18, %c16_19] : memref<18x144xf32, #tpu.memory_space<vmem>>, vector<16x128xf32>
    %c2 = arith.constant 2 : index
    %c0_20 = arith.constant 0 : index
    %15 = vector.load %arg23[%c2, %c0_20] : memref<18x144xf32, #tpu.memory_space<vmem>>, vector<16x128xf32>
    %c2_21 = arith.constant 2 : index
    %c8_22 = arith.constant 8 : index
    %16 = vector.load %arg23[%c2_21, %c8_22] : memref<18x144xf32, #tpu.memory_space<vmem>>, vector<16x128xf32>
    %c2_23 = arith.constant 2 : index
    %c16_24 = arith.constant 16 : index
    %17 = vector.load %arg23[%c2_23, %c16_24] : memref<18x144xf32, #tpu.memory_space<vmem>>, vector<16x128xf32>
    %18 = tpu.concatenate %9, %10, %11, %12, %13, %14, %15, %16, %17 in 1 : vector<16x128xf32>, vector<16x128xf32>, vector<16x128xf32>, vector<16x128xf32>, vector<16x128xf32>, vector<16x128xf32>, vector<16x128xf32>, vector<16x128xf32>, vector<16x128xf32> -> vector<16x1152xf32>
    %19 = arith.truncf %18 : vector<16x1152xf32> to vector<16x1152xbf16>
    %c0_25 = arith.constant 0 : index
    %c0_26 = arith.constant 0 : index
    %20 = vector.load %arg2[%c0_25, %c0_26] : memref<1152x128xbf16, #tpu.memory_space<vmem>>, vector<1152x128xbf16>
    %cst_27 = arith.constant dense<0.000000e+00> : vector<16x128xf32>
    %21 = tpu.matmul %19, %20, %cst_27 {dimension_numbers = #tpu.dot_dimension_numbers<[1], [0], [0], [1], [0, 0, 1, 1], [], []>} : vector<16x1152xbf16>, vector<1152x128xbf16>, vector<16x128xf32> -> vector<16x128xf32>
    %c0_28 = arith.constant 0 : index
    %c0_29 = arith.constant 0 : index
    %22 = vector.load %arg3[%c0_28, %c0_29] : memref<1x128xf32, #tpu.memory_space<vmem>>, vector<1x128xf32>
    %23 = vector.broadcast %22 : vector<1x128xf32> to vector<16x128xf32>
    %24 = arith.addf %21, %23 : vector<16x128xf32>
    %25 = vector.shape_cast %24 : vector<16x128xf32> to vector<1x16x128xf32>
    %c0_30 = arith.constant 0 : index
    %c0_31 = arith.constant 0 : index
    %c0_32 = arith.constant 0 : index
    %26 = vector.load %arg15[%c0_30, %c0_31, %c0_32] : memref<1x16x128xf32, #tpu.memory_space<vmem>>, vector<1x16x128xf32>
    tpu.vector_store %arg15[%c0_30, %c0_31, %c0_32], %25 {strides = array<i32>} : memref<1x16x128xf32, #tpu.memory_space<vmem>>, vector<1x16x128xf32>,
    %c0_33 = arith.constant 0 : index
    %c0_34 = arith.constant 0 : index
    %27 = vector.load %arg4[%c0_33, %c0_34] : memref<1x128xf32, #tpu.memory_space<vmem>>, vector<1x128xf32>
    %28 = vector.broadcast %27 : vector<1x128xf32> to vector<16x128xf32>
    %29 = arith.mulf %24, %28 : vector<16x128xf32>
    %c0_35 = arith.constant 0 : index
    %c0_36 = arith.constant 0 : index
    %30 = vector.load %arg5[%c0_35, %c0_36] : memref<1x128xf32, #tpu.memory_space<vmem>>, vector<1x128xf32>
    %31 = vector.broadcast %30 : vector<1x128xf32> to vector<16x128xf32>
    %32 = arith.addf %29, %31 : vector<16x128xf32>
    %33 = vector.shape_cast %32 : vector<16x128xf32> to vector<1x16x128xf32>
    %c0_37 = arith.constant 0 : index
    %c0_38 = arith.constant 0 : index
    %c0_39 = arith.constant 0 : index
    %34 = vector.load %arg16[%c0_37, %c0_38, %c0_39] : memref<1x16x128xf32, #tpu.memory_space<vmem>>, vector<1x16x128xf32>
    tpu.vector_store %arg16[%c0_37, %c0_38, %c0_39], %33 {strides = array<i32>} : memref<1x16x128xf32, #tpu.memory_space<vmem>>, vector<1x16x128xf32>,
    %cst_40 = arith.constant 0.000000e+00 : f32
    %35 = vector.broadcast %cst_40 : f32 to vector<16x128xf32>
    %36 = arith.maximumf %32, %35 : vector<16x128xf32>
    %37 = vector.shape_cast %36 : vector<16x128xf32> to vector<1x16x128xf32>
    %c0_41 = arith.constant 0 : index
    %c0_42 = arith.constant 0 : index
    %c0_43 = arith.constant 0 : index
    %38 = vector.load %arg17[%c0_41, %c0_42, %c0_43] : memref<1x16x128xf32, #tpu.memory_space<vmem>>, vector<1x16x128xf32>
    tpu.vector_store %arg17[%c0_41, %c0_42, %c0_43], %37 {strides = array<i32>} : memref<1x16x128xf32, #tpu.memory_space<vmem>>, vector<1x16x128xf32>,
    %c1_44 = arith.constant 1 : index
    %c8_45 = arith.constant 8 : index
    %39 = vector.load %arg23[%c1_44, %c8_45] : memref<18x144xf32, #tpu.memory_space<vmem>>, vector<16x128xf32>
    tpu.vector_store %arg23[%c1_44, %c8_45], %36 {strides = array<i32>} : memref<18x144xf32, #tpu.memory_space<vmem>>, vector<16x128xf32>,
    %c0_46 = arith.constant 0 : index
    %c0_47 = arith.constant 0 : index
    %40 = vector.load %arg23[%c0_46, %c0_47] : memref<18x144xf32, #tpu.memory_space<vmem>>, vector<16x128xf32>
    %c0_48 = arith.constant 0 : index
    %c8_49 = arith.constant 8 : index
    %41 = vector.load %arg23[%c0_48, %c8_49] : memref<18x144xf32, #tpu.memory_space<vmem>>, vector<16x128xf32>
    %c0_50 = arith.constant 0 : index
    %c16_51 = arith.constant 16 : index
    %42 = vector.load %arg23[%c0_50, %c16_51] : memref<18x144xf32, #tpu.memory_space<vmem>>, vector<16x128xf32>
    %c1_52 = arith.constant 1 : index
    %c0_53 = arith.constant 0 : index
    %43 = vector.load %arg23[%c1_52, %c0_53] : memref<18x144xf32, #tpu.memory_space<vmem>>, vector<16x128xf32>
    %c1_54 = arith.constant 1 : index
    %c8_55 = arith.constant 8 : index
    %44 = vector.load %arg23[%c1_54, %c8_55] : memref<18x144xf32, #tpu.memory_space<vmem>>, vector<16x128xf32>
    %c1_56 = arith.constant 1 : index
    %c16_57 = arith.constant 16 : index
    %45 = vector.load %arg23[%c1_56, %c16_57] : memref<18x144xf32, #tpu.memory_space<vmem>>, vector<16x128xf32>
    %c2_58 = arith.constant 2 : index
    %c0_59 = arith.constant 0 : index
    %46 = vector.load %arg23[%c2_58, %c0_59] : memref<18x144xf32, #tpu.memory_space<vmem>>, vector<16x128xf32>
    %c2_60 = arith.constant 2 : index
    %c8_61 = arith.constant 8 : index
    %47 = vector.load %arg23[%c2_60, %c8_61] : memref<18x144xf32, #tpu.memory_space<vmem>>, vector<16x128xf32>
    %c2_62 = arith.constant 2 : index
    %c16_63 = arith.constant 16 : index
    %48 = vector.load %arg23[%c2_62, %c16_63] : memref<18x144xf32, #tpu.memory_space<vmem>>, vector<16x128xf32>
    %49 = tpu.concatenate %40, %41, %42, %43, %44, %45, %46, %47, %48 in 1 : vector<16x128xf32>, vector<16x128xf32>, vector<16x128xf32>, vector<16x128xf32>, vector<16x128xf32>, vector<16x128xf32>, vector<16x128xf32>, vector<16x128xf32>, vector<16x128xf32> -> vector<16x1152xf32>
    %50 = arith.truncf %49 : vector<16x1152xf32> to vector<16x1152xbf16>
    %c0_64 = arith.constant 0 : index
    %c0_65 = arith.constant 0 : index
    %51 = vector.load %arg6[%c0_64, %c0_65] : memref<1152x128xbf16, #tpu.memory_space<vmem>>, vector<1152x128xbf16>
    %cst_66 = arith.constant dense<0.000000e+00> : vector<16x128xf32>
    %52 = tpu.matmul %50, %51, %cst_66 {dimension_numbers = #tpu.dot_dimension_numbers<[1], [0], [0], [1], [0, 0, 1, 1], [], []>} : vector<16x1152xbf16>, vector<1152x128xbf16>, vector<16x128xf32> -> vector<16x128xf32>
    %c0_67 = arith.constant 0 : index
    %c0_68 = arith.constant 0 : index
    %53 = vector.load %arg7[%c0_67, %c0_68] : memref<1x128xf32, #tpu.memory_space<vmem>>, vector<1x128xf32>
    %54 = vector.broadcast %53 : vector<1x128xf32> to vector<16x128xf32>
    %55 = arith.mulf %52, %54 : vector<16x128xf32>
    %c0_69 = arith.constant 0 : index
    %c0_70 = arith.constant 0 : index
    %56 = vector.load %arg8[%c0_69, %c0_70] : memref<1x128xf32, #tpu.memory_space<vmem>>, vector<1x128xf32>
    %57 = vector.broadcast %56 : vector<1x128xf32> to vector<16x128xf32>
    %58 = arith.addf %55, %57 : vector<16x128xf32>
    %cst_71 = arith.constant 0.000000e+00 : f32
    %59 = vector.broadcast %cst_71 : f32 to vector<16x128xf32>
    %60 = arith.maximumf %58, %59 : vector<16x128xf32>
    %61 = vector.shape_cast %60 : vector<16x128xf32> to vector<1x16x128xf32>
    %c0_72 = arith.constant 0 : index
    %c0_73 = arith.constant 0 : index
    %c0_74 = arith.constant 0 : index
    %62 = vector.load %arg18[%c0_72, %c0_73, %c0_74] : memref<1x16x128xf32, #tpu.memory_space<vmem>>, vector<1x16x128xf32>
    tpu.vector_store %arg18[%c0_72, %c0_73, %c0_74], %61 {strides = array<i32>} : memref<1x16x128xf32, #tpu.memory_space<vmem>>, vector<1x16x128xf32>,
    %c1_75 = arith.constant 1 : index
    %c8_76 = arith.constant 8 : index
    %63 = vector.load %arg23[%c1_75, %c8_76] : memref<18x144xf32, #tpu.memory_space<vmem>>, vector<16x128xf32>
    tpu.vector_store %arg23[%c1_75, %c8_76], %60 {strides = array<i32>} : memref<18x144xf32, #tpu.memory_space<vmem>>, vector<16x128xf32>,
    %c0_77 = arith.constant 0 : index
    %c0_78 = arith.constant 0 : index
    %64 = vector.load %arg23[%c0_77, %c0_78] : memref<18x144xf32, #tpu.memory_space<vmem>>, vector<16x128xf32>
    %c0_79 = arith.constant 0 : index
    %c8_80 = arith.constant 8 : index
    %65 = vector.load %arg23[%c0_79, %c8_80] : memref<18x144xf32, #tpu.memory_space<vmem>>, vector<16x128xf32>
    %c0_81 = arith.constant 0 : index
    %c16_82 = arith.constant 16 : index
    %66 = vector.load %arg23[%c0_81, %c16_82] : memref<18x144xf32, #tpu.memory_space<vmem>>, vector<16x128xf32>
    %c1_83 = arith.constant 1 : index
    %c0_84 = arith.constant 0 : index
    %67 = vector.load %arg23[%c1_83, %c0_84] : memref<18x144xf32, #tpu.memory_space<vmem>>, vector<16x128xf32>
    %c1_85 = arith.constant 1 : index
    %c8_86 = arith.constant 8 : index
    %68 = vector.load %arg23[%c1_85, %c8_86] : memref<18x144xf32, #tpu.memory_space<vmem>>, vector<16x128xf32>
    %c1_87 = arith.constant 1 : index
    %c16_88 = arith.constant 16 : index
    %69 = vector.load %arg23[%c1_87, %c16_88] : memref<18x144xf32, #tpu.memory_space<vmem>>, vector<16x128xf32>
    %c2_89 = arith.constant 2 : index
    %c0_90 = arith.constant 0 : index
    %70 = vector.load %arg23[%c2_89, %c0_90] : memref<18x144xf32, #tpu.memory_space<vmem>>, vector<16x128xf32>
    %c2_91 = arith.constant 2 : index
    %c8_92 = arith.constant 8 : index
    %71 = vector.load %arg23[%c2_91, %c8_92] : memref<18x144xf32, #tpu.memory_space<vmem>>, vector<16x128xf32>
    %c2_93 = arith.constant 2 : index
    %c16_94 = arith.constant 16 : index
    %72 = vector.load %arg23[%c2_93, %c16_94] : memref<18x144xf32, #tpu.memory_space<vmem>>, vector<16x128xf32>
    %73 = tpu.concatenate %64, %65, %66, %67, %68, %69, %70, %71, %72 in 1 : vector<16x128xf32>, vector<16x128xf32>, vector<16x128xf32>, vector<16x128xf32>, vector<16x128xf32>, vector<16x128xf32>, vector<16x128xf32>, vector<16x128xf32>, vector<16x128xf32> -> vector<16x1152xf32>
    %74 = arith.truncf %73 : vector<16x1152xf32> to vector<16x1152xbf16>
    %c0_95 = arith.constant 0 : index
    %c0_96 = arith.constant 0 : index
    %75 = vector.load %arg9[%c0_95, %c0_96] : memref<1152x128xbf16, #tpu.memory_space<vmem>>, vector<1152x128xbf16>
    %cst_97 = arith.constant dense<0.000000e+00> : vector<16x128xf32>
    %76 = tpu.matmul %74, %75, %cst_97 {dimension_numbers = #tpu.dot_dimension_numbers<[1], [0], [0], [1], [0, 0, 1, 1], [], []>} : vector<16x1152xbf16>, vector<1152x128xbf16>, vector<16x128xf32> -> vector<16x128xf32>
    %c0_98 = arith.constant 0 : index
    %c0_99 = arith.constant 0 : index
    %77 = vector.load %arg10[%c0_98, %c0_99] : memref<1x128xf32, #tpu.memory_space<vmem>>, vector<1x128xf32>
    %78 = vector.broadcast %77 : vector<1x128xf32> to vector<16x128xf32>
    %79 = arith.mulf %76, %78 : vector<16x128xf32>
    %c0_100 = arith.constant 0 : index
    %c0_101 = arith.constant 0 : index
    %80 = vector.load %arg11[%c0_100, %c0_101] : memref<1x128xf32, #tpu.memory_space<vmem>>, vector<1x128xf32>
    %81 = vector.broadcast %80 : vector<1x128xf32> to vector<16x128xf32>
    %82 = arith.addf %79, %81 : vector<16x128xf32>
    %83 = vector.shape_cast %82 : vector<16x128xf32> to vector<1x16x128xf32>
    %c0_102 = arith.constant 0 : index
    %c0_103 = arith.constant 0 : index
    %c0_104 = arith.constant 0 : index
    %84 = vector.load %arg19[%c0_102, %c0_103, %c0_104] : memref<1x16x128xf32, #tpu.memory_space<vmem>>, vector<1x16x128xf32>
    tpu.vector_store %arg19[%c0_102, %c0_103, %c0_104], %83 {strides = array<i32>} : memref<1x16x128xf32, #tpu.memory_space<vmem>>, vector<1x16x128xf32>,
    %85 = arith.addf %82, %36 : vector<16x128xf32>
    %cst_105 = arith.constant 0.000000e+00 : f32
    %86 = vector.broadcast %cst_105 : f32 to vector<16x128xf32>
    %87 = arith.maximumf %85, %86 : vector<16x128xf32>
    %88 = vector.shape_cast %87 : vector<16x128xf32> to vector<1x16x128xf32>
    %c0_106 = arith.constant 0 : index
    %c0_107 = arith.constant 0 : index
    %c0_108 = arith.constant 0 : index
    %89 = vector.load %arg20[%c0_106, %c0_107, %c0_108] : memref<1x16x128xf32, #tpu.memory_space<vmem>>, vector<1x16x128xf32>
    tpu.vector_store %arg20[%c0_106, %c0_107, %c0_108], %88 {strides = array<i32>} : memref<1x16x128xf32, #tpu.memory_space<vmem>>, vector<1x16x128xf32>,
    %cst_109 = arith.constant dense<0.000000e+00> : vector<128xf32>
    %90 = vector.multi_reduction <add>, %87, %cst_109 [0] : vector<16x128xf32> to vector<128xf32>
    %91 = vector.shape_cast %90 : vector<128xf32> to vector<1x128xf32>
    %c0_110 = arith.constant 0 : index
    %c0_111 = arith.constant 0 : index
    %92 = vector.load %arg12[%c0_110, %c0_111] : memref<128x8xf32, #tpu.memory_space<vmem>>, vector<128x8xf32>
    %cst_112 = arith.constant dense<0.000000e+00> : vector<1x8xf32>
    %93 = tpu.matmul %91, %92, %cst_112 {dimension_numbers = #tpu.dot_dimension_numbers<[1], [0], [0], [1], [0, 0, 1, 1], [], []>} : vector<1x128xf32>, vector<128x8xf32>, vector<1x8xf32> -> vector<1x8xf32>
    %94 = vector.shape_cast %93 : vector<1x8xf32> to vector<1x1x8xf32>
    %c0_113 = arith.constant 0 : index
    %c0_114 = arith.constant 0 : index
    %c0_115 = arith.constant 0 : index
    %95 = vector.load %arg21[%c0_113, %c0_114, %c0_115] : memref<1x1x8xf32, #tpu.memory_space<vmem>>, vector<1x1x8xf32>
    tpu.vector_store %arg21[%c0_113, %c0_114, %c0_115], %94 {strides = array<i32>} : memref<1x1x8xf32, #tpu.memory_space<vmem>>, vector<1x1x8xf32>,
    %c0_116 = arith.constant 0 : index
    %c0_117 = arith.constant 0 : index
    %96 = vector.load %arg13[%c0_116, %c0_117] : memref<8x10xf32, #tpu.memory_space<vmem>>, vector<8x10xf32>
    %cst_118 = arith.constant dense<0.000000e+00> : vector<1x10xf32>
    %97 = tpu.matmul %93, %96, %cst_118 {dimension_numbers = #tpu.dot_dimension_numbers<[1], [0], [0], [1], [0, 0, 1, 1], [], []>} : vector<1x8xf32>, vector<8x10xf32>, vector<1x10xf32> -> vector<1x10xf32>
    %c0_119 = arith.constant 0 : index
    %c0_120 = arith.constant 0 : index
    %98 = vector.load %arg14[%c0_119, %c0_120] : memref<1x10xf32, #tpu.memory_space<vmem>>, vector<1x10xf32>
    %99 = arith.addf %97, %98 : vector<1x10xf32>
    %100 = vector.shape_cast %99 : vector<1x10xf32> to vector<1x1x10xf32>
    %c0_121 = arith.constant 0 : index
    %c0_122 = arith.constant 0 : index
    %c0_123 = arith.constant 0 : index
    %101 = vector.load %arg22[%c0_121, %c0_122, %c0_123] : memref<1x1x10xf32, #tpu.memory_space<vmem>>, vector<1x1x10xf32>
    tpu.vector_store %arg22[%c0_121, %c0_122, %c0_123], %100 {strides = array<i32>} : memref<1x1x10xf32, #tpu.memory_space<vmem>>, vector<1x1x10xf32>,
    return
  }
  func.func @transform_0(%arg0: i32) -> (i32, i32, i32) {
    %c0_i32 = arith.constant 0 : i32
    %c0_i32_0 = arith.constant 0 : i32
    %c0_i32_1 = arith.constant 0 : i32
    return %arg0, %c0_i32, %c0_i32_0 : i32, i32, i32
  }
  func.func @transform_1(%arg0: i32) -> (i32, i32) {
    %c0_i32 = arith.constant 0 : i32
    %c0_i32_0 = arith.constant 0 : i32
    %c0_i32_1 = arith.constant 0 : i32
    return %c0_i32, %c0_i32_0 : i32, i32
  }
  func.func @transform_2(%arg0: i32) -> (i32, i32) {
    %c0_i32 = arith.constant 0 : i32
    %c0_i32_0 = arith.constant 0 : i32
    %c0_i32_1 = arith.constant 0 : i32
    return %c0_i32, %c0_i32_0 : i32, i32
  }
  func.func @transform_3(%arg0: i32) -> (i32, i32) {
    %c0_i32 = arith.constant 0 : i32
    %c0_i32_0 = arith.constant 0 : i32
    %c0_i32_1 = arith.constant 0 : i32
    return %c0_i32, %c0_i32_0 : i32, i32
  }
  func.func @transform_4(%arg0: i32) -> (i32, i32) {
    %c0_i32 = arith.constant 0 : i32
    %c0_i32_0 = arith.constant 0 : i32
    %c0_i32_1 = arith.constant 0 : i32
    return %c0_i32, %c0_i32_0 : i32, i32
  }
  func.func @transform_5(%arg0: i32) -> (i32, i32) {
    %c0_i32 = arith.constant 0 : i32
    %c0_i32_0 = arith.constant 0 : i32
    %c0_i32_1 = arith.constant 0 : i32
    return %c0_i32, %c0_i32_0 : i32, i32
  }
  func.func @transform_6(%arg0: i32) -> (i32, i32) {
    %c0_i32 = arith.constant 0 : i32
    %c0_i32_0 = arith.constant 0 : i32
    %c0_i32_1 = arith.constant 0 : i32
    return %c0_i32, %c0_i32_0 : i32, i32
  }
  func.func @transform_7(%arg0: i32) -> (i32, i32) {
    %c0_i32 = arith.constant 0 : i32
    %c0_i32_0 = arith.constant 0 : i32
    %c0_i32_1 = arith.constant 0 : i32
    return %c0_i32, %c0_i32_0 : i32, i32
  }
  func.func @transform_8(%arg0: i32) -> (i32, i32) {
    %c0_i32 = arith.constant 0 : i32
    %c0_i32_0 = arith.constant 0 : i32
    %c0_i32_1 = arith.constant 0 : i32
    return %c0_i32, %c0_i32_0 : i32, i32
  }
  func.func @transform_9(%arg0: i32) -> (i32, i32) {
    %c0_i32 = arith.constant 0 : i32
    %c0_i32_0 = arith.constant 0 : i32
    %c0_i32_1 = arith.constant 0 : i32
    return %c0_i32, %c0_i32_0 : i32, i32
  }
  func.func @transform_10(%arg0: i32) -> (i32, i32) {
    %c0_i32 = arith.constant 0 : i32
    %c0_i32_0 = arith.constant 0 : i32
    %c0_i32_1 = arith.constant 0 : i32
    return %c0_i32, %c0_i32_0 : i32, i32
  }
  func.func @transform_11(%arg0: i32) -> (i32, i32) {
    %c0_i32 = arith.constant 0 : i32
    %c0_i32_0 = arith.constant 0 : i32
    %c0_i32_1 = arith.constant 0 : i32
    return %c0_i32, %c0_i32_0 : i32, i32
  }
  func.func @transform_12(%arg0: i32) -> (i32, i32) {
    %c0_i32 = arith.constant 0 : i32
    %c0_i32_0 = arith.constant 0 : i32
    %c0_i32_1 = arith.constant 0 : i32
    return %c0_i32, %c0_i32_0 : i32, i32
  }
  func.func @transform_13(%arg0: i32) -> (i32, i32) {
    %c0_i32 = arith.constant 0 : i32
    %c0_i32_0 = arith.constant 0 : i32
    %c0_i32_1 = arith.constant 0 : i32
    return %c0_i32, %c0_i32_0 : i32, i32
  }
  func.func @transform_14(%arg0: i32) -> (i32, i32, i32) {
    %c0_i32 = arith.constant 0 : i32
    %c0_i32_0 = arith.constant 0 : i32
    %c0_i32_1 = arith.constant 0 : i32
    return %arg0, %c0_i32, %c0_i32_0 : i32, i32, i32
  }
  func.func @transform_15(%arg0: i32) -> (i32, i32, i32) {
    %c0_i32 = arith.constant 0 : i32
    %c0_i32_0 = arith.constant 0 : i32
    %c0_i32_1 = arith.constant 0 : i32
    return %arg0, %c0_i32, %c0_i32_0 : i32, i32, i32
  }
  func.func @transform_16(%arg0: i32) -> (i32, i32, i32) {
    %c0_i32 = arith.constant 0 : i32
    %c0_i32_0 = arith.constant 0 : i32
    %c0_i32_1 = arith.constant 0 : i32
    return %arg0, %c0_i32, %c0_i32_0 : i32, i32, i32
  }
  func.func @transform_17(%arg0: i32) -> (i32, i32, i32) {
    %c0_i32 = arith.constant 0 : i32
    %c0_i32_0 = arith.constant 0 : i32
    %c0_i32_1 = arith.constant 0 : i32
    return %arg0, %c0_i32, %c0_i32_0 : i32, i32, i32
  }
  func.func @transform_18(%arg0: i32) -> (i32, i32, i32) {
    %c0_i32 = arith.constant 0 : i32
    %c0_i32_0 = arith.constant 0 : i32
    %c0_i32_1 = arith.constant 0 : i32
    return %arg0, %c0_i32, %c0_i32_0 : i32, i32, i32
  }
  func.func @transform_19(%arg0: i32) -> (i32, i32, i32) {
    %c0_i32 = arith.constant 0 : i32
    %c0_i32_0 = arith.constant 0 : i32
    %c0_i32_1 = arith.constant 0 : i32
    return %arg0, %c0_i32, %c0_i32_0 : i32, i32, i32
  }
  func.func @transform_20(%arg0: i32) -> (i32, i32, i32) {
    %c0_i32 = arith.constant 0 : i32
    %c0_i32_0 = arith.constant 0 : i32
    %c0_i32_1 = arith.constant 0 : i32
    return %arg0, %c0_i32, %c0_i32_0 : i32, i32, i32
  }
  func.func @transform_21(%arg0: i32) -> (i32, i32, i32) {
    %c0_i32 = arith.constant 0 : i32
    %c0_i32_0 = arith.constant 0 : i32
    %c0_i32_1 = arith.constant 0 : i32
    return %arg0, %c0_i32, %c0_i32_0 : i32, i32, i32
  }
}

</mosaic_0001>

<llo_original>
// kernel: tpu_custom_call.1
$region0: #{tpu_custom_call.1}
  #allocation0 [shape = 'u32[]', space=smem, size = 0x4, offset = 0x4, fixed_abs, tag = 'smem constant byte address 0x4 - core index']
  #allocation1 [shape = 'u32[144,128]{1,0:T(1,128)}', space=vmem, size = 0x12000, scoped, tag = 'internal scratch']
  #allocation2 [shape = 'f32[18,144]{1,0:T(8,128)}', space=vmem, size = 0x6000, scoped, tag = 'scratch operand']
  %s0 = inlined_call_operand.vmem [shape: f32[2,16,128], index: 0, kind: input, shape index: {}]
  %s1 = inlined_call_operand.hbm [shape: bf16[1152,128], index: 1, kind: input, shape index: {}]
  %s2 = inlined_call_operand.vmem [shape: f32[1,128], index: 2, kind: input, shape index: {}]
  %s3 = inlined_call_operand.vmem [shape: f32[1,128], index: 3, kind: input, shape index: {}]
  %s4 = inlined_call_operand.vmem [shape: f32[1,128], index: 4, kind: input, shape index: {}]
  %s5 = inlined_call_operand.hbm [shape: bf16[1152,128], index: 5, kind: input, shape index: {}]
  %s6 = inlined_call_operand.vmem [shape: f32[1,128], index: 6, kind: input, shape index: {}]
  %s7 = inlined_call_operand.vmem [shape: f32[1,128], index: 7, kind: input, shape index: {}]
  %s8 = inlined_call_operand.hbm [shape: bf16[1152,128], index: 8, kind: input, shape index: {}]
  %s9 = inlined_call_operand.vmem [shape: f32[1,128], index: 9, kind: input, shape index: {}]
  %s10 = inlined_call_operand.vmem [shape: f32[1,128], index: 10, kind: input, shape index: {}]
  %s11 = inlined_call_operand.vmem [shape: f32[128,8], index: 11, kind: input, shape index: {}]
  %s12 = inlined_call_operand.vmem [shape: f32[8,10], index: 12, kind: input, shape index: {}]
  %s13 = inlined_call_operand.vmem [shape: f32[1,10], index: 13, kind: input, shape index: {}]
  %s14 = inlined_call_operand.hbm [shape: f32[2,16,128], index: 14, kind: output, shape index: {0}]
  %s15 = inlined_call_operand.hbm [shape: f32[2,16,128], index: 15, kind: output, shape index: {1}]
  %s16 = inlined_call_operand.hbm [shape: f32[2,16,128], index: 16, kind: output, shape index: {2}]
  %s17 = inlined_call_operand.hbm [shape: f32[2,16,128], index: 17, kind: output, shape index: {3}]
  %s18 = inlined_call_operand.hbm [shape: f32[2,16,128], index: 18, kind: output, shape index: {4}]
  %s19 = inlined_call_operand.hbm [shape: f32[2,16,128], index: 19, kind: output, shape index: {5}]
  %s20 = inlined_call_operand.hbm [shape: f32[2,1,8], index: 20, kind: output, shape index: {6}]
  %s21 = inlined_call_operand.hbm [shape: f32[2,1,10], index: 21, kind: output, shape index: {7}]
  %22 = xla_tuple %s14, %s15, %s16, %s17, %s18, %s19, %s20, %s21
  %s23 = sld [smem:[#allocation0]]
  $region157: #{tpu_custom_call.1} parent=0
    _
  %s25 = ssub.s32 1, %s23
  %s26 = scalar_select 0, %s25, %s23
  $region1: #{tpu_custom_call.1} parent=0
    #allocation3 [shape = 'u8[294912]{0}', space=vmem, size = 0x48000, scoped, tag = 'input window, operand 1, single buffered']
    #allocation4 [shape = 's32[2]{0}', space=sflag, size = 0x8, scoped, tag = 'scoped memory for tpu_custom_call.1']
    #allocation5 [shape = 's32[2]{0}', space=sflag, size = 0x8, scoped, tag = 'scoped memory for tpu_custom_call.1']
    #allocation6 [shape = 'u8[294912]{0}', space=vmem, size = 0x48000, scoped, tag = 'input window, operand 5, single buffered']
    #allocation7 [shape = 's32[1]{0}', space=sflag, size = 0x4, scoped, tag = 'scoped memory for tpu_custom_call.1']
    #allocation8 [shape = 'u8[294912]{0}', space=vmem, size = 0x48000, scoped, tag = 'input window, operand 8, single buffered']
    #allocation9 [shape = 'u8[16384]{0}', space=vmem, size = 0x4000, scoped, tag = 'output window, operand 0']
    #allocation10 [shape = 'u8[16384]{0}', space=vmem, size = 0x4000, scoped, tag = 'output window, operand 1']
    #allocation11 [shape = 's32[2]{0}', space=sflag, size = 0x8, scoped, tag = 'scoped memory for tpu_custom_call.1']
    #allocation12 [shape = 'u8[16384]{0}', space=vmem, size = 0x4000, scoped, tag = 'output window, operand 2']
    #allocation13 [shape = 'u8[16384]{0}', space=vmem, size = 0x4000, scoped, tag = 'output window, operand 3']
    #allocation14 [shape = 's32[2]{0}', space=sflag, size = 0x8, scoped, tag = 'scoped memory for tpu_custom_call.1']
    #allocation15 [shape = 'u8[16384]{0}', space=vmem, size = 0x4000, scoped, tag = 'output window, operand 4']
    #allocation16 [shape = 'u8[16384]{0}', space=vmem, size = 0x4000, scoped, tag = 'output window, operand 5']
    #allocation17 [shape = 's32[2]{0}', space=sflag, size = 0x8, scoped, tag = 'scoped memory for tpu_custom_call.1']
    #allocation18 [shape = 'u8[1024]{0}', space=vmem, size = 0x400, scoped, tag = 'output window, operand 6']
    #allocation19 [shape = 'u8[1024]{0}', space=vmem, size = 0x400, scoped, tag = 'output window, operand 7']
    #allocation20 [shape = 's32[2]{0}', space=sflag, size = 0x8, scoped, tag = 'scoped memory for tpu_custom_call.1']
    %27 = vsyncpa [#allocation4], 0
    %28 = vsyncpa [#allocation7], 0
    %29 = vsyncpa [#allocation5], 0
    %s30 = scalar_lea.sflag [#allocation5], 1
    %31 = vsyncpa %s30, 0
    %32 = vsyncpa [#allocation11], 0
    %s33 = scalar_lea.sflag [#allocation11], 1
    %34 = vsyncpa %s33, 0
    %35 = vsyncpa [#allocation14], 0
    %s36 = scalar_lea.sflag [#allocation14], 1
    %37 = vsyncpa %s36, 0
    %38 = vsyncpa [#allocation17], 0
    %s39 = scalar_lea.sflag [#allocation17], 1
    %40 = vsyncpa %s39, 0
    %41 = vsyncpa [#allocation20], 0
    %s42 = scalar_lea.sflag [#allocation20], 1
    %43 = vsyncpa %s42, 0
    loop: start=0, step=1, limit=4
    $region2: #{tpu_custom_call.1} parent=1 // loop_pre_header
      _
    $region3: #{tpu_custom_call.1} parent=1 // loop_header
      %s45 = sphi 0, %s49
      %p46 = scmp.ge.s32.totalorder %s45, 4
      %s55 = sphi 0, %s57
      %s58 = sphi 0, %s55
      %s59 = sphi 0, %s58
      %s75 = sphi 0, %s59
      %s79 = sphi 0, %s79
      %s81 = sphi 0, %s79
      %s82 = sphi 0, %s81
      %s96 = sphi 0, %s82
      %s100 = sphi 0, %s100
      %s102 = sphi 0, %s100
      %s103 = sphi 0, %s102
      %s117 = sphi 0, %s103
      %s121 = sphi 0, %s121
      %s123 = sphi 0, %s121
      %s124 = sphi 0, %s123
      %s138 = sphi 0, %s124
      %s142 = sphi 0, %s142
      %s144 = sphi 0, %s142
      %s145 = sphi 0, %s144
      %s159 = sphi 0, %s145
      %s163 = sphi 0, %s163
      %s165 = sphi 0, %s163
      %s166 = sphi 0, %s165
      %s180 = sphi 0, %s166
      %s184 = sphi 0, %s184
      %s186 = sphi 0, %s184
      %s187 = sphi 0, %s186
      %s201 = sphi 0, %s187
      %s205 = sphi 0, %s205
      %s207 = sphi 0, %s205
      %s208 = sphi 0, %s207
      %s222 = sphi 0, %s208
      %s226 = sphi 0, %s226
      %s228 = sphi 0, %s226
      %s229 = sphi 0, %s228
      %s243 = sphi 0, %s229
      %s247 = sphi 0, %s247
      %s249 = sphi 0, %s247
      %s250 = sphi 0, %s249
      %s264 = sphi 0, %s250
      %s268 = sphi 0, %s268
      %s270 = sphi 0, %s268
      %s271 = sphi 0, %s270
      %s285 = sphi 0, %s271
      %s289 = sphi 0, %s289
      %s291 = sphi 0, %s289
      %s292 = sphi 0, %s291
      %s306 = sphi 0, %s292
      %s310 = sphi 0, %s310
      %s312 = sphi 0, %s310
      %s313 = sphi 0, %s312
      %s327 = sphi 0, %s313
      %s331 = sphi 0, %s331
      %s333 = sphi 0, %s331
      %s334 = sphi 0, %s333
      %s348 = sphi 0, %s334
      %s354 = sphi 0, %s356
      %s357 = sphi 0, %s354
      %s358 = sphi 0, %s357
      %s374 = sphi 0, %s358
      %s380 = sphi 0, %s382
      %s383 = sphi 0, %s380
      %s384 = sphi 0, %s383
      %s400 = sphi 0, %s384
      %s406 = sphi 0, %s408
      %s409 = sphi 0, %s406
      %s410 = sphi 0, %s409
      %s426 = sphi 0, %s410
      %s432 = sphi 0, %s434
      %s435 = sphi 0, %s432
      %s436 = sphi 0, %s435
      %s452 = sphi 0, %s436
      %s458 = sphi 0, %s460
      %s461 = sphi 0, %s458
      %s462 = sphi 0, %s461
      %s478 = sphi 0, %s462
      %s484 = sphi 0, %s486
      %s487 = sphi 0, %s484
      %s488 = sphi 0, %s487
      %s504 = sphi 0, %s488
      %s510 = sphi 0, %s512
      %s513 = sphi 0, %s510
      %s514 = sphi 0, %s513
      %s530 = sphi 0, %s514
      %s536 = sphi 0, %s538
      %s539 = sphi 0, %s536
      %s540 = sphi 0, %s539
      %s556 = sphi 0, %s540
    $region4: #{tpu_custom_call.1} parent=1 // loop_header_branch
      %48 = sbr.rel (%p46) target = $region8
    $region5: #{tpu_custom_call.1} parent=1 // loop_body
      %s50 = ssub.s32 %s45, 1
      %s51 = ssub.s32 %s45, 2
      %s52 = sadd.s32 %s45, 1
      %s53 = ssub.s32 %s45, %s52
      %p54 = scmp.eq.s32.totalorder %s53, 0
      %s56 = sadd.s32 %s55, 1
      %s57 = scalar_select %p54, %s55, %s56
      %p60 = pneg %p54
      %p61 = scmp.eq.s32.totalorder %s45, 1
      %p62 = por %p60, %p61
      %p63 = scmp.ne.s32.totalorder %s55, %s58
      %p64 = scmp.eq.s32.totalorder %s45, 0
      %p65 = por %p63, %p64
      %p66 = scmp.ne.s32.totalorder %s55, %s58
      %p67 = scmp.eq.s32.totalorder %s50, 1
      %p68 = por %p66, %p67
      %p69 = scmp.ne.s32.totalorder %s58, %s59
      %p70 = scmp.eq.s32.totalorder %s50, 0
      %p71 = por %p69, %p70
      %p72 = scmp.ne.s32.totalorder %s58, %s59
      %p73 = scmp.eq.s32.totalorder %s51, 1
      %p74 = por %p72, %p73
      %p76 = scmp.ne.s32.totalorder %s59, %s75
      %p77 = scmp.eq.s32.totalorder %s51, 0
      %p78 = por %p76, %p77
      %s80 = sadd.s32 %s79, 1
      %p83 = scmp.eq.s32.totalorder %s45, 1
      %p84 = scmp.ne.s32.totalorder %s79, %s81
      %p85 = scmp.eq.s32.totalorder %s45, 0
      %p86 = por %p84, %p85
      %p87 = scmp.ne.s32.totalorder %s79, %s81
      %p88 = scmp.eq.s32.totalorder %s50, 1
      %p89 = por %p87, %p88
      %p90 = scmp.ne.s32.totalorder %s81, %s82
      %p91 = scmp.eq.s32.totalorder %s50, 0
      %p92 = por %p90, %p91
      %p93 = scmp.ne.s32.totalorder %s81, %s82
      %p94 = scmp.eq.s32.totalorder %s51, 1
      %p95 = por %p93, %p94
      %p97 = scmp.ne.s32.totalorder %s82, %s96
      %p98 = scmp.eq.s32.totalorder %s51, 0
      %p99 = por %p97, %p98
      %s101 = sadd.s32 %s100, 1
      %p104 = scmp.eq.s32.totalorder %s45, 1
      %p105 = scmp.ne.s32.totalorder %s100, %s102
      %p106 = scmp.eq.s32.totalorder %s45, 0
      %p107 = por %p105, %p106
      %p108 = scmp.ne.s32.totalorder %s100, %s102
      %p109 = scmp.eq.s32.totalorder %s50, 1
      %p110 = por %p108, %p109
      %p111 = scmp.ne.s32.totalorder %s102, %s103
      %p112 = scmp.eq.s32.totalorder %s50, 0
      %p113 = por %p111, %p112
      %p114 = scmp.ne.s32.totalorder %s102, %s103
      %p115 = scmp.eq.s32.totalorder %s51, 1
      %p116 = por %p114, %p115
      %p118 = scmp.ne.s32.totalorder %s103, %s117
      %p119 = scmp.eq.s32.totalorder %s51, 0
      %p120 = por %p118, %p119
      %s122 = sadd.s32 %s121, 1
      %p125 = scmp.eq.s32.totalorder %s45, 1
      %p126 = scmp.ne.s32.totalorder %s121, %s123
      %p127 = scmp.eq.s32.totalorder %s45, 0
      %p128 = por %p126, %p127
      %p129 = scmp.ne.s32.totalorder %s121, %s123
      %p130 = scmp.eq.s32.totalorder %s50, 1
      %p131 = por %p129, %p130
      %p132 = scmp.ne.s32.totalorder %s123, %s124
      %p133 = scmp.eq.s32.totalorder %s50, 0
      %p134 = por %p132, %p133
      %p135 = scmp.ne.s32.totalorder %s123, %s124
      %p136 = scmp.eq.s32.totalorder %s51, 1
      %p137 = por %p135, %p136
      %p139 = scmp.ne.s32.totalorder %s124, %s138
      %p140 = scmp.eq.s32.totalorder %s51, 0
      %p141 = por %p139, %p140
      %s143 = sadd.s32 %s142, 1
      %p146 = scmp.eq.s32.totalorder %s45, 1
      %p147 = scmp.ne.s32.totalorder %s142, %s144
      %p148 = scmp.eq.s32.totalorder %s45, 0
      %p149 = por %p147, %p148
      %p150 = scmp.ne.s32.totalorder %s142, %s144
      %p151 = scmp.eq.s32.totalorder %s50, 1
      %p152 = por %p150, %p151
      %p153 = scmp.ne.s32.totalorder %s144, %s145
      %p154 = scmp.eq.s32.totalorder %s50, 0
      %p155 = por %p153, %p154
      %p156 = scmp.ne.s32.totalorder %s144, %s145
      %p157 = scmp.eq.s32.totalorder %s51, 1
      %p158 = por %p156, %p157
      %p160 = scmp.ne.s32.totalorder %s145, %s159
      %p161 = scmp.eq.s32.totalorder %s51, 0
      %p162 = por %p160, %p161
      %s164 = sadd.s32 %s163, 1
      %p167 = scmp.eq.s32.totalorder %s45, 1
      %p168 = scmp.ne.s32.totalorder %s163, %s165
      %p169 = scmp.eq.s32.totalorder %s45, 0
      %p170 = por %p168, %p169
      %p171 = scmp.ne.s32.totalorder %s163, %s165
      %p172 = scmp.eq.s32.totalorder %s50, 1
      %p173 = por %p171, %p172
      %p174 = scmp.ne.s32.totalorder %s165, %s166
      %p175 = scmp.eq.s32.totalorder %s50, 0
      %p176 = por %p174, %p175
      %p177 = scmp.ne.s32.totalorder %s165, %s166
      %p178 = scmp.eq.s32.totalorder %s51, 1
      %p179 = por %p177, %p178
      %p181 = scmp.ne.s32.totalorder %s166, %s180
      %p182 = scmp.eq.s32.totalorder %s51, 0
      %p183 = por %p181, %p182
      %s185 = sadd.s32 %s184, 1
      %p188 = scmp.eq.s32.totalorder %s45, 1
      %p189 = scmp.ne.s32.totalorder %s184, %s186
      %p190 = scmp.eq.s32.totalorder %s45, 0
      %p191 = por %p189, %p190
      %p192 = scmp.ne.s32.totalorder %s184, %s186
      %p193 = scmp.eq.s32.totalorder %s50, 1
      %p194 = por %p192, %p193
      %p195 = scmp.ne.s32.totalorder %s186, %s187
      %p196 = scmp.eq.s32.totalorder %s50, 0
      %p197 = por %p195, %p196
      %p198 = scmp.ne.s32.totalorder %s186, %s187
      %p199 = scmp.eq.s32.totalorder %s51, 1
      %p200 = por %p198, %p199
      %p202 = scmp.ne.s32.totalorder %s187, %s201
      %p203 = scmp.eq.s32.totalorder %s51, 0
      %p204 = por %p202, %p203
      %s206 = sadd.s32 %s205, 1
      %p209 = scmp.eq.s32.totalorder %s45, 1
      %p210 = scmp.ne.s32.totalorder %s205, %s207
      %p211 = scmp.eq.s32.totalorder %s45, 0
      %p212 = por %p210, %p211
      %p213 = scmp.ne.s32.totalorder %s205, %s207
      %p214 = scmp.eq.s32.totalorder %s50, 1
      %p215 = por %p213, %p214
      %p216 = scmp.ne.s32.totalorder %s207, %s208
      %p217 = scmp.eq.s32.totalorder %s50, 0
      %p218 = por %p216, %p217
      %p219 = scmp.ne.s32.totalorder %s207, %s208
      %p220 = scmp.eq.s32.totalorder %s51, 1
      %p221 = por %p219, %p220
      %p223 = scmp.ne.s32.totalorder %s208, %s222
      %p224 = scmp.eq.s32.totalorder %s51, 0
      %p225 = por %p223, %p224
      %s227 = sadd.s32 %s226, 1
      %p230 = scmp.eq.s32.totalorder %s45, 1
      %p231 = scmp.ne.s32.totalorder %s226, %s228
      %p232 = scmp.eq.s32.totalorder %s45, 0
      %p233 = por %p231, %p232
      %p234 = scmp.ne.s32.totalorder %s226, %s228
      %p235 = scmp.eq.s32.totalorder %s50, 1
      %p236 = por %p234, %p235
      %p237 = scmp.ne.s32.totalorder %s228, %s229
      %p238 = scmp.eq.s32.totalorder %s50, 0
      %p239 = por %p237, %p238
      %p240 = scmp.ne.s32.totalorder %s228, %s229
      %p241 = scmp.eq.s32.totalorder %s51, 1
      %p242 = por %p240, %p241
      %p244 = scmp.ne.s32.totalorder %s229, %s243
      %p245 = scmp.eq.s32.totalorder %s51, 0
      %p246 = por %p244, %p245
      %s248 = sadd.s32 %s247, 1
      %p251 = scmp.eq.s32.totalorder %s45, 1
      %p252 = scmp.ne.s32.totalorder %s247, %s249
      %p253 = scmp.eq.s32.totalorder %s45, 0
      %p254 = por %p252, %p253
      %p255 = scmp.ne.s32.totalorder %s247, %s249
      %p256 = scmp.eq.s32.totalorder %s50, 1
      %p257 = por %p255, %p256
      %p258 = scmp.ne.s32.totalorder %s249, %s250
      %p259 = scmp.eq.s32.totalorder %s50, 0
      %p260 = por %p258, %p259
      %p261 = scmp.ne.s32.totalorder %s249, %s250
      %p262 = scmp.eq.s32.totalorder %s51, 1
      %p263 = por %p261, %p262
      %p265 = scmp.ne.s32.totalorder %s250, %s264
      %p266 = scmp.eq.s32.totalorder %s51, 0
      %p267 = por %p265, %p266
      %s269 = sadd.s32 %s268, 1
      %p272 = scmp.eq.s32.totalorder %s45, 1
      %p273 = scmp.ne.s32.totalorder %s268, %s270
      %p274 = scmp.eq.s32.totalorder %s45, 0
      %p275 = por %p273, %p274
      %p276 = scmp.ne.s32.totalorder %s268, %s270
      %p277 = scmp.eq.s32.totalorder %s50, 1
      %p278 = por %p276, %p277
      %p279 = scmp.ne.s32.totalorder %s270, %s271
      %p280 = scmp.eq.s32.totalorder %s50, 0
      %p281 = por %p279, %p280
      %p282 = scmp.ne.s32.totalorder %s270, %s271
      %p283 = scmp.eq.s32.totalorder %s51, 1
      %p284 = por %p282, %p283
      %p286 = scmp.ne.s32.totalorder %s271, %s285
      %p287 = scmp.eq.s32.totalorder %s51, 0
      %p288 = por %p286, %p287
      %s290 = sadd.s32 %s289, 1
      %p293 = scmp.eq.s32.totalorder %s45, 1
      %p294 = scmp.ne.s32.totalorder %s289, %s291
      %p295 = scmp.eq.s32.totalorder %s45, 0
      %p296 = por %p294, %p295
      %p297 = scmp.ne.s32.totalorder %s289, %s291
      %p298 = scmp.eq.s32.totalorder %s50, 1
      %p299 = por %p297, %p298
      %p300 = scmp.ne.s32.totalorder %s291, %s292
      %p301 = scmp.eq.s32.totalorder %s50, 0
      %p302 = por %p300, %p301
      %p303 = scmp.ne.s32.totalorder %s291, %s292
      %p304 = scmp.eq.s32.totalorder %s51, 1
      %p305 = por %p303, %p304
      %p307 = scmp.ne.s32.totalorder %s292, %s306
      %p308 = scmp.eq.s32.totalorder %s51, 0
      %p309 = por %p307, %p308
      %s311 = sadd.s32 %s310, 1
      %p314 = scmp.eq.s32.totalorder %s45, 1
      %p315 = scmp.ne.s32.totalorder %s310, %s312
      %p316 = scmp.eq.s32.totalorder %s45, 0
      %p317 = por %p315, %p316
      %p318 = scmp.ne.s32.totalorder %s310, %s312
      %p319 = scmp.eq.s32.totalorder %s50, 1
      %p320 = por %p318, %p319
      %p321 = scmp.ne.s32.totalorder %s312, %s313
      %p322 = scmp.eq.s32.totalorder %s50, 0
      %p323 = por %p321, %p322
      %p324 = scmp.ne.s32.totalorder %s312, %s313
      %p325 = scmp.eq.s32.totalorder %s51, 1
      %p326 = por %p324, %p325
      %p328 = scmp.ne.s32.totalorder %s313, %s327
      %p329 = scmp.eq.s32.totalorder %s51, 0
      %p330 = por %p328, %p329
      %s332 = sadd.s32 %s331, 1
      %p335 = scmp.eq.s32.totalorder %s45, 1
      %p336 = scmp.ne.s32.totalorder %s331, %s333
      %p337 = scmp.eq.s32.totalorder %s45, 0
      %p338 = por %p336, %p337
      %p339 = scmp.ne.s32.totalorder %s331, %s333
      %p340 = scmp.eq.s32.totalorder %s50, 1
      %p341 = por %p339, %p340
      %p342 = scmp.ne.s32.totalorder %s333, %s334
      %p343 = scmp.eq.s32.totalorder %s50, 0
      %p344 = por %p342, %p343
      %p345 = scmp.ne.s32.totalorder %s333, %s334
      %p346 = scmp.eq.s32.totalorder %s51, 1
      %p347 = por %p345, %p346
      %p349 = scmp.ne.s32.totalorder %s334, %s348
      %p350 = scmp.eq.s32.totalorder %s51, 0
      %p351 = por %p349, %p350
      %s352 = ssub.s32 %s45, %s52
      %p353 = scmp.eq.s32.totalorder %s352, 0
      %s355 = sadd.s32 %s354, 1
      %s356 = scalar_select %p353, %s354, %s355
      %p359 = pneg %p353
      %p360 = scmp.eq.s32.totalorder %s45, 1
      %p361 = por %p359, %p360
      %p362 = scmp.ne.s32.totalorder %s354, %s357
      %p363 = scmp.eq.s32.totalorder %s45, 0
      %p364 = por %p362, %p363
      %p365 = scmp.ne.s32.totalorder %s354, %s357
      %p366 = scmp.eq.s32.totalorder %s50, 1
      %p367 = por %p365, %p366
      %p368 = scmp.ne.s32.totalorder %s357, %s358
      %p369 = scmp.eq.s32.totalorder %s50, 0
      %p370 = por %p368, %p369
      %p371 = scmp.ne.s32.totalorder %s357, %s358
      %p372 = scmp.eq.s32.totalorder %s51, 1
      %p373 = por %p371, %p372
      %p375 = scmp.ne.s32.totalorder %s358, %s374
      %p376 = scmp.eq.s32.totalorder %s51, 0
      %p377 = por %p375, %p376
      %s378 = ssub.s32 %s45, %s52
      %p379 = scmp.eq.s32.totalorder %s378, 0
      %s381 = sadd.s32 %s380, 1
      %s382 = scalar_select %p379, %s380, %s381
      %p385 = pneg %p379
      %p386 = scmp.eq.s32.totalorder %s45, 1
      %p387 = por %p385, %p386
      %p388 = scmp.ne.s32.totalorder %s380, %s383
      %p389 = scmp.eq.s32.totalorder %s45, 0
      %p390 = por %p388, %p389
      %p391 = scmp.ne.s32.totalorder %s380, %s383
      %p392 = scmp.eq.s32.totalorder %s50, 1
      %p393 = por %p391, %p392
      %p394 = scmp.ne.s32.totalorder %s383, %s384
      %p395 = scmp.eq.s32.totalorder %s50, 0
      %p396 = por %p394, %p395
      %p397 = scmp.ne.s32.totalorder %s383, %s384
      %p398 = scmp.eq.s32.totalorder %s51, 1
      %p399 = por %p397, %p398
      %p401 = scmp.ne.s32.totalorder %s384, %s400
      %p402 = scmp.eq.s32.totalorder %s51, 0
      %p403 = por %p401, %p402
      %s404 = ssub.s32 %s45, %s52
      %p405 = scmp.eq.s32.totalorder %s404, 0
      %s407 = sadd.s32 %s406, 1
      %s408 = scalar_select %p405, %s406, %s407
      %p411 = pneg %p405
      %p412 = scmp.eq.s32.totalorder %s45, 1
      %p413 = por %p411, %p412
      %p414 = scmp.ne.s32.totalorder %s406, %s409
      %p415 = scmp.eq.s32.totalorder %s45, 0
      %p416 = por %p414, %p415
      %p417 = scmp.ne.s32.totalorder %s406, %s409
      %p418 = scmp.eq.s32.totalorder %s50, 1
      %p419 = por %p417, %p418
      %p420 = scmp.ne.s32.totalorder %s409, %s410
      %p421 = scmp.eq.s32.totalorder %s50, 0
      %p422 = por %p420, %p421
      %p423 = scmp.ne.s32.totalorder %s409, %s410
      %p424 = scmp.eq.s32.totalorder %s51, 1
      %p425 = por %p423, %p424
      %p427 = scmp.ne.s32.totalorder %s410, %s426
      %p428 = scmp.eq.s32.totalorder %s51, 0
      %p429 = por %p427, %p428
      %s430 = ssub.s32 %s45, %s52
      %p431 = scmp.eq.s32.totalorder %s430, 0
      %s433 = sadd.s32 %s432, 1
      %s434 = scalar_select %p431, %s432, %s433
      %p437 = pneg %p431
      %p438 = scmp.eq.s32.totalorder %s45, 1
      %p439 = por %p437, %p438
      %p440 = scmp.ne.s32.totalorder %s432, %s435
      %p441 = scmp.eq.s32.totalorder %s45, 0
      %p442 = por %p440, %p441
      %p443 = scmp.ne.s32.totalorder %s432, %s435
      %p444 = scmp.eq.s32.totalorder %s50, 1
      %p445 = por %p443, %p444
      %p446 = scmp.ne.s32.totalorder %s435, %s436
      %p447 = scmp.eq.s32.totalorder %s50, 0
      %p448 = por %p446, %p447
      %p449 = scmp.ne.s32.totalorder %s435, %s436
      %p450 = scmp.eq.s32.totalorder %s51, 1
      %p451 = por %p449, %p450
      %p453 = scmp.ne.s32.totalorder %s436, %s452
      %p454 = scmp.eq.s32.totalorder %s51, 0
      %p455 = por %p453, %p454
      %s456 = ssub.s32 %s45, %s52
      %p457 = scmp.eq.s32.totalorder %s456, 0
      %s459 = sadd.s32 %s458, 1
      %s460 = scalar_select %p457, %s458, %s459
      %p463 = pneg %p457
      %p464 = scmp.eq.s32.totalorder %s45, 1
      %p465 = por %p463, %p464
      %p466 = scmp.ne.s32.totalorder %s458, %s461
      %p467 = scmp.eq.s32.totalorder %s45, 0
      %p468 = por %p466, %p467
      %p469 = scmp.ne.s32.totalorder %s458, %s461
      %p470 = scmp.eq.s32.totalorder %s50, 1
      %p471 = por %p469, %p470
      %p472 = scmp.ne.s32.totalorder %s461, %s462
      %p473 = scmp.eq.s32.totalorder %s50, 0
      %p474 = por %p472, %p473
      %p475 = scmp.ne.s32.totalorder %s461, %s462
      %p476 = scmp.eq.s32.totalorder %s51, 1
      %p477 = por %p475, %p476
      %p479 = scmp.ne.s32.totalorder %s462, %s478
      %p480 = scmp.eq.s32.totalorder %s51, 0
      %p481 = por %p479, %p480
      %s482 = ssub.s32 %s45, %s52
      %p483 = scmp.eq.s32.totalorder %s482, 0
      %s485 = sadd.s32 %s484, 1
      %s486 = scalar_select %p483, %s484, %s485
      %p489 = pneg %p483
      %p490 = scmp.eq.s32.totalorder %s45, 1
      %p491 = por %p489, %p490
      %p492 = scmp.ne.s32.totalorder %s484, %s487
      %p493 = scmp.eq.s32.totalorder %s45, 0
      %p494 = por %p492, %p493
      %p495 = scmp.ne.s32.totalorder %s484, %s487
      %p496 = scmp.eq.s32.totalorder %s50, 1
      %p497 = por %p495, %p496
      %p498 = scmp.ne.s32.totalorder %s487, %s488
      %p499 = scmp.eq.s32.totalorder %s50, 0
      %p500 = por %p498, %p499
      %p501 = scmp.ne.s32.totalorder %s487, %s488
      %p502 = scmp.eq.s32.totalorder %s51, 1
      %p503 = por %p501, %p502
      %p505 = scmp.ne.s32.totalorder %s488, %s504
      %p506 = scmp.eq.s32.totalorder %s51, 0
      %p507 = por %p505, %p506
      %s508 = ssub.s32 %s45, %s52
      %p509 = scmp.eq.s32.totalorder %s508, 0
      %s511 = sadd.s32 %s510, 1
      %s512 = scalar_select %p509, %s510, %s511
      %p515 = pneg %p509
      %p516 = scmp.eq.s32.totalorder %s45, 1
      %p517 = por %p515, %p516
      %p518 = scmp.ne.s32.totalorder %s510, %s513
      %p519 = scmp.eq.s32.totalorder %s45, 0
      %p520 = por %p518, %p519
      %p521 = scmp.ne.s32.totalorder %s510, %s513
      %p522 = scmp.eq.s32.totalorder %s50, 1
      %p523 = por %p521, %p522
      %p524 = scmp.ne.s32.totalorder %s513, %s514
      %p525 = scmp.eq.s32.totalorder %s50, 0
      %p526 = por %p524, %p525
      %p527 = scmp.ne.s32.totalorder %s513, %s514
      %p528 = scmp.eq.s32.totalorder %s51, 1
      %p529 = por %p527, %p528
      %p531 = scmp.ne.s32.totalorder %s514, %s530
      %p532 = scmp.eq.s32.totalorder %s51, 0
      %p533 = por %p531, %p532
      %s534 = ssub.s32 %s45, %s52
      %p535 = scmp.eq.s32.totalorder %s534, 0
      %s537 = sadd.s32 %s536, 1
      %s538 = scalar_select %p535, %s536, %s537
      %p541 = pneg %p535
      %p542 = scmp.eq.s32.totalorder %s45, 1
      %p543 = por %p541, %p542
      %p544 = scmp.ne.s32.totalorder %s536, %s539
      %p545 = scmp.eq.s32.totalorder %s45, 0
      %p546 = por %p544, %p545
      %p547 = scmp.ne.s32.totalorder %s536, %s539
      %p548 = scmp.eq.s32.totalorder %s50, 1
      %p549 = por %p547, %p548
      %p550 = scmp.ne.s32.totalorder %s539, %s540
      %p551 = scmp.eq.s32.totalorder %s50, 0
      %p552 = por %p550, %p551
      %p553 = scmp.ne.s32.totalorder %s539, %s540
      %p554 = scmp.eq.s32.totalorder %s51, 1
      %p555 = por %p553, %p554
      %p557 = scmp.ne.s32.totalorder %s540, %s556
      %p558 = scmp.eq.s32.totalorder %s51, 0
      %p559 = por %p557, %p558
      %p560 = scmp.le.s32.totalorder 1, %s45
      %p561 = scmp.lt.s32.totalorder %s45, 3
      %p562 = pnand %p560, %p561
      %p563 = pneg %p562
      // Predicated region
      $region9: #{tpu_custom_call.1} parent=5 // pred_check
        _
      $region10: #{tpu_custom_call.1} parent=5 // pred_check_branch
        %565 = sbr.rel (%p562) target = $region12
      $region11: #{tpu_custom_call.1} parent=5 // pred_region
        %s566 = ssub.s32 %s45, 1
        // Predicated region
        $region13: #{tpu_custom_call.1} parent=11 // pred_check
          %p567 = pneg %p92
        $region14: #{tpu_custom_call.1} parent=11 // pred_check_branch
          %569 = sbr.rel (%p567) target = $region16
        $region15: #{tpu_custom_call.1} parent=11 // pred_region
          %s571 = ssub.s32 9216, 9216
          %572 = vsyncadd [#allocation4], %s571
          %s573 = sshll.u32 [#allocation3], 4
          %s574 = int_to_ptr.vmem [resolvable:$true] %s573
          %579 = dma.hbm_to_vmem [thread:$0]  %s1, 9216, %s574, [#allocation4], 64, 64, 4
        $region16: #{tpu_custom_call.1} parent=11 // pred_fallthru
          _
        // Predicated region
        $region17: #{tpu_custom_call.1} parent=11 // pred_check
          %p580 = pneg %p113
        $region18: #{tpu_custom_call.1} parent=11 // pred_check_branch
          %582 = sbr.rel (%p580) target = $region20
        $region19: #{tpu_custom_call.1} parent=11 // pred_region
          _
        $region20: #{tpu_custom_call.1} parent=11 // pred_fallthru
          _
        // Predicated region
        $region21: #{tpu_custom_call.1} parent=11 // pred_check
          %p583 = pneg %p134
        $region22: #{tpu_custom_call.1} parent=11 // pred_check_branch
          %585 = sbr.rel (%p583) target = $region24
        $region23: #{tpu_custom_call.1} parent=11 // pred_region
          _
        $region24: #{tpu_custom_call.1} parent=11 // pred_fallthru
          _
        // Predicated region
        $region25: #{tpu_custom_call.1} parent=11 // pred_check
          %p586 = pneg %p155
        $region26: #{tpu_custom_call.1} parent=11 // pred_check_branch
          %588 = sbr.rel (%p586) target = $region28
        $region27: #{tpu_custom_call.1} parent=11 // pred_region
          _
        $region28: #{tpu_custom_call.1} parent=11 // pred_fallthru
          _
        // Predicated region
        $region29: #{tpu_custom_call.1} parent=11 // pred_check
          %p589 = pneg %p176
        $region30: #{tpu_custom_call.1} parent=11 // pred_check_branch
          %591 = sbr.rel (%p589) target = $region32
        $region31: #{tpu_custom_call.1} parent=11 // pred_region
          %s593 = ssub.s32 9216, 9216
          %594 = vsyncadd [#allocation7], %s593
          %s595 = sshll.u32 [#allocation6], 4
          %s596 = int_to_ptr.vmem [resolvable:$true] %s595
          %601 = dma.hbm_to_vmem [thread:$0]  %s5, 9216, %s596, [#allocation7], 64, 64, 4
        $region32: #{tpu_custom_call.1} parent=11 // pred_fallthru
          _
        // Predicated region
        $region33: #{tpu_custom_call.1} parent=11 // pred_check
          %p602 = pneg %p197
        $region34: #{tpu_custom_call.1} parent=11 // pred_check_branch
          %604 = sbr.rel (%p602) target = $region36
        $region35: #{tpu_custom_call.1} parent=11 // pred_region
          _
        $region36: #{tpu_custom_call.1} parent=11 // pred_fallthru
          _
        // Predicated region
        $region37: #{tpu_custom_call.1} parent=11 // pred_check
          %p605 = pneg %p218
        $region38: #{tpu_custom_call.1} parent=11 // pred_check_branch
          %607 = sbr.rel (%p605) target = $region40
        $region39: #{tpu_custom_call.1} parent=11 // pred_region
          _
        $region40: #{tpu_custom_call.1} parent=11 // pred_fallthru
          _
        // Predicated region
        $region41: #{tpu_custom_call.1} parent=11 // pred_check
          %p608 = pneg %p239
        $region42: #{tpu_custom_call.1} parent=11 // pred_check_branch
          %610 = sbr.rel (%p608) target = $region44
        $region43: #{tpu_custom_call.1} parent=11 // pred_region
          %s612 = ssub.s32 9216, 9216
          %613 = vsyncadd [#allocation7], %s612
          %s614 = sshll.u32 [#allocation8], 4
          %s615 = int_to_ptr.vmem [resolvable:$true] %s614
          %620 = dma.hbm_to_vmem [thread:$0]  %s8, 9216, %s615, [#allocation7], 64, 64, 4
        $region44: #{tpu_custom_call.1} parent=11 // pred_fallthru
          _
        // Predicated region
        $region45: #{tpu_custom_call.1} parent=11 // pred_check
          %p621 = pneg %p260
        $region46: #{tpu_custom_call.1} parent=11 // pred_check_branch
          %623 = sbr.rel (%p621) target = $region48
        $region47: #{tpu_custom_call.1} parent=11 // pred_region
          _
        $region48: #{tpu_custom_call.1} parent=11 // pred_fallthru
          _
        // Predicated region
        $region49: #{tpu_custom_call.1} parent=11 // pred_check
          %p624 = pneg %p281
        $region50: #{tpu_custom_call.1} parent=11 // pred_check_branch
          %626 = sbr.rel (%p624) target = $region52
        $region51: #{tpu_custom_call.1} parent=11 // pred_region
          _
        $region52: #{tpu_custom_call.1} parent=11 // pred_fallthru
          _
        // Predicated region
        $region53: #{tpu_custom_call.1} parent=11 // pred_check
          %p627 = pneg %p302
        $region54: #{tpu_custom_call.1} parent=11 // pred_check_branch
          %629 = sbr.rel (%p627) target = $region56
        $region55: #{tpu_custom_call.1} parent=11 // pred_region
          _
        $region56: #{tpu_custom_call.1} parent=11 // pred_fallthru
          _
        // Predicated region
        $region57: #{tpu_custom_call.1} parent=11 // pred_check
          %p630 = pneg %p323
        $region58: #{tpu_custom_call.1} parent=11 // pred_check_branch
          %632 = sbr.rel (%p630) target = $region60
        $region59: #{tpu_custom_call.1} parent=11 // pred_region
          _
        $region60: #{tpu_custom_call.1} parent=11 // pred_fallthru
          _
        // Predicated region
        $region61: #{tpu_custom_call.1} parent=11 // pred_check
          %p633 = pneg %p344
        $region62: #{tpu_custom_call.1} parent=11 // pred_check_branch
          %635 = sbr.rel (%p633) target = $region64
        $region63: #{tpu_custom_call.1} parent=11 // pred_region
          _
        $region64: #{tpu_custom_call.1} parent=11 // pred_fallthru
          _
      $region12: #{tpu_custom_call.1} parent=5 // pred_fallthru
        _
      %p636 = scmp.lt.s32.totalorder %s45, 2
      // Predicated region
      $region65: #{tpu_custom_call.1} parent=5 // pred_check
        %p637 = pneg %p636
      $region66: #{tpu_custom_call.1} parent=5 // pred_check_branch
        %639 = sbr.rel (%p637) target = $region68
      $region67: #{tpu_custom_call.1} parent=5 // pred_region
        // Predicated region
        $region69: #{tpu_custom_call.1} parent=67 // pred_check
          %p640 = pneg %p65
        $region70: #{tpu_custom_call.1} parent=67 // pred_check_branch
          %642 = sbr.rel (%p640) target = $region72
        $region71: #{tpu_custom_call.1} parent=67 // pred_region
          %p643 = scmp.lt.s32.totalorder %s45, 1
          %s644 = scalar_select %p643, %s45, 1
          %s645 = smul.addr %s644, 2
          %s646 = smul.addr %s645, 8
          %s647 = scalar_lea.vmem %s0, %s646
        $region72: #{tpu_custom_call.1} parent=67 // pred_fallthru
          _
      $region68: #{tpu_custom_call.1} parent=5 // pred_fallthru
        _
      %p648 = scmp.le.s32.totalorder 1, %s45
      %p649 = scmp.lt.s32.totalorder %s45, 3
      %p650 = pnand %p648, %p649
      %p651 = pneg %p650
      // Predicated region
      $region73: #{tpu_custom_call.1} parent=5 // pred_check
        _
      $region74: #{tpu_custom_call.1} parent=5 // pred_check_branch
        %653 = sbr.rel (%p650) target = $region76
      $region75: #{tpu_custom_call.1} parent=5 // pred_region
        %s654 = ssub.s32 %s45, 1
        // Predicated region
        $region77: #{tpu_custom_call.1} parent=75 // pred_check
          %p655 = pneg %p92
        $region78: #{tpu_custom_call.1} parent=75 // pred_check_branch
          %657 = sbr.rel (%p655) target = $region80
        $region79: #{tpu_custom_call.1} parent=75 // pred_region
          %658 = dma.done [#allocation4], 9216
        $region80: #{tpu_custom_call.1} parent=75 // pred_fallthru
          _
        // Predicated region
        $region81: #{tpu_custom_call.1} parent=75 // pred_check
          %p659 = pneg %p176
        $region82: #{tpu_custom_call.1} parent=75 // pred_check_branch
          %661 = sbr.rel (%p659) target = $region84
        $region83: #{tpu_custom_call.1} parent=75 // pred_region
          %662 = dma.done [#allocation7], 9216
        $region84: #{tpu_custom_call.1} parent=75 // pred_fallthru
          _
        // Predicated region
        $region85: #{tpu_custom_call.1} parent=75 // pred_check
          %p663 = pneg %p239
        $region86: #{tpu_custom_call.1} parent=75 // pred_check_branch
          %665 = sbr.rel (%p663) target = $region88
        $region87: #{tpu_custom_call.1} parent=75 // pred_region
          %666 = dma.done [#allocation7], 9216
        $region88: #{tpu_custom_call.1} parent=75 // pred_fallthru
          _
        %p667 = scmp.lt.s32.totalorder %s50, 1
        %s668 = scalar_select %p667, %s50, 1
        %s669 = smul.addr %s668, 2
        %s670 = smul.addr %s669, 8
        %s671 = scalar_lea.vmem %s0, %s670
        %p672 = pneg %p71
        %p673 = pneg %p68
        %p674 = pneg %p92
        %p675 = pneg %p89
        %p676 = pneg %p113
        %p677 = pneg %p110
        %p678 = pneg %p134
        %p679 = pneg %p131
        %p680 = pneg %p155
        %p681 = pneg %p152
        %p682 = pneg %p176
        %p683 = pneg %p173
        %p684 = pneg %p197
        %p685 = pneg %p194
        %p686 = pneg %p218
        %p687 = pneg %p215
        %p688 = pneg %p239
        %p689 = pneg %p236
        %p690 = pneg %p260
        %p691 = pneg %p257
        %p692 = pneg %p281
        %p693 = pneg %p278
        %p694 = pneg %p302
        %p695 = pneg %p299
        %p696 = pneg %p323
        %p697 = pneg %p320
        %p698 = pneg %p344
        %p699 = pneg %p341
        %p700 = pneg %p370
        %p701 = pneg %p367
        %s702 = sand.u32 %s357, 1
        %s703 = scalar_lea.sflag [#allocation5], %s702
        %s704 = sand.u32 %s357, 1
        %s705 = smul.addr %s704, 16
        %s706 = scalar_lea.vmem [#allocation9], %s705
        %p707 = pneg %p396
        %p708 = pneg %p393
        %s709 = sand.u32 %s50, 1
        %s710 = scalar_lea.sflag [#allocation11], %s709
        %s711 = sand.u32 %s383, 1
        %s712 = smul.addr %s711, 16
        %s713 = scalar_lea.vmem [#allocation10], %s712
        %p714 = pneg %p422
        %p715 = pneg %p419
        %s716 = sand.u32 %s50, 1
        %s717 = scalar_lea.sflag [#allocation11], %s716
        %s718 = sand.u32 %s409, 1
        %s719 = smul.addr %s718, 16
        %s720 = scalar_lea.vmem [#allocation12], %s719
        %p721 = pneg %p448
        %p722 = pneg %p445
        %s723 = sand.u32 %s50, 1
        %s724 = scalar_lea.sflag [#allocation14], %s723
        %s725 = sand.u32 %s435, 1
        %s726 = smul.addr %s725, 16
        %s727 = scalar_lea.vmem [#allocation13], %s726
        %p728 = pneg %p474
        %p729 = pneg %p471
        %s730 = sand.u32 %s50, 1
        %s731 = scalar_lea.sflag [#allocation14], %s730
        %s732 = sand.u32 %s461, 1
        %s733 = smul.addr %s732, 16
        %s734 = scalar_lea.vmem [#allocation15], %s733
        %p735 = pneg %p500
        %p736 = pneg %p497
        %s737 = sand.u32 %s50, 1
        %s738 = scalar_lea.sflag [#allocation17], %s737
        %s739 = sand.u32 %s487, 1
        %s740 = smul.addr %s739, 16
        %s741 = scalar_lea.vmem [#allocation16], %s740
        %p742 = pneg %p526
        %p743 = pneg %p523
        %s744 = sand.u32 %s50, 1
        %s745 = scalar_lea.sflag [#allocation17], %s744
        %s746 = sand.u32 %s513, 1
        %s747 = scalar_lea.vmem [#allocation18], %s746
        %p748 = pneg %p552
        %p749 = pneg %p549
        %s750 = sand.u32 %s539, 1
        %s751 = scalar_lea.sflag [#allocation20], %s750
        %s752 = sand.u32 %s539, 1
        %s753 = scalar_lea.vmem [#allocation19], %s752
        %p754 = scmp.lt.s32.totalorder %s50, 1
        %s755 = scalar_select %p754, %s50, 1
        %s756 = smul.addr %s755, 2
        %s757 = smul.addr %s756, 8
        %s758 = scalar_lea.vmem %s0, %s757
        %v760 = vlaneseq
        %vm761 = vcmp.ge.s32.totalorder %v760, 0
        %vm762 = vcmp.lt.s32.totalorder %v760, 144
        %vm763 = vmand %vm761, %vm762
        %764 = vst.msk [vmem:[#allocation2] ss:$8 sm:$0x3] %vm763, 0.0
        %765 = vst.msk [vmem:[#allocation2] ss:$8 sm:$0x0] %vm763, 0.0
        %s766 = scalar_lea.vmem [#allocation2], 33
        %767 = vst.msk [vmem:[%s766] ss:$8 sm:$0x3] %vm763, 0.0
        %768 = vst.msk [vmem:[%s766] ss:$8 sm:$0x0] %vm763, 0.0
        %vm769 = vcmask 64512
        %770 = vst.msk [vmem:[#allocation2] sm:$0xff] %vm769, 0.0
        %771 = vst.msk [vmem:[#allocation2 + $0x10] sm:$0xff] %vm769, 0.0
        %vm772 = vcmask 58368
        %773 = vst.msk [vmem:[#allocation2 + $0x20] sm:$0x3] %vm772, 0.0
        %vm774 = vcmask 130112
        %775 = vst.msk [vmem:[#allocation2 + $0x8] sm:$0xff] %vm774, 0.0
        %776 = vst.msk [vmem:[#allocation2 + $0x18] sm:$0xff] %vm774, 0.0
        %vm777 = vcmask 123968
        %778 = vst.msk [vmem:[#allocation2 + $0x28] sm:$0x3] %vm777, 0.0
        %v779 = vld [vmem:[%s758] sm:$0xff]
        %v780 = vld [vmem:[%s758 + $0x8] sm:$0xff]
        %vm783 = vcmask 1040384
        %v784 = vrot.slane %v779, 7
        %v785 = vrot.slane %v780, 7
        %v786 = vsel %vm783, %v784, %v785
        %787 = vrot.lane.b32.xlu0 %v784, 8
        %v788 = vpop.permute.xlu0 %787
        %789 = vrot.lane.b32.xlu0 %v786, 8
        %v790 = vpop.permute.xlu0 %789
        %791 = vrot.lane.b32.xlu0 %v785, 8
        %v792 = vpop.permute.xlu0 %791
        %vm796 = vcmask 1047617
        %797 = vst.msk [vmem:[#allocation2] sm:$0xfe] %vm796, %v788
        %vm798 = vcmask 64513
        %799 = vst.msk [vmem:[#allocation2 + $0x8] sm:$0xfe] %vm798, %v788
        %vm800 = vcmask 1047616
        %801 = vst.msk [vmem:[#allocation2 + $0x10] sm:$0xff] %vm800, %v790
        %802 = vst.msk [vmem:[#allocation2 + $0x18] sm:$0xff] %vm769, %v790
        %vm803 = vcmask 1040448
        %804 = vst.msk [vmem:[#allocation2 + $0x20] sm:$0x1] %vm803, %v792
        %vm805 = vcmask 57344
        %806 = vst.msk [vmem:[#allocation2 + $0x28] sm:$0x1] %vm805, %v792
        %v807 = vld [vmem:[#allocation2] sm:$0xff]
        %v808 = vld [vmem:[#allocation2 + $0x10] sm:$0xff]
        %v809 = vld [vmem:[#allocation2 + $0x8] sm:$0xff]
        %v810 = vld [vmem:[#allocation2 + $0x18] sm:$0xff]
        %v811 = vld [vmem:[#allocation2] sm:$0xfe]
        %v812 = vld [vmem:[#allocation2 + $0x20] sm:$0x1]
        %v813 = vld [vmem:[#allocation2 + $0x8] sm:$0xfe]
        %v814 = vld [vmem:[#allocation2 + $0x28] sm:$0x1]
        %v815 = vld [vmem:[#allocation2] sm:$0xfc]
        %v816 = vld [vmem:[#allocation2 + $0x20] sm:$0x3]
        %v817 = vld [vmem:[#allocation2 + $0x8] sm:$0xfc]
        %v818 = vld [vmem:[#allocation2 + $0x28] sm:$0x3]
        %823 = vrot.lane.b32.xlu0 %v807, 120
        %v824 = vpop.permute.xlu0 %823
        %825 = vrot.lane.b32.xlu0 %v809, 120
        %v826 = vpop.permute.xlu0 %825
        %827 = vrot.lane.b32.xlu0 %v808, 120
        %v828 = vpop.permute.xlu0 %827
        %829 = vrot.lane.b32.xlu0 %v810, 120
        %v830 = vpop.permute.xlu0 %829
        %vm831 = vcmask 982016
        %v832 = vsel %vm831, %v824, %v826
        %v833 = vsel %vm831, %v828, %v830
        %836 = vrot.lane.b32.xlu0 %v807, 112
        %v837 = vpop.permute.xlu0 %836
        %838 = vrot.lane.b32.xlu0 %v809, 112
        %v839 = vpop.permute.xlu0 %838
        %840 = vrot.lane.b32.xlu0 %v808, 112
        %v841 = vpop.permute.xlu0 %840
        %842 = vrot.lane.b32.xlu0 %v810, 112
        %v843 = vpop.permute.xlu0 %842
        %vm844 = vcmask 916480
        %v845 = vsel %vm844, %v837, %v839
        %v846 = vsel %vm844, %v841, %v843
        %vm851 = vcmask 1046528
        %v852 = vrot.slane %v811, 1
        %v853 = vrot.slane %v808, 1
        %v854 = vsel %vm851, %v852, %v853
        %v855 = vrot.slane %v812, 1
        %v856 = vsel %vm851, %v853, %v855
        %v861 = vrot.slane %v813, 1
        %v862 = vrot.slane %v810, 1
        %v863 = vsel %vm851, %v861, %v862
        %v864 = vrot.slane %v814, 1
        %v865 = vsel %vm851, %v862, %v864
        %866 = vrot.lane.b32.xlu0 %v854, 120
        %v867 = vpop.permute.xlu0 %866
        %868 = vrot.lane.b32.xlu0 %v863, 120
        %v869 = vpop.permute.xlu0 %868
        %870 = vrot.lane.b32.xlu0 %v856, 120
        %v871 = vpop.permute.xlu0 %870
        %872 = vrot.lane.b32.xlu0 %v865, 120
        %v873 = vpop.permute.xlu0 %872
        %v874 = vsel %vm831, %v867, %v869
        %v875 = vsel %vm831, %v871, %v873
        %878 = vrot.lane.b32.xlu0 %v854, 112
        %v879 = vpop.permute.xlu0 %878
        %880 = vrot.lane.b32.xlu0 %v863, 112
        %v881 = vpop.permute.xlu0 %880
        %882 = vrot.lane.b32.xlu0 %v856, 112
        %v883 = vpop.permute.xlu0 %882
        %884 = vrot.lane.b32.xlu0 %v865, 112
        %v885 = vpop.permute.xlu0 %884
        %v886 = vsel %vm844, %v879, %v881
        %v887 = vsel %vm844, %v883, %v885
        %vm892 = vcmask 1045504
        %v893 = vrot.slane %v815, 2
        %v894 = vrot.slane %v808, 2
        %v895 = vsel %vm892, %v893, %v894
        %v896 = vrot.slane %v816, 2
        %v897 = vsel %vm892, %v894, %v896
        %v902 = vrot.slane %v817, 2
        %v903 = vrot.slane %v810, 2
        %v904 = vsel %vm892, %v902, %v903
        %v905 = vrot.slane %v818, 2
        %v906 = vsel %vm892, %v903, %v905
        %907 = vrot.lane.b32.xlu0 %v895, 120
        %v908 = vpop.permute.xlu0 %907
        %909 = vrot.lane.b32.xlu0 %v904, 120
        %v910 = vpop.permute.xlu0 %909
        %911 = vrot.lane.b32.xlu0 %v897, 120
        %v912 = vpop.permute.xlu0 %911
        %913 = vrot.lane.b32.xlu0 %v906, 120
        %v914 = vpop.permute.xlu0 %913
        %v915 = vsel %vm831, %v908, %v910
        %v916 = vsel %vm831, %v912, %v914
        %919 = vrot.lane.b32.xlu0 %v895, 112
        %v920 = vpop.permute.xlu0 %919
        %921 = vrot.lane.b32.xlu0 %v904, 112
        %v922 = vpop.permute.xlu0 %921
        %923 = vrot.lane.b32.xlu0 %v897, 112
        %v924 = vpop.permute.xlu0 %923
        %925 = vrot.lane.b32.xlu0 %v906, 112
        %v926 = vpop.permute.xlu0 %925
        %v927 = vsel %vm844, %v920, %v922
        %v928 = vsel %vm844, %v924, %v926
        %v931 = vpack.c.bf16 %v808, %v807
        %v932 = vpack.c.bf16 %v833, %v832
        %v933 = vpack.c.bf16 %v846, %v845
        %v934 = vpack.c.bf16 %v856, %v854
        %v935 = vpack.c.bf16 %v875, %v874
        %v936 = vpack.c.bf16 %v887, %v886
        %v937 = vpack.c.bf16 %v897, %v895
        %v938 = vpack.c.bf16 %v916, %v915
        %v939 = vpack.c.bf16 %v928, %v927
        %v940 = vld [vmem:[#allocation3] sm:$0xf]
        %v941 = vld [vmem:[#allocation3 + $0x4] sm:$0xf]
        %v942 = vld [vmem:[#allocation3 + $0x8] sm:$0xf]
        %v943 = vld [vmem:[#allocation3 + $0xc] sm:$0xf]
        %v944 = vld [vmem:[#allocation3 + $0x10] sm:$0xf]
        %v945 = vld [vmem:[#allocation3 + $0x14] sm:$0xf]
        %v946 = vld [vmem:[#allocation3 + $0x18] sm:$0xf]
        %v947 = vld [vmem:[#allocation3 + $0x1c] sm:$0xf]
        %v948 = vld [vmem:[#allocation3 + $0x20] sm:$0xf]
        %v949 = vld [vmem:[#allocation3 + $0x24] sm:$0xf]
        %v950 = vld [vmem:[#allocation3 + $0x28] sm:$0xf]
        %v951 = vld [vmem:[#allocation3 + $0x2c] sm:$0xf]
        %v952 = vld [vmem:[#allocation3 + $0x30] sm:$0xf]
        %v953 = vld [vmem:[#allocation3 + $0x34] sm:$0xf]
        %v954 = vld [vmem:[#allocation3 + $0x38] sm:$0xf]
        %v955 = vld [vmem:[#allocation3 + $0x3c] sm:$0xf]
        %v956 = vld [vmem:[#allocation3 + $0x40] sm:$0xf]
        %v957 = vld [vmem:[#allocation3 + $0x44] sm:$0xf]
        %v958 = vld [vmem:[#allocation3 + $0x48] sm:$0xf]
        %v959 = vld [vmem:[#allocation3 + $0x4c] sm:$0xf]
        %v960 = vld [vmem:[#allocation3 + $0x50] sm:$0xf]
        %v961 = vld [vmem:[#allocation3 + $0x54] sm:$0xf]
        %v962 = vld [vmem:[#allocation3 + $0x58] sm:$0xf]
        %v963 = vld [vmem:[#allocation3 + $0x5c] sm:$0xf]
        %v964 = vld [vmem:[#allocation3 + $0x60] sm:$0xf]
        %v965 = vld [vmem:[#allocation3 + $0x64] sm:$0xf]
        %v966 = vld [vmem:[#allocation3 + $0x68] sm:$0xf]
        %v967 = vld [vmem:[#allocation3 + $0x6c] sm:$0xf]
        %v968 = vld [vmem:[#allocation3 + $0x70] sm:$0xf]
        %v969 = vld [vmem:[#allocation3 + $0x74] sm:$0xf]
        %v970 = vld [vmem:[#allocation3 + $0x78] sm:$0xf]
        %v971 = vld [vmem:[#allocation3 + $0x7c] sm:$0xf]
        %v972 = vld [vmem:[#allocation3 + $0x80] sm:$0xf]
        %v973 = vld [vmem:[#allocation3 + $0x84] sm:$0xf]
        %v974 = vld [vmem:[#allocation3 + $0x88] sm:$0xf]
        %v975 = vld [vmem:[#allocation3 + $0x8c] sm:$0xf]
        %v976 = vld [vmem:[#allocation3 + $0x90] sm:$0xf]
        %v977 = vld [vmem:[#allocation3 + $0x94] sm:$0xf]
        %v978 = vld [vmem:[#allocation3 + $0x98] sm:$0xf]
        %v979 = vld [vmem:[#allocation3 + $0x9c] sm:$0xf]
        %v980 = vld [vmem:[#allocation3 + $0xa0] sm:$0xf]
        %v981 = vld [vmem:[#allocation3 + $0xa4] sm:$0xf]
        %v982 = vld [vmem:[#allocation3 + $0xa8] sm:$0xf]
        %v983 = vld [vmem:[#allocation3 + $0xac] sm:$0xf]
        %v984 = vld [vmem:[#allocation3 + $0xb0] sm:$0xf]
        %v985 = vld [vmem:[#allocation3 + $0xb4] sm:$0xf]
        %v986 = vld [vmem:[#allocation3 + $0xb8] sm:$0xf]
        %v987 = vld [vmem:[#allocation3 + $0xbc] sm:$0xf]
        %v988 = vld [vmem:[#allocation3 + $0xc0] sm:$0xf]
        %v989 = vld [vmem:[#allocation3 + $0xc4] sm:$0xf]
        %v990 = vld [vmem:[#allocation3 + $0xc8] sm:$0xf]
        %v991 = vld [vmem:[#allocation3 + $0xcc] sm:$0xf]
        %v992 = vld [vmem:[#allocation3 + $0xd0] sm:$0xf]
        %v993 = vld [vmem:[#allocation3 + $0xd4] sm:$0xf]
        %v994 = vld [vmem:[#allocation3 + $0xd8] sm:$0xf]
        %v995 = vld [vmem:[#allocation3 + $0xdc] sm:$0xf]
        %v996 = vld [vmem:[#allocation3 + $0xe0] sm:$0xf]
        %v997 = vld [vmem:[#allocation3 + $0xe4] sm:$0xf]
        %v998 = vld [vmem:[#allocation3 + $0xe8] sm:$0xf]
        %v999 = vld [vmem:[#allocation3 + $0xec] sm:$0xf]
        %v1000 = vld [vmem:[#allocation3 + $0xf0] sm:$0xf]
        %v1001 = vld [vmem:[#allocation3 + $0xf4] sm:$0xf]
        %v1002 = vld [vmem:[#allocation3 + $0xf8] sm:$0xf]
        %v1003 = vld [vmem:[#allocation3 + $0xfc] sm:$0xf]
        %v1004 = vld [vmem:[#allocation3 + $0x100] sm:$0xf]
        %v1005 = vld [vmem:[#allocation3 + $0x104] sm:$0xf]
        %v1006 = vld [vmem:[#allocation3 + $0x108] sm:$0xf]
        %v1007 = vld [vmem:[#allocation3 + $0x10c] sm:$0xf]
        %v1008 = vld [vmem:[#allocation3 + $0x110] sm:$0xf]
        %v1009 = vld [vmem:[#allocation3 + $0x114] sm:$0xf]
        %v1010 = vld [vmem:[#allocation3 + $0x118] sm:$0xf]
        %v1011 = vld [vmem:[#allocation3 + $0x11c] sm:$0xf]
        %v1012 = vld [vmem:[#allocation3 + $0x120] sm:$0xf]
        %v1013 = vld [vmem:[#allocation3 + $0x124] sm:$0xf]
        %v1014 = vld [vmem:[#allocation3 + $0x128] sm:$0xf]
        %v1015 = vld [vmem:[#allocation3 + $0x12c] sm:$0xf]
        %v1016 = vld [vmem:[#allocation3 + $0x130] sm:$0xf]
        %v1017 = vld [vmem:[#allocation3 + $0x134] sm:$0xf]
        %v1018 = vld [vmem:[#allocation3 + $0x138] sm:$0xf]
        %v1019 = vld [vmem:[#allocation3 + $0x13c] sm:$0xf]
        %v1020 = vld [vmem:[#allocation3 + $0x140] sm:$0xf]
        %v1021 = vld [vmem:[#allocation3 + $0x144] sm:$0xf]
        %v1022 = vld [vmem:[#allocation3 + $0x148] sm:$0xf]
        %v1023 = vld [vmem:[#allocation3 + $0x14c] sm:$0xf]
        %v1024 = vld [vmem:[#allocation3 + $0x150] sm:$0xf]
        %v1025 = vld [vmem:[#allocation3 + $0x154] sm:$0xf]
        %v1026 = vld [vmem:[#allocation3 + $0x158] sm:$0xf]
        %v1027 = vld [vmem:[#allocation3 + $0x15c] sm:$0xf]
        %v1028 = vld [vmem:[#allocation3 + $0x160] sm:$0xf]
        %v1029 = vld [vmem:[#allocation3 + $0x164] sm:$0xf]
        %v1030 = vld [vmem:[#allocation3 + $0x168] sm:$0xf]
        %v1031 = vld [vmem:[#allocation3 + $0x16c] sm:$0xf]
        %v1032 = vld [vmem:[#allocation3 + $0x170] sm:$0xf]
        %v1033 = vld [vmem:[#allocation3 + $0x174] sm:$0xf]
        %v1034 = vld [vmem:[#allocation3 + $0x178] sm:$0xf]
        %v1035 = vld [vmem:[#allocation3 + $0x17c] sm:$0xf]
        %v1036 = vld [vmem:[#allocation3 + $0x180] sm:$0xf]
        %v1037 = vld [vmem:[#allocation3 + $0x184] sm:$0xf]
        %v1038 = vld [vmem:[#allocation3 + $0x188] sm:$0xf]
        %v1039 = vld [vmem:[#allocation3 + $0x18c] sm:$0xf]
        %v1040 = vld [vmem:[#allocation3 + $0x190] sm:$0xf]
        %v1041 = vld [vmem:[#allocation3 + $0x194] sm:$0xf]
        %v1042 = vld [vmem:[#allocation3 + $0x198] sm:$0xf]
        %v1043 = vld [vmem:[#allocation3 + $0x19c] sm:$0xf]
        %v1044 = vld [vmem:[#allocation3 + $0x1a0] sm:$0xf]
        %v1045 = vld [vmem:[#allocation3 + $0x1a4] sm:$0xf]
        %v1046 = vld [vmem:[#allocation3 + $0x1a8] sm:$0xf]
        %v1047 = vld [vmem:[#allocation3 + $0x1ac] sm:$0xf]
        %v1048 = vld [vmem:[#allocation3 + $0x1b0] sm:$0xf]
        %v1049 = vld [vmem:[#allocation3 + $0x1b4] sm:$0xf]
        %v1050 = vld [vmem:[#allocation3 + $0x1b8] sm:$0xf]
        %v1051 = vld [vmem:[#allocation3 + $0x1bc] sm:$0xf]
        %v1052 = vld [vmem:[#allocation3 + $0x1c0] sm:$0xf]
        %v1053 = vld [vmem:[#allocation3 + $0x1c4] sm:$0xf]
        %v1054 = vld [vmem:[#allocation3 + $0x1c8] sm:$0xf]
        %v1055 = vld [vmem:[#allocation3 + $0x1cc] sm:$0xf]
        %v1056 = vld [vmem:[#allocation3 + $0x1d0] sm:$0xf]
        %v1057 = vld [vmem:[#allocation3 + $0x1d4] sm:$0xf]
        %v1058 = vld [vmem:[#allocation3 + $0x1d8] sm:$0xf]
        %v1059 = vld [vmem:[#allocation3 + $0x1dc] sm:$0xf]
        %v1060 = vld [vmem:[#allocation3 + $0x1e0] sm:$0xf]
        %v1061 = vld [vmem:[#allocation3 + $0x1e4] sm:$0xf]
        %v1062 = vld [vmem:[#allocation3 + $0x1e8] sm:$0xf]
        %v1063 = vld [vmem:[#allocation3 + $0x1ec] sm:$0xf]
        %v1064 = vld [vmem:[#allocation3 + $0x1f0] sm:$0xf]
        %v1065 = vld [vmem:[#allocation3 + $0x1f4] sm:$0xf]
        %v1066 = vld [vmem:[#allocation3 + $0x1f8] sm:$0xf]
        %v1067 = vld [vmem:[#allocation3 + $0x1fc] sm:$0xf]
        %v1068 = vld [vmem:[#allocation3 + $0x200] sm:$0xf]
        %v1069 = vld [vmem:[#allocation3 + $0x204] sm:$0xf]
        %v1070 = vld [vmem:[#allocation3 + $0x208] sm:$0xf]
        %v1071 = vld [vmem:[#allocation3 + $0x20c] sm:$0xf]
        %v1072 = vld [vmem:[#allocation3 + $0x210] sm:$0xf]
        %v1073 = vld [vmem:[#allocation3 + $0x214] sm:$0xf]
        %v1074 = vld [vmem:[#allocation3 + $0x218] sm:$0xf]
        %v1075 = vld [vmem:[#allocation3 + $0x21c] sm:$0xf]
        %v1076 = vld [vmem:[#allocation3 + $0x220] sm:$0xf]
        %v1077 = vld [vmem:[#allocation3 + $0x224] sm:$0xf]
        %v1078 = vld [vmem:[#allocation3 + $0x228] sm:$0xf]
        %v1079 = vld [vmem:[#allocation3 + $0x22c] sm:$0xf]
        %v1080 = vld [vmem:[#allocation3 + $0x230] sm:$0xf]
        %v1081 = vld [vmem:[#allocation3 + $0x234] sm:$0xf]
        %v1082 = vld [vmem:[#allocation3 + $0x238] sm:$0xf]
        %v1083 = vld [vmem:[#allocation3 + $0x23c] sm:$0xf]
        %v1084 = vld [vmem:[%s2] sm:$0x1]
        %v1086 = vlaneseq
        %v1087 = vshrl.u32 %v1086, 7
        %v1088 = vsub.s32 0, %v1087
        %v1089 = vrot.slane %v1084, %v1088
        %v1235 = vunpack.c.l.b16 %v940
        %v1236 = vunpack.c.l.b16 %v941
        %v1237 = vunpack.c.l.b16 %v942
        %v1238 = vunpack.c.l.b16 %v943
        %v1239 = vunpack.c.l.b16 %v944
        %v1240 = vunpack.c.l.b16 %v945
        %v1241 = vunpack.c.l.b16 %v946
        %v1242 = vunpack.c.l.b16 %v947
        %v1243 = vunpack.c.l.b16 %v948
        %v1244 = vunpack.c.l.b16 %v949
        %v1245 = vunpack.c.l.b16 %v950
        %v1246 = vunpack.c.l.b16 %v951
        %v1247 = vunpack.c.l.b16 %v952
        %v1248 = vunpack.c.l.b16 %v953
        %v1249 = vunpack.c.l.b16 %v954
        %v1250 = vunpack.c.l.b16 %v955
        %v1251 = vunpack.c.l.b16 %v956
        %v1252 = vunpack.c.l.b16 %v957
        %v1253 = vunpack.c.l.b16 %v958
        %v1254 = vunpack.c.l.b16 %v959
        %v1255 = vunpack.c.l.b16 %v960
        %v1256 = vunpack.c.l.b16 %v961
        %v1257 = vunpack.c.l.b16 %v962
        %v1258 = vunpack.c.l.b16 %v963
        %v1259 = vunpack.c.l.b16 %v964
        %v1260 = vunpack.c.l.b16 %v965
        %v1261 = vunpack.c.l.b16 %v966
        %v1262 = vunpack.c.l.b16 %v967
        %v1263 = vunpack.c.l.b16 %v968
        %v1264 = vunpack.c.l.b16 %v969
        %v1265 = vunpack.c.l.b16 %v970
        %v1266 = vunpack.c.l.b16 %v971
        %v1267 = vunpack.c.l.b16 %v972
        %v1268 = vunpack.c.l.b16 %v973
        %v1269 = vunpack.c.l.b16 %v974
        %v1270 = vunpack.c.l.b16 %v975
        %v1271 = vunpack.c.l.b16 %v976
        %v1272 = vunpack.c.l.b16 %v977
        %v1273 = vunpack.c.l.b16 %v978
        %v1274 = vunpack.c.l.b16 %v979
        %v1275 = vunpack.c.l.b16 %v980
        %v1276 = vunpack.c.l.b16 %v981
        %v1277 = vunpack.c.l.b16 %v982
        %v1278 = vunpack.c.l.b16 %v983
        %v1279 = vunpack.c.l.b16 %v984
        %v1280 = vunpack.c.l.b16 %v985
        %v1281 = vunpack.c.l.b16 %v986
        %v1282 = vunpack.c.l.b16 %v987
        %v1283 = vunpack.c.l.b16 %v988
        %v1284 = vunpack.c.l.b16 %v989
        %v1285 = vunpack.c.l.b16 %v990
        %v1286 = vunpack.c.l.b16 %v991
        %v1287 = vunpack.c.l.b16 %v992
        %v1288 = vunpack.c.l.b16 %v993
        %v1289 = vunpack.c.l.b16 %v994
        %v1290 = vunpack.c.l.b16 %v995
        %v1291 = vunpack.c.l.b16 %v996
        %v1292 = vunpack.c.l.b16 %v997
        %v1293 = vunpack.c.l.b16 %v998
        %v1294 = vunpack.c.l.b16 %v999
        %v1295 = vunpack.c.l.b16 %v1000
        %v1296 = vunpack.c.l.b16 %v1001
        %v1297 = vunpack.c.l.b16 %v1002
        %v1298 = vunpack.c.l.b16 %v1003
        %v1299 = vunpack.c.l.b16 %v1004
        %v1300 = vunpack.c.l.b16 %v1005
        %v1301 = vunpack.c.l.b16 %v1006
        %v1302 = vunpack.c.l.b16 %v1007
        %v1303 = vunpack.c.l.b16 %v1008
        %v1304 = vunpack.c.l.b16 %v1009
        %v1305 = vunpack.c.l.b16 %v1010
        %v1306 = vunpack.c.l.b16 %v1011
        %v1307 = vunpack.c.l.b16 %v1012
        %v1308 = vunpack.c.l.b16 %v1013
        %v1309 = vunpack.c.l.b16 %v1014
        %v1310 = vunpack.c.l.b16 %v1015
        %v1311 = vunpack.c.l.b16 %v1016
        %v1312 = vunpack.c.l.b16 %v1017
        %v1313 = vunpack.c.l.b16 %v1018
        %v1314 = vunpack.c.l.b16 %v1019
        %v1315 = vunpack.c.l.b16 %v1020
        %v1316 = vunpack.c.l.b16 %v1021
        %v1317 = vunpack.c.l.b16 %v1022
        %v1318 = vunpack.c.l.b16 %v1023
        %v1319 = vunpack.c.l.b16 %v1024
        %v1320 = vunpack.c.l.b16 %v1025
        %v1321 = vunpack.c.l.b16 %v1026
        %v1322 = vunpack.c.l.b16 %v1027
        %v1323 = vunpack.c.l.b16 %v1028
        %v1324 = vunpack.c.l.b16 %v1029
        %v1325 = vunpack.c.l.b16 %v1030
        %v1326 = vunpack.c.l.b16 %v1031
        %v1327 = vunpack.c.l.b16 %v1032
        %v1328 = vunpack.c.l.b16 %v1033
        %v1329 = vunpack.c.l.b16 %v1034
        %v1330 = vunpack.c.l.b16 %v1035
        %v1331 = vunpack.c.l.b16 %v1036
        %v1332 = vunpack.c.l.b16 %v1037
        %v1333 = vunpack.c.l.b16 %v1038
        %v1334 = vunpack.c.l.b16 %v1039
        %v1335 = vunpack.c.l.b16 %v1040
        %v1336 = vunpack.c.l.b16 %v1041
        %v1337 = vunpack.c.l.b16 %v1042
        %v1338 = vunpack.c.l.b16 %v1043
        %v1339 = vunpack.c.l.b16 %v1044
        %v1340 = vunpack.c.l.b16 %v1045
        %v1341 = vunpack.c.l.b16 %v1046
        %v1342 = vunpack.c.l.b16 %v1047
        %v1343 = vunpack.c.l.b16 %v1048
        %v1344 = vunpack.c.l.b16 %v1049
        %v1345 = vunpack.c.l.b16 %v1050
        %v1346 = vunpack.c.l.b16 %v1051
        %v1347 = vunpack.c.l.b16 %v1052
        %v1348 = vunpack.c.l.b16 %v1053
        %v1349 = vunpack.c.l.b16 %v1054
        %v1350 = vunpack.c.l.b16 %v1055
        %v1351 = vunpack.c.l.b16 %v1056
        %v1352 = vunpack.c.l.b16 %v1057
        %v1353 = vunpack.c.l.b16 %v1058
        %v1354 = vunpack.c.l.b16 %v1059
        %v1355 = vunpack.c.l.b16 %v1060
        %v1356 = vunpack.c.l.b16 %v1061
        %v1357 = vunpack.c.l.b16 %v1062
        %v1358 = vunpack.c.l.b16 %v1063
        %v1359 = vunpack.c.l.b16 %v1064
        %v1360 = vunpack.c.l.b16 %v1065
        %v1361 = vunpack.c.l.b16 %v1066
        %v1362 = vunpack.c.l.b16 %v1067
        %v1363 = vunpack.c.l.b16 %v1068
        %v1364 = vunpack.c.l.b16 %v1069
        %v1365 = vunpack.c.l.b16 %v1070
        %v1366 = vunpack.c.l.b16 %v1071
        %v1367 = vunpack.c.l.b16 %v1072
        %v1368 = vunpack.c.l.b16 %v1073
        %v1369 = vunpack.c.l.b16 %v1074
        %v1370 = vunpack.c.l.b16 %v1075
        %v1371 = vunpack.c.l.b16 %v1076
        %v1372 = vunpack.c.l.b16 %v1077
        %v1373 = vunpack.c.l.b16 %v1078
        %v1374 = vunpack.c.l.b16 %v1079
        %v1375 = vunpack.c.l.b16 %v1080
        %v1376 = vunpack.c.l.b16 %v1081
        %v1377 = vunpack.c.l.b16 %v1082
        %v1378 = vunpack.c.l.b16 %v1083
        %v1379 = vpack.c.b16 %v1236, %v1235
        %v1380 = vpack.c.b16 %v1238, %v1237
        %v1381 = vpack.c.b16 %v1240, %v1239
        %v1382 = vpack.c.b16 %v1242, %v1241
        %v1383 = vpack.c.b16 %v1244, %v1243
        %v1384 = vpack.c.b16 %v1246, %v1245
        %v1385 = vpack.c.b16 %v1248, %v1247
        %v1386 = vpack.c.b16 %v1250, %v1249
        %v1387 = vpack.c.b16 %v1252, %v1251
        %v1388 = vpack.c.b16 %v1254, %v1253
        %v1389 = vpack.c.b16 %v1256, %v1255
        %v1390 = vpack.c.b16 %v1258, %v1257
        %v1391 = vpack.c.b16 %v1260, %v1259
        %v1392 = vpack.c.b16 %v1262, %v1261
        %v1393 = vpack.c.b16 %v1264, %v1263
        %v1394 = vpack.c.b16 %v1266, %v1265
        %v1395 = vpack.c.b16 %v1268, %v1267
        %v1396 = vpack.c.b16 %v1270, %v1269
        %v1397 = vpack.c.b16 %v1272, %v1271
        %v1398 = vpack.c.b16 %v1274, %v1273
        %v1399 = vpack.c.b16 %v1276, %v1275
        %v1400 = vpack.c.b16 %v1278, %v1277
        %v1401 = vpack.c.b16 %v1280, %v1279
        %v1402 = vpack.c.b16 %v1282, %v1281
        %v1403 = vpack.c.b16 %v1284, %v1283
        %v1404 = vpack.c.b16 %v1286, %v1285
        %v1405 = vpack.c.b16 %v1288, %v1287
        %v1406 = vpack.c.b16 %v1290, %v1289
        %v1407 = vpack.c.b16 %v1292, %v1291
        %v1408 = vpack.c.b16 %v1294, %v1293
        %v1409 = vpack.c.b16 %v1296, %v1295
        %v1410 = vpack.c.b16 %v1298, %v1297
        %v1411 = vpack.c.b16 %v1300, %v1299
        %v1412 = vpack.c.b16 %v1302, %v1301
        %v1413 = vpack.c.b16 %v1304, %v1303
        %v1414 = vpack.c.b16 %v1306, %v1305
        %v1415 = vpack.c.b16 %v1308, %v1307
        %v1416 = vpack.c.b16 %v1310, %v1309
        %v1417 = vpack.c.b16 %v1312, %v1311
        %v1418 = vpack.c.b16 %v1314, %v1313
        %v1419 = vpack.c.b16 %v1316, %v1315
        %v1420 = vpack.c.b16 %v1318, %v1317
        %v1421 = vpack.c.b16 %v1320, %v1319
        %v1422 = vpack.c.b16 %v1322, %v1321
        %v1423 = vpack.c.b16 %v1324, %v1323
        %v1424 = vpack.c.b16 %v1326, %v1325
        %v1425 = vpack.c.b16 %v1328, %v1327
        %v1426 = vpack.c.b16 %v1330, %v1329
        %v1427 = vpack.c.b16 %v1332, %v1331
        %v1428 = vpack.c.b16 %v1334, %v1333
        %v1429 = vpack.c.b16 %v1336, %v1335
        %v1430 = vpack.c.b16 %v1338, %v1337
        %v1431 = vpack.c.b16 %v1340, %v1339
        %v1432 = vpack.c.b16 %v1342, %v1341
        %v1433 = vpack.c.b16 %v1344, %v1343
        %v1434 = vpack.c.b16 %v1346, %v1345
        %v1435 = vpack.c.b16 %v1348, %v1347
        %v1436 = vpack.c.b16 %v1350, %v1349
        %v1437 = vpack.c.b16 %v1352, %v1351
        %v1438 = vpack.c.b16 %v1354, %v1353
        %v1439 = vpack.c.b16 %v1356, %v1355
        %v1440 = vpack.c.b16 %v1358, %v1357
        %v1441 = vpack.c.b16 %v1360, %v1359
        %v1442 = vpack.c.b16 %v1362, %v1361
        %v1443 = vpack.c.b16 %v1364, %v1363
        %v1444 = vpack.c.b16 %v1366, %v1365
        %v1445 = vpack.c.b16 %v1368, %v1367
        %v1446 = vpack.c.b16 %v1370, %v1369
        %v1447 = vpack.c.b16 %v1372, %v1371
        %v1448 = vpack.c.b16 %v1374, %v1373
        %v1449 = vpack.c.b16 %v1376, %v1375
        %v1450 = vpack.c.b16 %v1378, %v1377
        %1523 = vmatprep.subr.bf16.mxu0 0
        %1524 = vmatpush1.bf16.msra.mxu0 %v1379
        %1525 = vmatprep.subr.bf16.mxu0 0
        %1526 = vmatpush1.bf16.msra.mxu0 %v1380
        %1527 = vmatprep.subr.bf16.mxu0 0
        %1528 = vmatpush1.bf16.msra.mxu0 %v1381
        %1529 = vmatprep.subr.bf16.mxu0 0
        %1530 = vmatpush1.bf16.msra.mxu0 %v1382
        %1531 = vmatprep.subr.bf16.mxu0 0
        %1532 = vmatpush1.bf16.msra.mxu0 %v1383
        %1533 = vmatprep.subr.bf16.mxu0 0
        %1534 = vmatpush1.bf16.msra.mxu0 %v1384
        %1535 = vmatprep.subr.bf16.mxu0 0
        %1536 = vmatpush1.bf16.msra.mxu0 %v1385
        %1537 = vmatprep.subr.bf16.mxu0 0
        %1538 = vmatpush1.bf16.msra.mxu0 %v1386
        %1539 = vmatprep.subr.bf16.mxu0 0
        %1540 = vmatpush1.bf16.msra.mxu0 %v1387
        %1541 = vmatprep.subr.bf16.mxu0 0
        %1542 = vmatpush1.bf16.msra.mxu0 %v1388
        %1543 = vmatprep.subr.bf16.mxu0 0
        %1544 = vmatpush1.bf16.msra.mxu0 %v1389
        %1545 = vmatprep.subr.bf16.mxu0 0
        %1546 = vmatpush1.bf16.msra.mxu0 %v1390
        %1547 = vmatprep.subr.bf16.mxu0 0
        %1548 = vmatpush1.bf16.msra.mxu0 %v1391
        %1549 = vmatprep.subr.bf16.mxu0 0
        %1550 = vmatpush1.bf16.msra.mxu0 %v1392
        %1551 = vmatprep.subr.bf16.mxu0 0
        %1552 = vmatpush1.bf16.msra.mxu0 %v1393
        %1553 = vmatprep.subr.bf16.mxu0 0
        %1554 = vmatpush1.bf16.msra.mxu0 %v1394
        %1555 = vmatprep.mubr.bf16.mxu0 %v932
        %1556 = vmatmul.mubr.bf16.gmra.mrb[0].mxu0 %v931
        %v1557 = vpop.f32.mrb[0].mxu0
        %v1558 = vadd.f32 %v1089, %v1557
        %v1559 = vpop.f32.mrb[0].mxu0
        %v1560 = vpop.f32.mrb[0].mxu0
        %v1561 = vadd.f32 %v1089, %v1560
        %v1562 = vpop.f32.mrb[0].mxu0
        %1563 = vdwg.mxu0
        %1564 = vmatprep.subr.bf16.mxu0 0
        %1565 = vmatpush1.bf16.msra.mxu0 %v1395
        %1566 = vmatprep.subr.bf16.mxu0 0
        %1567 = vmatpush1.bf16.msra.mxu0 %v1396
        %1568 = vmatprep.subr.bf16.mxu0 0
        %1569 = vmatpush1.bf16.msra.mxu0 %v1397
        %1570 = vmatprep.subr.bf16.mxu0 0
        %1571 = vmatpush1.bf16.msra.mxu0 %v1398
        %1572 = vmatprep.subr.bf16.mxu0 0
        %1573 = vmatpush1.bf16.msra.mxu0 %v1399
        %1574 = vmatprep.subr.bf16.mxu0 0
        %1575 = vmatpush1.bf16.msra.mxu0 %v1400
        %1576 = vmatprep.subr.bf16.mxu0 0
        %1577 = vmatpush1.bf16.msra.mxu0 %v1401
        %1578 = vmatprep.subr.bf16.mxu0 0
        %1579 = vmatpush1.bf16.msra.mxu0 %v1402
        %1580 = vmatprep.subr.bf16.mxu0 0
        %1581 = vmatpush1.bf16.msra.mxu0 %v1403
        %1582 = vmatprep.subr.bf16.mxu0 0
        %1583 = vmatpush1.bf16.msra.mxu0 %v1404
        %1584 = vmatprep.subr.bf16.mxu0 0
        %1585 = vmatpush1.bf16.msra.mxu0 %v1405
        %1586 = vmatprep.subr.bf16.mxu0 0
        %1587 = vmatpush1.bf16.msra.mxu0 %v1406
        %1588 = vmatprep.subr.bf16.mxu0 0
        %1589 = vmatpush1.bf16.msra.mxu0 %v1407
        %1590 = vmatprep.subr.bf16.mxu0 0
        %1591 = vmatpush1.bf16.msra.mxu0 %v1408
        %1592 = vmatprep.subr.bf16.mxu0 0
        %1593 = vmatpush1.bf16.msra.mxu0 %v1409
        %1594 = vmatprep.subr.bf16.mxu0 0
        %1595 = vmatpush1.bf16.msra.mxu0 %v1410
        %1596 = vmatprep.mubr.bf16.mxu0 %v934
        %1597 = vmatmul.mubr.bf16.gmra.mrb[0].mxu0 %v933
        %v1598 = vpop.f32.mrb[0].mxu0
        %v1599 = vadd.f32 %v1558, %v1598
        %v1600 = vpop.f32.mrb[0].mxu0
        %v1601 = vpop.f32.mrb[0].mxu0
        %v1602 = vadd.f32 %v1561, %v1601
        %v1603 = vpop.f32.mrb[0].mxu0
        %1604 = vdwg.mxu0
        %1605 = vmatprep.subr.bf16.mxu0 0
        %1606 = vmatpush1.bf16.msra.mxu0 %v1411
        %1607 = vmatprep.subr.bf16.mxu0 0
        %1608 = vmatpush1.bf16.msra.mxu0 %v1412
        %1609 = vmatprep.subr.bf16.mxu0 0
        %1610 = vmatpush1.bf16.msra.mxu0 %v1413
        %1611 = vmatprep.subr.bf16.mxu0 0
        %1612 = vmatpush1.bf16.msra.mxu0 %v1414
        %1613 = vmatprep.subr.bf16.mxu0 0
        %1614 = vmatpush1.bf16.msra.mxu0 %v1415
        %1615 = vmatprep.subr.bf16.mxu0 0
        %1616 = vmatpush1.bf16.msra.mxu0 %v1416
        %1617 = vmatprep.subr.bf16.mxu0 0
        %1618 = vmatpush1.bf16.msra.mxu0 %v1417
        %1619 = vmatprep.subr.bf16.mxu0 0
        %1620 = vmatpush1.bf16.msra.mxu0 %v1418
        %1621 = vmatprep.subr.bf16.mxu0 0
        %1622 = vmatpush1.bf16.msra.mxu0 %v1419
        %1623 = vmatprep.subr.bf16.mxu0 0
        %1624 = vmatpush1.bf16.msra.mxu0 %v1420
        %1625 = vmatprep.subr.bf16.mxu0 0
        %1626 = vmatpush1.bf16.msra.mxu0 %v1421
        %1627 = vmatprep.subr.bf16.mxu0 0
        %1628 = vmatpush1.bf16.msra.mxu0 %v1422
        %1629 = vmatprep.subr.bf16.mxu0 0
        %1630 = vmatpush1.bf16.msra.mxu0 %v1423
        %1631 = vmatprep.subr.bf16.mxu0 0
        %1632 = vmatpush1.bf16.msra.mxu0 %v1424
        %1633 = vmatprep.subr.bf16.mxu0 0
        %1634 = vmatpush1.bf16.msra.mxu0 %v1425
        %1635 = vmatprep.subr.bf16.mxu0 0
        %1636 = vmatpush1.bf16.msra.mxu0 %v1426
        %1637 = vmatprep.mubr.bf16.mxu0 %v936
        %1638 = vmatmul.mubr.bf16.gmra.mrb[0].mxu0 %v935
        %v1639 = vpop.f32.mrb[0].mxu0
        %v1640 = vadd.f32 %v1599, %v1639
        %v1641 = vpop.f32.mrb[0].mxu0
        %v1642 = vpop.f32.mrb[0].mxu0
        %v1643 = vadd.f32 %v1602, %v1642
        %v1644 = vpop.f32.mrb[0].mxu0
        %1645 = vdwg.mxu0
        %1646 = vmatprep.subr.bf16.mxu0 0
        %1647 = vmatpush1.bf16.msra.mxu0 %v1427
        %1648 = vmatprep.subr.bf16.mxu0 0
        %1649 = vmatpush1.bf16.msra.mxu0 %v1428
        %1650 = vmatprep.subr.bf16.mxu0 0
        %1651 = vmatpush1.bf16.msra.mxu0 %v1429
        %1652 = vmatprep.subr.bf16.mxu0 0
        %1653 = vmatpush1.bf16.msra.mxu0 %v1430
        %1654 = vmatprep.subr.bf16.mxu0 0
        %1655 = vmatpush1.bf16.msra.mxu0 %v1431
        %1656 = vmatprep.subr.bf16.mxu0 0
        %1657 = vmatpush1.bf16.msra.mxu0 %v1432
        %1658 = vmatprep.subr.bf16.mxu0 0
        %1659 = vmatpush1.bf16.msra.mxu0 %v1433
        %1660 = vmatprep.subr.bf16.mxu0 0
        %1661 = vmatpush1.bf16.msra.mxu0 %v1434
        %1662 = vmatprep.subr.bf16.mxu0 0
        %1663 = vmatpush1.bf16.msra.mxu0 %v1435
        %1664 = vmatprep.subr.bf16.mxu0 0
        %1665 = vmatpush1.bf16.msra.mxu0 %v1436
        %1666 = vmatprep.subr.bf16.mxu0 0
        %1667 = vmatpush1.bf16.msra.mxu0 %v1437
        %1668 = vmatprep.subr.bf16.mxu0 0
        %1669 = vmatpush1.bf16.msra.mxu0 %v1438
        %1670 = vmatprep.subr.bf16.mxu0 0
        %1671 = vmatpush1.bf16.msra.mxu0 %v1439
        %1672 = vmatprep.subr.bf16.mxu0 0
        %1673 = vmatpush1.bf16.msra.mxu0 %v1440
        %1674 = vmatprep.subr.bf16.mxu0 0
        %1675 = vmatpush1.bf16.msra.mxu0 %v1441
        %1676 = vmatprep.subr.bf16.mxu0 0
        %1677 = vmatpush1.bf16.msra.mxu0 %v1442
        %1678 = vmatprep.mubr.bf16.mxu0 %v938
        %1679 = vmatmul.mubr.bf16.gmra.mrb[0].mxu0 %v937
        %v1680 = vpop.f32.mrb[0].mxu0
        %v1681 = vadd.f32 %v1640, %v1680
        %v1682 = vpop.f32.mrb[0].mxu0
        %v1683 = vpop.f32.mrb[0].mxu0
        %v1684 = vadd.f32 %v1643, %v1683
        %v1685 = vpop.f32.mrb[0].mxu0
        %1686 = vdwg.mxu0
        %1687 = vmatprep.subr.bf16.mxu0 0
        %1688 = vmatpush1.bf16.msra.mxu0 %v1443
        %1689 = vmatprep.subr.bf16.mxu0 0
        %1690 = vmatpush1.bf16.msra.mxu0 %v1444
        %1691 = vmatprep.subr.bf16.mxu0 0
        %1692 = vmatpush1.bf16.msra.mxu0 %v1445
        %1693 = vmatprep.subr.bf16.mxu0 0
        %1694 = vmatpush1.bf16.msra.mxu0 %v1446
        %1695 = vmatprep.subr.bf16.mxu0 0
        %1696 = vmatpush1.bf16.msra.mxu0 %v1447
        %1697 = vmatprep.subr.bf16.mxu0 0
        %1698 = vmatpush1.bf16.msra.mxu0 %v1448
        %1699 = vmatprep.subr.bf16.mxu0 0
        %1700 = vmatpush1.bf16.msra.mxu0 %v1449
        %1701 = vmatprep.subr.bf16.mxu0 0
        %1702 = vmatpush1.bf16.msra.mxu0 %v1450
        %1703 = vmatprep.subr.bf16.mxu0 0
        %1704 = vmatpush1.bf16.msra.mxu0 0
        %1705 = vmatprep.subr.bf16.mxu0 0
        %1706 = vmatpush1.bf16.msra.mxu0 0
        %1707 = vmatprep.subr.bf16.mxu0 0
        %1708 = vmatpush1.bf16.msra.mxu0 0
        %1709 = vmatprep.subr.bf16.mxu0 0
        %1710 = vmatpush1.bf16.msra.mxu0 0
        %1711 = vmatprep.subr.bf16.mxu0 0
        %1712 = vmatpush1.bf16.msra.mxu0 0
        %1713 = vmatprep.subr.bf16.mxu0 0
        %1714 = vmatpush1.bf16.msra.mxu0 0
        %1715 = vmatprep.subr.bf16.mxu0 0
        %1716 = vmatpush1.bf16.msra.mxu0 0
        %1717 = vmatprep.subr.bf16.mxu0 0
        %1718 = vmatpush1.bf16.msra.mxu0 0
        %1719 = vmatprep.mubr.bf16.mxu0 0
        %1720 = vmatmul.mubr.bf16.gmra.mrb[0].mxu0 %v939
        %v1721 = vpop.f32.mrb[0].mxu0
        %v1722 = vadd.f32 %v1681, %v1721
        %v1723 = vpop.f32.mrb[0].mxu0
        %v1724 = vpop.f32.mrb[0].mxu0
        %v1725 = vadd.f32 %v1684, %v1724
        %v1726 = vpop.f32.mrb[0].mxu0
        %1727 = vdwg.mxu0
        %1728 = vst [vmem:[%s706] sm:$0xff] %v1722
        %1729 = vst [vmem:[%s706 + $0x8] sm:$0xff] %v1725
        %v1730 = vld [vmem:[%s3] sm:$0x1]
        %v1732 = vlaneseq
        %v1733 = vshrl.u32 %v1732, 7
        %v1734 = vsub.s32 0, %v1733
        %v1735 = vrot.slane %v1730, %v1734
        %v1737 = vmul.f32 %v1722, %v1735
        %v1738 = vmul.f32 %v1725, %v1735
        %v1739 = vld [vmem:[%s4] sm:$0x1]
        %v1741 = vlaneseq
        %v1742 = vshrl.u32 %v1741, 7
        %v1743 = vsub.s32 0, %v1742
        %v1744 = vrot.slane %v1739, %v1743
        %v1746 = vadd.f32 %v1737, %v1744
        %v1747 = vadd.f32 %v1738, %v1744
        %1748 = vst [vmem:[%s713] sm:$0xff] %v1746
        %1749 = vst [vmem:[%s713 + $0x8] sm:$0xff] %v1747
        %v1750 = vmax.f32 %v1746, 0.0
        %v1751 = vmax.f32 %v1747, 0.0
        %1752 = vst [vmem:[%s720] sm:$0xff] %v1750
        %1753 = vst [vmem:[%s720 + $0x8] sm:$0xff] %v1751
        %v1756 = vrot.slane %v1750, 7
        %v1757 = vrot.slane %v1751, 7
        %v1758 = vsel %vm783, %v1756, %v1757
        %1759 = vrot.lane.b32.xlu0 %v1756, 8
        %v1760 = vpop.permute.xlu0 %1759
        %1761 = vrot.lane.b32.xlu0 %v1758, 8
        %v1762 = vpop.permute.xlu0 %1761
        %1763 = vrot.lane.b32.xlu0 %v1757, 8
        %v1764 = vpop.permute.xlu0 %1763
        %1768 = vst.msk [vmem:[#allocation2] sm:$0xfe] %vm796, %v1760
        %1769 = vst.msk [vmem:[#allocation2 + $0x8] sm:$0xfe] %vm798, %v1760
        %1770 = vst.msk [vmem:[#allocation2 + $0x10] sm:$0xff] %vm800, %v1762
        %1771 = vst.msk [vmem:[#allocation2 + $0x18] sm:$0xff] %vm769, %v1762
        %1772 = vst.msk [vmem:[#allocation2 + $0x20] sm:$0x1] %vm803, %v1764
        %1773 = vst.msk [vmem:[#allocation2 + $0x28] sm:$0x1] %vm805, %v1764
        %v1774 = vld [vmem:[#allocation2] sm:$0xff]
        %v1775 = vld [vmem:[#allocation2 + $0x10] sm:$0xff]
        %v1776 = vld [vmem:[#allocation2 + $0x8] sm:$0xff]
        %v1777 = vld [vmem:[#allocation2 + $0x18] sm:$0xff]
        %v1778 = vld [vmem:[#allocation2] sm:$0xfe]
        %v1779 = vld [vmem:[#allocation2 + $0x20] sm:$0x1]
        %v1780 = vld [vmem:[#allocation2 + $0x8] sm:$0xfe]
        %v1781 = vld [vmem:[#allocation2 + $0x28] sm:$0x1]
        %v1782 = vld [vmem:[#allocation2] sm:$0xfc]
        %v1783 = vld [vmem:[#allocation2 + $0x20] sm:$0x3]
        %v1784 = vld [vmem:[#allocation2 + $0x8] sm:$0xfc]
        %v1785 = vld [vmem:[#allocation2 + $0x28] sm:$0x3]
        %1790 = vrot.lane.b32.xlu0 %v1774, 120
        %v1791 = vpop.permute.xlu0 %1790
        %1792 = vrot.lane.b32.xlu0 %v1776, 120
        %v1793 = vpop.permute.xlu0 %1792
        %1794 = vrot.lane.b32.xlu0 %v1775, 120
        %v1795 = vpop.permute.xlu0 %1794
        %1796 = vrot.lane.b32.xlu0 %v1777, 120
        %v1797 = vpop.permute.xlu0 %1796
        %v1798 = vsel %vm831, %v1791, %v1793
        %v1799 = vsel %vm831, %v1795, %v1797
        %1802 = vrot.lane.b32.xlu0 %v1774, 112
        %v1803 = vpop.permute.xlu0 %1802
        %1804 = vrot.lane.b32.xlu0 %v1776, 112
        %v1805 = vpop.permute.xlu0 %1804
        %1806 = vrot.lane.b32.xlu0 %v1775, 112
        %v1807 = vpop.permute.xlu0 %1806
        %1808 = vrot.lane.b32.xlu0 %v1777, 112
        %v1809 = vpop.permute.xlu0 %1808
        %v1810 = vsel %vm844, %v1803, %v1805
        %v1811 = vsel %vm844, %v1807, %v1809
        %v1816 = vrot.slane %v1778, 1
        %v1817 = vrot.slane %v1775, 1
        %v1818 = vsel %vm851, %v1816, %v1817
        %v1819 = vrot.slane %v1779, 1
        %v1820 = vsel %vm851, %v1817, %v1819
        %v1825 = vrot.slane %v1780, 1
        %v1826 = vrot.slane %v1777, 1
        %v1827 = vsel %vm851, %v1825, %v1826
        %v1828 = vrot.slane %v1781, 1
        %v1829 = vsel %vm851, %v1826, %v1828
        %1830 = vrot.lane.b32.xlu0 %v1818, 120
        %v1831 = vpop.permute.xlu0 %1830
        %1832 = vrot.lane.b32.xlu0 %v1827, 120
        %v1833 = vpop.permute.xlu0 %1832
        %1834 = vrot.lane.b32.xlu0 %v1820, 120
        %v1835 = vpop.permute.xlu0 %1834
        %1836 = vrot.lane.b32.xlu0 %v1829, 120
        %v1837 = vpop.permute.xlu0 %1836
        %v1838 = vsel %vm831, %v1831, %v1833
        %v1839 = vsel %vm831, %v1835, %v1837
        %1842 = vrot.lane.b32.xlu0 %v1818, 112
        %v1843 = vpop.permute.xlu0 %1842
        %1844 = vrot.lane.b32.xlu0 %v1827, 112
        %v1845 = vpop.permute.xlu0 %1844
        %1846 = vrot.lane.b32.xlu0 %v1820, 112
        %v1847 = vpop.permute.xlu0 %1846
        %1848 = vrot.lane.b32.xlu0 %v1829, 112
        %v1849 = vpop.permute.xlu0 %1848
        %v1850 = vsel %vm844, %v1843, %v1845
        %v1851 = vsel %vm844, %v1847, %v1849
        %v1856 = vrot.slane %v1782, 2
        %v1857 = vrot.slane %v1775, 2
        %v1858 = vsel %vm892, %v1856, %v1857
        %v1859 = vrot.slane %v1783, 2
        %v1860 = vsel %vm892, %v1857, %v1859
        %v1865 = vrot.slane %v1784, 2
        %v1866 = vrot.slane %v1777, 2
        %v1867 = vsel %vm892, %v1865, %v1866
        %v1868 = vrot.slane %v1785, 2
        %v1869 = vsel %vm892, %v1866, %v1868
        %1870 = vrot.lane.b32.xlu0 %v1858, 120
        %v1871 = vpop.permute.xlu0 %1870
        %1872 = vrot.lane.b32.xlu0 %v1867, 120
        %v1873 = vpop.permute.xlu0 %1872
        %1874 = vrot.lane.b32.xlu0 %v1860, 120
        %v1875 = vpop.permute.xlu0 %1874
        %1876 = vrot.lane.b32.xlu0 %v1869, 120
        %v1877 = vpop.permute.xlu0 %1876
        %v1878 = vsel %vm831, %v1871, %v1873
        %v1879 = vsel %vm831, %v1875, %v1877
        %1882 = vrot.lane.b32.xlu0 %v1858, 112
        %v1883 = vpop.permute.xlu0 %1882
        %1884 = vrot.lane.b32.xlu0 %v1867, 112
        %v1885 = vpop.permute.xlu0 %1884
        %1886 = vrot.lane.b32.xlu0 %v1860, 112
        %v1887 = vpop.permute.xlu0 %1886
        %1888 = vrot.lane.b32.xlu0 %v1869, 112
        %v1889 = vpop.permute.xlu0 %1888
        %v1890 = vsel %vm844, %v1883, %v1885
        %v1891 = vsel %vm844, %v1887, %v1889
        %v1894 = vpack.c.bf16 %v1775, %v1774
        %v1895 = vpack.c.bf16 %v1799, %v1798
        %v1896 = vpack.c.bf16 %v1811, %v1810
        %v1897 = vpack.c.bf16 %v1820, %v1818
        %v1898 = vpack.c.bf16 %v1839, %v1838
        %v1899 = vpack.c.bf16 %v1851, %v1850
        %v1900 = vpack.c.bf16 %v1860, %v1858
        %v1901 = vpack.c.bf16 %v1879, %v1878
        %v1902 = vpack.c.bf16 %v1891, %v1890
        %v1903 = vld [vmem:[#allocation6] sm:$0xf]
        %v1904 = vld [vmem:[#allocation6 + $0x4] sm:$0xf]
        %v1905 = vld [vmem:[#allocation6 + $0x8] sm:$0xf]
        %v1906 = vld [vmem:[#allocation6 + $0xc] sm:$0xf]
        %v1907 = vld [vmem:[#allocation6 + $0x10] sm:$0xf]
        %v1908 = vld [vmem:[#allocation6 + $0x14] sm:$0xf]
        %v1909 = vld [vmem:[#allocation6 + $0x18] sm:$0xf]
        %v1910 = vld [vmem:[#allocation6 + $0x1c] sm:$0xf]
        %v1911 = vld [vmem:[#allocation6 + $0x20] sm:$0xf]
        %v1912 = vld [vmem:[#allocation6 + $0x24] sm:$0xf]
        %v1913 = vld [vmem:[#allocation6 + $0x28] sm:$0xf]
        %v1914 = vld [vmem:[#allocation6 + $0x2c] sm:$0xf]
        %v1915 = vld [vmem:[#allocation6 + $0x30] sm:$0xf]
        %v1916 = vld [vmem:[#allocation6 + $0x34] sm:$0xf]
        %v1917 = vld [vmem:[#allocation6 + $0x38] sm:$0xf]
        %v1918 = vld [vmem:[#allocation6 + $0x3c] sm:$0xf]
        %v1919 = vld [vmem:[#allocation6 + $0x40] sm:$0xf]
        %v1920 = vld [vmem:[#allocation6 + $0x44] sm:$0xf]
        %v1921 = vld [vmem:[#allocation6 + $0x48] sm:$0xf]
        %v1922 = vld [vmem:[#allocation6 + $0x4c] sm:$0xf]
        %v1923 = vld [vmem:[#allocation6 + $0x50] sm:$0xf]
        %v1924 = vld [vmem:[#allocation6 + $0x54] sm:$0xf]
        %v1925 = vld [vmem:[#allocation6 + $0x58] sm:$0xf]
        %v1926 = vld [vmem:[#allocation6 + $0x5c] sm:$0xf]
        %v1927 = vld [vmem:[#allocation6 + $0x60] sm:$0xf]
        %v1928 = vld [vmem:[#allocation6 + $0x64] sm:$0xf]
        %v1929 = vld [vmem:[#allocation6 + $0x68] sm:$0xf]
        %v1930 = vld [vmem:[#allocation6 + $0x6c] sm:$0xf]
        %v1931 = vld [vmem:[#allocation6 + $0x70] sm:$0xf]
        %v1932 = vld [vmem:[#allocation6 + $0x74] sm:$0xf]
        %v1933 = vld [vmem:[#allocation6 + $0x78] sm:$0xf]
        %v1934 = vld [vmem:[#allocation6 + $0x7c] sm:$0xf]
        %v1935 = vld [vmem:[#allocation6 + $0x80] sm:$0xf]
        %v1936 = vld [vmem:[#allocation6 + $0x84] sm:$0xf]
        %v1937 = vld [vmem:[#allocation6 + $0x88] sm:$0xf]
        %v1938 = vld [vmem:[#allocation6 + $0x8c] sm:$0xf]
        %v1939 = vld [vmem:[#allocation6 + $0x90] sm:$0xf]
        %v1940 = vld [vmem:[#allocation6 + $0x94] sm:$0xf]
        %v1941 = vld [vmem:[#allocation6 + $0x98] sm:$0xf]
        %v1942 = vld [vmem:[#allocation6 + $0x9c] sm:$0xf]
        %v1943 = vld [vmem:[#allocation6 + $0xa0] sm:$0xf]
        %v1944 = vld [vmem:[#allocation6 + $0xa4] sm:$0xf]
        %v1945 = vld [vmem:[#allocation6 + $0xa8] sm:$0xf]
        %v1946 = vld [vmem:[#allocation6 + $0xac] sm:$0xf]
        %v1947 = vld [vmem:[#allocation6 + $0xb0] sm:$0xf]
        %v1948 = vld [vmem:[#allocation6 + $0xb4] sm:$0xf]
        %v1949 = vld [vmem:[#allocation6 + $0xb8] sm:$0xf]
        %v1950 = vld [vmem:[#allocation6 + $0xbc] sm:$0xf]
        %v1951 = vld [vmem:[#allocation6 + $0xc0] sm:$0xf]
        %v1952 = vld [vmem:[#allocation6 + $0xc4] sm:$0xf]
        %v1953 = vld [vmem:[#allocation6 + $0xc8] sm:$0xf]
        %v1954 = vld [vmem:[#allocation6 + $0xcc] sm:$0xf]
        %v1955 = vld [vmem:[#allocation6 + $0xd0] sm:$0xf]
        %v1956 = vld [vmem:[#allocation6 + $0xd4] sm:$0xf]
        %v1957 = vld [vmem:[#allocation6 + $0xd8] sm:$0xf]
        %v1958 = vld [vmem:[#allocation6 + $0xdc] sm:$0xf]
        %v1959 = vld [vmem:[#allocation6 + $0xe0] sm:$0xf]
        %v1960 = vld [vmem:[#allocation6 + $0xe4] sm:$0xf]
        %v1961 = vld [vmem:[#allocation6 + $0xe8] sm:$0xf]
        %v1962 = vld [vmem:[#allocation6 + $0xec] sm:$0xf]
        %v1963 = vld [vmem:[#allocation6 + $0xf0] sm:$0xf]
        %v1964 = vld [vmem:[#allocation6 + $0xf4] sm:$0xf]
        %v1965 = vld [vmem:[#allocation6 + $0xf8] sm:$0xf]
        %v1966 = vld [vmem:[#allocation6 + $0xfc] sm:$0xf]
        %v1967 = vld [vmem:[#allocation6 + $0x100] sm:$0xf]
        %v1968 = vld [vmem:[#allocation6 + $0x104] sm:$0xf]
        %v1969 = vld [vmem:[#allocation6 + $0x108] sm:$0xf]
        %v1970 = vld [vmem:[#allocation6 + $0x10c] sm:$0xf]
        %v1971 = vld [vmem:[#allocation6 + $0x110] sm:$0xf]
        %v1972 = vld [vmem:[#allocation6 + $0x114] sm:$0xf]
        %v1973 = vld [vmem:[#allocation6 + $0x118] sm:$0xf]
        %v1974 = vld [vmem:[#allocation6 + $0x11c] sm:$0xf]
        %v1975 = vld [vmem:[#allocation6 + $0x120] sm:$0xf]
        %v1976 = vld [vmem:[#allocation6 + $0x124] sm:$0xf]
        %v1977 = vld [vmem:[#allocation6 + $0x128] sm:$0xf]
        %v1978 = vld [vmem:[#allocation6 + $0x12c] sm:$0xf]
        %v1979 = vld [vmem:[#allocation6 + $0x130] sm:$0xf]
        %v1980 = vld [vmem:[#allocation6 + $0x134] sm:$0xf]
        %v1981 = vld [vmem:[#allocation6 + $0x138] sm:$0xf]
        %v1982 = vld [vmem:[#allocation6 + $0x13c] sm:$0xf]
        %v1983 = vld [vmem:[#allocation6 + $0x140] sm:$0xf]
        %v1984 = vld [vmem:[#allocation6 + $0x144] sm:$0xf]
        %v1985 = vld [vmem:[#allocation6 + $0x148] sm:$0xf]
        %v1986 = vld [vmem:[#allocation6 + $0x14c] sm:$0xf]
        %v1987 = vld [vmem:[#allocation6 + $0x150] sm:$0xf]
        %v1988 = vld [vmem:[#allocation6 + $0x154] sm:$0xf]
        %v1989 = vld [vmem:[#allocation6 + $0x158] sm:$0xf]
        %v1990 = vld [vmem:[#allocation6 + $0x15c] sm:$0xf]
        %v1991 = vld [vmem:[#allocation6 + $0x160] sm:$0xf]
        %v1992 = vld [vmem:[#allocation6 + $0x164] sm:$0xf]
        %v1993 = vld [vmem:[#allocation6 + $0x168] sm:$0xf]
        %v1994 = vld [vmem:[#allocation6 + $0x16c] sm:$0xf]
        %v1995 = vld [vmem:[#allocation6 + $0x170] sm:$0xf]
        %v1996 = vld [vmem:[#allocation6 + $0x174] sm:$0xf]
        %v1997 = vld [vmem:[#allocation6 + $0x178] sm:$0xf]
        %v1998 = vld [vmem:[#allocation6 + $0x17c] sm:$0xf]
        %v1999 = vld [vmem:[#allocation6 + $0x180] sm:$0xf]
        %v2000 = vld [vmem:[#allocation6 + $0x184] sm:$0xf]
        %v2001 = vld [vmem:[#allocation6 + $0x188] sm:$0xf]
        %v2002 = vld [vmem:[#allocation6 + $0x18c] sm:$0xf]
        %v2003 = vld [vmem:[#allocation6 + $0x190] sm:$0xf]
        %v2004 = vld [vmem:[#allocation6 + $0x194] sm:$0xf]
        %v2005 = vld [vmem:[#allocation6 + $0x198] sm:$0xf]
        %v2006 = vld [vmem:[#allocation6 + $0x19c] sm:$0xf]
        %v2007 = vld [vmem:[#allocation6 + $0x1a0] sm:$0xf]
        %v2008 = vld [vmem:[#allocation6 + $0x1a4] sm:$0xf]
        %v2009 = vld [vmem:[#allocation6 + $0x1a8] sm:$0xf]
        %v2010 = vld [vmem:[#allocation6 + $0x1ac] sm:$0xf]
        %v2011 = vld [vmem:[#allocation6 + $0x1b0] sm:$0xf]
        %v2012 = vld [vmem:[#allocation6 + $0x1b4] sm:$0xf]
        %v2013 = vld [vmem:[#allocation6 + $0x1b8] sm:$0xf]
        %v2014 = vld [vmem:[#allocation6 + $0x1bc] sm:$0xf]
        %v2015 = vld [vmem:[#allocation6 + $0x1c0] sm:$0xf]
        %v2016 = vld [vmem:[#allocation6 + $0x1c4] sm:$0xf]
        %v2017 = vld [vmem:[#allocation6 + $0x1c8] sm:$0xf]
        %v2018 = vld [vmem:[#allocation6 + $0x1cc] sm:$0xf]
        %v2019 = vld [vmem:[#allocation6 + $0x1d0] sm:$0xf]
        %v2020 = vld [vmem:[#allocation6 + $0x1d4] sm:$0xf]
        %v2021 = vld [vmem:[#allocation6 + $0x1d8] sm:$0xf]
        %v2022 = vld [vmem:[#allocation6 + $0x1dc] sm:$0xf]
        %v2023 = vld [vmem:[#allocation6 + $0x1e0] sm:$0xf]
        %v2024 = vld [vmem:[#allocation6 + $0x1e4] sm:$0xf]
        %v2025 = vld [vmem:[#allocation6 + $0x1e8] sm:$0xf]
        %v2026 = vld [vmem:[#allocation6 + $0x1ec] sm:$0xf]
        %v2027 = vld [vmem:[#allocation6 + $0x1f0] sm:$0xf]
        %v2028 = vld [vmem:[#allocation6 + $0x1f4] sm:$0xf]
        %v2029 = vld [vmem:[#allocation6 + $0x1f8] sm:$0xf]
        %v2030 = vld [vmem:[#allocation6 + $0x1fc] sm:$0xf]
        %v2031 = vld [vmem:[#allocation6 + $0x200] sm:$0xf]
        %v2032 = vld [vmem:[#allocation6 + $0x204] sm:$0xf]
        %v2033 = vld [vmem:[#allocation6 + $0x208] sm:$0xf]
        %v2034 = vld [vmem:[#allocation6 + $0x20c] sm:$0xf]
        %v2035 = vld [vmem:[#allocation6 + $0x210] sm:$0xf]
        %v2036 = vld [vmem:[#allocation6 + $0x214] sm:$0xf]
        %v2037 = vld [vmem:[#allocation6 + $0x218] sm:$0xf]
        %v2038 = vld [vmem:[#allocation6 + $0x21c] sm:$0xf]
        %v2039 = vld [vmem:[#allocation6 + $0x220] sm:$0xf]
        %v2040 = vld [vmem:[#allocation6 + $0x224] sm:$0xf]
        %v2041 = vld [vmem:[#allocation6 + $0x228] sm:$0xf]
        %v2042 = vld [vmem:[#allocation6 + $0x22c] sm:$0xf]
        %v2043 = vld [vmem:[#allocation6 + $0x230] sm:$0xf]
        %v2044 = vld [vmem:[#allocation6 + $0x234] sm:$0xf]
        %v2045 = vld [vmem:[#allocation6 + $0x238] sm:$0xf]
        %v2046 = vld [vmem:[#allocation6 + $0x23c] sm:$0xf]
        %v2191 = vunpack.c.l.b16 %v1903
        %v2192 = vunpack.c.l.b16 %v1904
        %v2193 = vunpack.c.l.b16 %v1905
        %v2194 = vunpack.c.l.b16 %v1906
        %v2195 = vunpack.c.l.b16 %v1907
        %v2196 = vunpack.c.l.b16 %v1908
        %v2197 = vunpack.c.l.b16 %v1909
        %v2198 = vunpack.c.l.b16 %v1910
        %v2199 = vunpack.c.l.b16 %v1911
        %v2200 = vunpack.c.l.b16 %v1912
        %v2201 = vunpack.c.l.b16 %v1913
        %v2202 = vunpack.c.l.b16 %v1914
        %v2203 = vunpack.c.l.b16 %v1915
        %v2204 = vunpack.c.l.b16 %v1916
        %v2205 = vunpack.c.l.b16 %v1917
        %v2206 = vunpack.c.l.b16 %v1918
        %v2207 = vunpack.c.l.b16 %v1919
        %v2208 = vunpack.c.l.b16 %v1920
        %v2209 = vunpack.c.l.b16 %v1921
        %v2210 = vunpack.c.l.b16 %v1922
        %v2211 = vunpack.c.l.b16 %v1923
        %v2212 = vunpack.c.l.b16 %v1924
        %v2213 = vunpack.c.l.b16 %v1925
        %v2214 = vunpack.c.l.b16 %v1926
        %v2215 = vunpack.c.l.b16 %v1927
        %v2216 = vunpack.c.l.b16 %v1928
        %v2217 = vunpack.c.l.b16 %v1929
        %v2218 = vunpack.c.l.b16 %v1930
        %v2219 = vunpack.c.l.b16 %v1931
        %v2220 = vunpack.c.l.b16 %v1932
        %v2221 = vunpack.c.l.b16 %v1933
        %v2222 = vunpack.c.l.b16 %v1934
        %v2223 = vunpack.c.l.b16 %v1935
        %v2224 = vunpack.c.l.b16 %v1936
        %v2225 = vunpack.c.l.b16 %v1937
        %v2226 = vunpack.c.l.b16 %v1938
        %v2227 = vunpack.c.l.b16 %v1939
        %v2228 = vunpack.c.l.b16 %v1940
        %v2229 = vunpack.c.l.b16 %v1941
        %v2230 = vunpack.c.l.b16 %v1942
        %v2231 = vunpack.c.l.b16 %v1943
        %v2232 = vunpack.c.l.b16 %v1944
        %v2233 = vunpack.c.l.b16 %v1945
        %v2234 = vunpack.c.l.b16 %v1946
        %v2235 = vunpack.c.l.b16 %v1947
        %v2236 = vunpack.c.l.b16 %v1948
        %v2237 = vunpack.c.l.b16 %v1949
        %v2238 = vunpack.c.l.b16 %v1950
        %v2239 = vunpack.c.l.b16 %v1951
        %v2240 = vunpack.c.l.b16 %v1952
        %v2241 = vunpack.c.l.b16 %v1953
        %v2242 = vunpack.c.l.b16 %v1954
        %v2243 = vunpack.c.l.b16 %v1955
        %v2244 = vunpack.c.l.b16 %v1956
        %v2245 = vunpack.c.l.b16 %v1957
        %v2246 = vunpack.c.l.b16 %v1958
        %v2247 = vunpack.c.l.b16 %v1959
        %v2248 = vunpack.c.l.b16 %v1960
        %v2249 = vunpack.c.l.b16 %v1961
        %v2250 = vunpack.c.l.b16 %v1962
        %v2251 = vunpack.c.l.b16 %v1963
        %v2252 = vunpack.c.l.b16 %v1964
        %v2253 = vunpack.c.l.b16 %v1965
        %v2254 = vunpack.c.l.b16 %v1966
        %v2255 = vunpack.c.l.b16 %v1967
        %v2256 = vunpack.c.l.b16 %v1968
        %v2257 = vunpack.c.l.b16 %v1969
        %v2258 = vunpack.c.l.b16 %v1970
        %v2259 = vunpack.c.l.b16 %v1971
        %v2260 = vunpack.c.l.b16 %v1972
        %v2261 = vunpack.c.l.b16 %v1973
        %v2262 = vunpack.c.l.b16 %v1974
        %v2263 = vunpack.c.l.b16 %v1975
        %v2264 = vunpack.c.l.b16 %v1976
        %v2265 = vunpack.c.l.b16 %v1977
        %v2266 = vunpack.c.l.b16 %v1978
        %v2267 = vunpack.c.l.b16 %v1979
        %v2268 = vunpack.c.l.b16 %v1980
        %v2269 = vunpack.c.l.b16 %v1981
        %v2270 = vunpack.c.l.b16 %v1982
        %v2271 = vunpack.c.l.b16 %v1983
        %v2272 = vunpack.c.l.b16 %v1984
        %v2273 = vunpack.c.l.b16 %v1985
        %v2274 = vunpack.c.l.b16 %v1986
        %v2275 = vunpack.c.l.b16 %v1987
        %v2276 = vunpack.c.l.b16 %v1988
        %v2277 = vunpack.c.l.b16 %v1989
        %v2278 = vunpack.c.l.b16 %v1990
        %v2279 = vunpack.c.l.b16 %v1991
        %v2280 = vunpack.c.l.b16 %v1992
        %v2281 = vunpack.c.l.b16 %v1993
        %v2282 = vunpack.c.l.b16 %v1994
        %v2283 = vunpack.c.l.b16 %v1995
        %v2284 = vunpack.c.l.b16 %v1996
        %v2285 = vunpack.c.l.b16 %v1997
        %v2286 = vunpack.c.l.b16 %v1998
        %v2287 = vunpack.c.l.b16 %v1999
        %v2288 = vunpack.c.l.b16 %v2000
        %v2289 = vunpack.c.l.b16 %v2001
        %v2290 = vunpack.c.l.b16 %v2002
        %v2291 = vunpack.c.l.b16 %v2003
        %v2292 = vunpack.c.l.b16 %v2004
        %v2293 = vunpack.c.l.b16 %v2005
        %v2294 = vunpack.c.l.b16 %v2006
        %v2295 = vunpack.c.l.b16 %v2007
        %v2296 = vunpack.c.l.b16 %v2008
        %v2297 = vunpack.c.l.b16 %v2009
        %v2298 = vunpack.c.l.b16 %v2010
        %v2299 = vunpack.c.l.b16 %v2011
        %v2300 = vunpack.c.l.b16 %v2012
        %v2301 = vunpack.c.l.b16 %v2013
        %v2302 = vunpack.c.l.b16 %v2014
        %v2303 = vunpack.c.l.b16 %v2015
        %v2304 = vunpack.c.l.b16 %v2016
        %v2305 = vunpack.c.l.b16 %v2017
        %v2306 = vunpack.c.l.b16 %v2018
        %v2307 = vunpack.c.l.b16 %v2019
        %v2308 = vunpack.c.l.b16 %v2020
        %v2309 = vunpack.c.l.b16 %v2021
        %v2310 = vunpack.c.l.b16 %v2022
        %v2311 = vunpack.c.l.b16 %v2023
        %v2312 = vunpack.c.l.b16 %v2024
        %v2313 = vunpack.c.l.b16 %v2025
        %v2314 = vunpack.c.l.b16 %v2026
        %v2315 = vunpack.c.l.b16 %v2027
        %v2316 = vunpack.c.l.b16 %v2028
        %v2317 = vunpack.c.l.b16 %v2029
        %v2318 = vunpack.c.l.b16 %v2030
        %v2319 = vunpack.c.l.b16 %v2031
        %v2320 = vunpack.c.l.b16 %v2032
        %v2321 = vunpack.c.l.b16 %v2033
        %v2322 = vunpack.c.l.b16 %v2034
        %v2323 = vunpack.c.l.b16 %v2035
        %v2324 = vunpack.c.l.b16 %v2036
        %v2325 = vunpack.c.l.b16 %v2037
        %v2326 = vunpack.c.l.b16 %v2038
        %v2327 = vunpack.c.l.b16 %v2039
        %v2328 = vunpack.c.l.b16 %v2040
        %v2329 = vunpack.c.l.b16 %v2041
        %v2330 = vunpack.c.l.b16 %v2042
        %v2331 = vunpack.c.l.b16 %v2043
        %v2332 = vunpack.c.l.b16 %v2044
        %v2333 = vunpack.c.l.b16 %v2045
        %v2334 = vunpack.c.l.b16 %v2046
        %v2335 = vpack.c.b16 %v2192, %v2191
        %v2336 = vpack.c.b16 %v2194, %v2193
        %v2337 = vpack.c.b16 %v2196, %v2195
        %v2338 = vpack.c.b16 %v2198, %v2197
        %v2339 = vpack.c.b16 %v2200, %v2199
        %v2340 = vpack.c.b16 %v2202, %v2201
        %v2341 = vpack.c.b16 %v2204, %v2203
        %v2342 = vpack.c.b16 %v2206, %v2205
        %v2343 = vpack.c.b16 %v2208, %v2207
        %v2344 = vpack.c.b16 %v2210, %v2209
        %v2345 = vpack.c.b16 %v2212, %v2211
        %v2346 = vpack.c.b16 %v2214, %v2213
        %v2347 = vpack.c.b16 %v2216, %v2215
        %v2348 = vpack.c.b16 %v2218, %v2217
        %v2349 = vpack.c.b16 %v2220, %v2219
        %v2350 = vpack.c.b16 %v2222, %v2221
        %v2351 = vpack.c.b16 %v2224, %v2223
        %v2352 = vpack.c.b16 %v2226, %v2225
        %v2353 = vpack.c.b16 %v2228, %v2227
        %v2354 = vpack.c.b16 %v2230, %v2229
        %v2355 = vpack.c.b16 %v2232, %v2231
        %v2356 = vpack.c.b16 %v2234, %v2233
        %v2357 = vpack.c.b16 %v2236, %v2235
        %v2358 = vpack.c.b16 %v2238, %v2237
        %v2359 = vpack.c.b16 %v2240, %v2239
        %v2360 = vpack.c.b16 %v2242, %v2241
        %v2361 = vpack.c.b16 %v2244, %v2243
        %v2362 = vpack.c.b16 %v2246, %v2245
        %v2363 = vpack.c.b16 %v2248, %v2247
        %v2364 = vpack.c.b16 %v2250, %v2249
        %v2365 = vpack.c.b16 %v2252, %v2251
        %v2366 = vpack.c.b16 %v2254, %v2253
        %v2367 = vpack.c.b16 %v2256, %v2255
        %v2368 = vpack.c.b16 %v2258, %v2257
        %v2369 = vpack.c.b16 %v2260, %v2259
        %v2370 = vpack.c.b16 %v2262, %v2261
        %v2371 = vpack.c.b16 %v2264, %v2263
        %v2372 = vpack.c.b16 %v2266, %v2265
        %v2373 = vpack.c.b16 %v2268, %v2267
        %v2374 = vpack.c.b16 %v2270, %v2269
        %v2375 = vpack.c.b16 %v2272, %v2271
        %v2376 = vpack.c.b16 %v2274, %v2273
        %v2377 = vpack.c.b16 %v2276, %v2275
        %v2378 = vpack.c.b16 %v2278, %v2277
        %v2379 = vpack.c.b16 %v2280, %v2279
        %v2380 = vpack.c.b16 %v2282, %v2281
        %v2381 = vpack.c.b16 %v2284, %v2283
        %v2382 = vpack.c.b16 %v2286, %v2285
        %v2383 = vpack.c.b16 %v2288, %v2287
        %v2384 = vpack.c.b16 %v2290, %v2289
        %v2385 = vpack.c.b16 %v2292, %v2291
        %v2386 = vpack.c.b16 %v2294, %v2293
        %v2387 = vpack.c.b16 %v2296, %v2295
        %v2388 = vpack.c.b16 %v2298, %v2297
        %v2389 = vpack.c.b16 %v2300, %v2299
        %v2390 = vpack.c.b16 %v2302, %v2301
        %v2391 = vpack.c.b16 %v2304, %v2303
        %v2392 = vpack.c.b16 %v2306, %v2305
        %v2393 = vpack.c.b16 %v2308, %v2307
        %v2394 = vpack.c.b16 %v2310, %v2309
        %v2395 = vpack.c.b16 %v2312, %v2311
        %v2396 = vpack.c.b16 %v2314, %v2313
        %v2397 = vpack.c.b16 %v2316, %v2315
        %v2398 = vpack.c.b16 %v2318, %v2317
        %v2399 = vpack.c.b16 %v2320, %v2319
        %v2400 = vpack.c.b16 %v2322, %v2321
        %v2401 = vpack.c.b16 %v2324, %v2323
        %v2402 = vpack.c.b16 %v2326, %v2325
        %v2403 = vpack.c.b16 %v2328, %v2327
        %v2404 = vpack.c.b16 %v2330, %v2329
        %v2405 = vpack.c.b16 %v2332, %v2331
        %v2406 = vpack.c.b16 %v2334, %v2333
        %2479 = vmatprep.subr.bf16.mxu0 0
        %2480 = vmatpush1.bf16.msra.mxu0 %v2335
        %2481 = vmatprep.subr.bf16.mxu0 0
        %2482 = vmatpush1.bf16.msra.mxu0 %v2336
        %2483 = vmatprep.subr.bf16.mxu0 0
        %2484 = vmatpush1.bf16.msra.mxu0 %v2337
        %2485 = vmatprep.subr.bf16.mxu0 0
        %2486 = vmatpush1.bf16.msra.mxu0 %v2338
        %2487 = vmatprep.subr.bf16.mxu0 0
        %2488 = vmatpush1.bf16.msra.mxu0 %v2339
        %2489 = vmatprep.subr.bf16.mxu0 0
        %2490 = vmatpush1.bf16.msra.mxu0 %v2340
        %2491 = vmatprep.subr.bf16.mxu0 0
        %2492 = vmatpush1.bf16.msra.mxu0 %v2341
        %2493 = vmatprep.subr.bf16.mxu0 0
        %2494 = vmatpush1.bf16.msra.mxu0 %v2342
        %2495 = vmatprep.subr.bf16.mxu0 0
        %2496 = vmatpush1.bf16.msra.mxu0 %v2343
        %2497 = vmatprep.subr.bf16.mxu0 0
        %2498 = vmatpush1.bf16.msra.mxu0 %v2344
        %2499 = vmatprep.subr.bf16.mxu0 0
        %2500 = vmatpush1.bf16.msra.mxu0 %v2345
        %2501 = vmatprep.subr.bf16.mxu0 0
        %2502 = vmatpush1.bf16.msra.mxu0 %v2346
        %2503 = vmatprep.subr.bf16.mxu0 0
        %2504 = vmatpush1.bf16.msra.mxu0 %v2347
        %2505 = vmatprep.subr.bf16.mxu0 0
        %2506 = vmatpush1.bf16.msra.mxu0 %v2348
        %2507 = vmatprep.subr.bf16.mxu0 0
        %2508 = vmatpush1.bf16.msra.mxu0 %v2349
        %2509 = vmatprep.subr.bf16.mxu0 0
        %2510 = vmatpush1.bf16.msra.mxu0 %v2350
        %2511 = vmatprep.mubr.bf16.mxu0 %v1895
        %2512 = vmatmul.mubr.bf16.gmra.mrb[0].mxu0 %v1894
        %v2513 = vpop.f32.mrb[0].mxu0
        %v2514 = vadd.f32 0.0, %v2513
        %v2515 = vpop.f32.mrb[0].mxu0
        %v2516 = vpop.f32.mrb[0].mxu0
        %v2517 = vadd.f32 0.0, %v2516
        %v2518 = vpop.f32.mrb[0].mxu0
        %2519 = vdwg.mxu0
        %2520 = vmatprep.subr.bf16.mxu0 0
        %2521 = vmatpush1.bf16.msra.mxu0 %v2351
        %2522 = vmatprep.subr.bf16.mxu0 0
        %2523 = vmatpush1.bf16.msra.mxu0 %v2352
        %2524 = vmatprep.subr.bf16.mxu0 0
        %2525 = vmatpush1.bf16.msra.mxu0 %v2353
        %2526 = vmatprep.subr.bf16.mxu0 0
        %2527 = vmatpush1.bf16.msra.mxu0 %v2354
        %2528 = vmatprep.subr.bf16.mxu0 0
        %2529 = vmatpush1.bf16.msra.mxu0 %v2355
        %2530 = vmatprep.subr.bf16.mxu0 0
        %2531 = vmatpush1.bf16.msra.mxu0 %v2356
        %2532 = vmatprep.subr.bf16.mxu0 0
        %2533 = vmatpush1.bf16.msra.mxu0 %v2357
        %2534 = vmatprep.subr.bf16.mxu0 0
        %2535 = vmatpush1.bf16.msra.mxu0 %v2358
        %2536 = vmatprep.subr.bf16.mxu0 0
        %2537 = vmatpush1.bf16.msra.mxu0 %v2359
        %2538 = vmatprep.subr.bf16.mxu0 0
        %2539 = vmatpush1.bf16.msra.mxu0 %v2360
        %2540 = vmatprep.subr.bf16.mxu0 0
        %2541 = vmatpush1.bf16.msra.mxu0 %v2361
        %2542 = vmatprep.subr.bf16.mxu0 0
        %2543 = vmatpush1.bf16.msra.mxu0 %v2362
        %2544 = vmatprep.subr.bf16.mxu0 0
        %2545 = vmatpush1.bf16.msra.mxu0 %v2363
        %2546 = vmatprep.subr.bf16.mxu0 0
        %2547 = vmatpush1.bf16.msra.mxu0 %v2364
        %2548 = vmatprep.subr.bf16.mxu0 0
        %2549 = vmatpush1.bf16.msra.mxu0 %v2365
        %2550 = vmatprep.subr.bf16.mxu0 0
        %2551 = vmatpush1.bf16.msra.mxu0 %v2366
        %2552 = vmatprep.mubr.bf16.mxu0 %v1897
        %2553 = vmatmul.mubr.bf16.gmra.mrb[0].mxu0 %v1896
        %v2554 = vpop.f32.mrb[0].mxu0
        %v2555 = vadd.f32 %v2514, %v2554
        %v2556 = vpop.f32.mrb[0].mxu0
        %v2557 = vpop.f32.mrb[0].mxu0
        %v2558 = vadd.f32 %v2517, %v2557
        %v2559 = vpop.f32.mrb[0].mxu0
        %2560 = vdwg.mxu0
        %2561 = vmatprep.subr.bf16.mxu0 0
        %2562 = vmatpush1.bf16.msra.mxu0 %v2367
        %2563 = vmatprep.subr.bf16.mxu0 0
        %2564 = vmatpush1.bf16.msra.mxu0 %v2368
        %2565 = vmatprep.subr.bf16.mxu0 0
        %2566 = vmatpush1.bf16.msra.mxu0 %v2369
        %2567 = vmatprep.subr.bf16.mxu0 0
        %2568 = vmatpush1.bf16.msra.mxu0 %v2370
        %2569 = vmatprep.subr.bf16.mxu0 0
        %2570 = vmatpush1.bf16.msra.mxu0 %v2371
        %2571 = vmatprep.subr.bf16.mxu0 0
        %2572 = vmatpush1.bf16.msra.mxu0 %v2372
        %2573 = vmatprep.subr.bf16.mxu0 0
        %2574 = vmatpush1.bf16.msra.mxu0 %v2373
        %2575 = vmatprep.subr.bf16.mxu0 0
        %2576 = vmatpush1.bf16.msra.mxu0 %v2374
        %2577 = vmatprep.subr.bf16.mxu0 0
        %2578 = vmatpush1.bf16.msra.mxu0 %v2375
        %2579 = vmatprep.subr.bf16.mxu0 0
        %2580 = vmatpush1.bf16.msra.mxu0 %v2376
        %2581 = vmatprep.subr.bf16.mxu0 0
        %2582 = vmatpush1.bf16.msra.mxu0 %v2377
        %2583 = vmatprep.subr.bf16.mxu0 0
        %2584 = vmatpush1.bf16.msra.mxu0 %v2378
        %2585 = vmatprep.subr.bf16.mxu0 0
        %2586 = vmatpush1.bf16.msra.mxu0 %v2379
        %2587 = vmatprep.subr.bf16.mxu0 0
        %2588 = vmatpush1.bf16.msra.mxu0 %v2380
        %2589 = vmatprep.subr.bf16.mxu0 0
        %2590 = vmatpush1.bf16.msra.mxu0 %v2381
        %2591 = vmatprep.subr.bf16.mxu0 0
        %2592 = vmatpush1.bf16.msra.mxu0 %v2382
        %2593 = vmatprep.mubr.bf16.mxu0 %v1899
        %2594 = vmatmul.mubr.bf16.gmra.mrb[0].mxu0 %v1898
        %v2595 = vpop.f32.mrb[0].mxu0
        %v2596 = vadd.f32 %v2555, %v2595
        %v2597 = vpop.f32.mrb[0].mxu0
        %v2598 = vpop.f32.mrb[0].mxu0
        %v2599 = vadd.f32 %v2558, %v2598
        %v2600 = vpop.f32.mrb[0].mxu0
        %2601 = vdwg.mxu0
        %2602 = vmatprep.subr.bf16.mxu0 0
        %2603 = vmatpush1.bf16.msra.mxu0 %v2383
        %2604 = vmatprep.subr.bf16.mxu0 0
        %2605 = vmatpush1.bf16.msra.mxu0 %v2384
        %2606 = vmatprep.subr.bf16.mxu0 0
        %2607 = vmatpush1.bf16.msra.mxu0 %v2385
        %2608 = vmatprep.subr.bf16.mxu0 0
        %2609 = vmatpush1.bf16.msra.mxu0 %v2386
        %2610 = vmatprep.subr.bf16.mxu0 0
        %2611 = vmatpush1.bf16.msra.mxu0 %v2387
        %2612 = vmatprep.subr.bf16.mxu0 0
        %2613 = vmatpush1.bf16.msra.mxu0 %v2388
        %2614 = vmatprep.subr.bf16.mxu0 0
        %2615 = vmatpush1.bf16.msra.mxu0 %v2389
        %2616 = vmatprep.subr.bf16.mxu0 0
        %2617 = vmatpush1.bf16.msra.mxu0 %v2390
        %2618 = vmatprep.subr.bf16.mxu0 0
        %2619 = vmatpush1.bf16.msra.mxu0 %v2391
        %2620 = vmatprep.subr.bf16.mxu0 0
        %2621 = vmatpush1.bf16.msra.mxu0 %v2392
        %2622 = vmatprep.subr.bf16.mxu0 0
        %2623 = vmatpush1.bf16.msra.mxu0 %v2393
        %2624 = vmatprep.subr.bf16.mxu0 0
        %2625 = vmatpush1.bf16.msra.mxu0 %v2394
        %2626 = vmatprep.subr.bf16.mxu0 0
        %2627 = vmatpush1.bf16.msra.mxu0 %v2395
        %2628 = vmatprep.subr.bf16.mxu0 0
        %2629 = vmatpush1.bf16.msra.mxu0 %v2396
        %2630 = vmatprep.subr.bf16.mxu0 0
        %2631 = vmatpush1.bf16.msra.mxu0 %v2397
        %2632 = vmatprep.subr.bf16.mxu0 0
        %2633 = vmatpush1.bf16.msra.mxu0 %v2398
        %2634 = vmatprep.mubr.bf16.mxu0 %v1901
        %2635 = vmatmul.mubr.bf16.gmra.mrb[0].mxu0 %v1900
        %v2636 = vpop.f32.mrb[0].mxu0
        %v2637 = vadd.f32 %v2596, %v2636
        %v2638 = vpop.f32.mrb[0].mxu0
        %v2639 = vpop.f32.mrb[0].mxu0
        %v2640 = vadd.f32 %v2599, %v2639
        %v2641 = vpop.f32.mrb[0].mxu0
        %2642 = vdwg.mxu0
        %2643 = vmatprep.subr.bf16.mxu0 0
        %2644 = vmatpush1.bf16.msra.mxu0 %v2399
        %2645 = vmatprep.subr.bf16.mxu0 0
        %2646 = vmatpush1.bf16.msra.mxu0 %v2400
        %2647 = vmatprep.subr.bf16.mxu0 0
        %2648 = vmatpush1.bf16.msra.mxu0 %v2401
        %2649 = vmatprep.subr.bf16.mxu0 0
        %2650 = vmatpush1.bf16.msra.mxu0 %v2402
        %2651 = vmatprep.subr.bf16.mxu0 0
        %2652 = vmatpush1.bf16.msra.mxu0 %v2403
        %2653 = vmatprep.subr.bf16.mxu0 0
        %2654 = vmatpush1.bf16.msra.mxu0 %v2404
        %2655 = vmatprep.subr.bf16.mxu0 0
        %2656 = vmatpush1.bf16.msra.mxu0 %v2405
        %2657 = vmatprep.subr.bf16.mxu0 0
        %2658 = vmatpush1.bf16.msra.mxu0 %v2406
        %2659 = vmatprep.subr.bf16.mxu0 0
        %2660 = vmatpush1.bf16.msra.mxu0 0
        %2661 = vmatprep.subr.bf16.mxu0 0
        %2662 = vmatpush1.bf16.msra.mxu0 0
        %2663 = vmatprep.subr.bf16.mxu0 0
        %2664 = vmatpush1.bf16.msra.mxu0 0
        %2665 = vmatprep.subr.bf16.mxu0 0
        %2666 = vmatpush1.bf16.msra.mxu0 0
        %2667 = vmatprep.subr.bf16.mxu0 0
        %2668 = vmatpush1.bf16.msra.mxu0 0
        %2669 = vmatprep.subr.bf16.mxu0 0
        %2670 = vmatpush1.bf16.msra.mxu0 0
        %2671 = vmatprep.subr.bf16.mxu0 0
        %2672 = vmatpush1.bf16.msra.mxu0 0
        %2673 = vmatprep.subr.bf16.mxu0 0
        %2674 = vmatpush1.bf16.msra.mxu0 0
        %2675 = vmatprep.mubr.bf16.mxu0 0
        %2676 = vmatmul.mubr.bf16.gmra.mrb[0].mxu0 %v1902
        %v2677 = vpop.f32.mrb[0].mxu0
        %v2678 = vadd.f32 %v2637, %v2677
        %v2679 = vpop.f32.mrb[0].mxu0
        %v2680 = vpop.f32.mrb[0].mxu0
        %v2681 = vadd.f32 %v2640, %v2680
        %v2682 = vpop.f32.mrb[0].mxu0
        %2683 = vdwg.mxu0
        %v2684 = vld [vmem:[%s6] sm:$0x1]
        %v2686 = vlaneseq
        %v2687 = vshrl.u32 %v2686, 7
        %v2688 = vsub.s32 0, %v2687
        %v2689 = vrot.slane %v2684, %v2688
        %v2691 = vmul.f32 %v2678, %v2689
        %v2692 = vmul.f32 %v2681, %v2689
        %v2693 = vld [vmem:[%s7] sm:$0x1]
        %v2695 = vlaneseq
        %v2696 = vshrl.u32 %v2695, 7
        %v2697 = vsub.s32 0, %v2696
        %v2698 = vrot.slane %v2693, %v2697
        %v2700 = vadd.f32 %v2691, %v2698
        %v2701 = vadd.f32 %v2692, %v2698
        %v2702 = vmax.f32 %v2700, 0.0
        %v2703 = vmax.f32 %v2701, 0.0
        %2704 = vst [vmem:[%s727] sm:$0xff] %v2702
        %2705 = vst [vmem:[%s727 + $0x8] sm:$0xff] %v2703
        %v2708 = vrot.slane %v2702, 7
        %v2709 = vrot.slane %v2703, 7
        %v2710 = vsel %vm783, %v2708, %v2709
        %2711 = vrot.lane.b32.xlu0 %v2708, 8
        %v2712 = vpop.permute.xlu0 %2711
        %2713 = vrot.lane.b32.xlu0 %v2710, 8
        %v2714 = vpop.permute.xlu0 %2713
        %2715 = vrot.lane.b32.xlu0 %v2709, 8
        %v2716 = vpop.permute.xlu0 %2715
        %2720 = vst.msk [vmem:[#allocation2] sm:$0xfe] %vm796, %v2712
        %2721 = vst.msk [vmem:[#allocation2 + $0x8] sm:$0xfe] %vm798, %v2712
        %2722 = vst.msk [vmem:[#allocation2 + $0x10] sm:$0xff] %vm800, %v2714
        %2723 = vst.msk [vmem:[#allocation2 + $0x18] sm:$0xff] %vm769, %v2714
        %2724 = vst.msk [vmem:[#allocation2 + $0x20] sm:$0x1] %vm803, %v2716
        %2725 = vst.msk [vmem:[#allocation2 + $0x28] sm:$0x1] %vm805, %v2716
        %v2726 = vld [vmem:[#allocation2] sm:$0xff]
        %v2727 = vld [vmem:[#allocation2 + $0x10] sm:$0xff]
        %v2728 = vld [vmem:[#allocation2 + $0x8] sm:$0xff]
        %v2729 = vld [vmem:[#allocation2 + $0x18] sm:$0xff]
        %v2730 = vld [vmem:[#allocation2] sm:$0xfe]
        %v2731 = vld [vmem:[#allocation2 + $0x20] sm:$0x1]
        %v2732 = vld [vmem:[#allocation2 + $0x8] sm:$0xfe]
        %v2733 = vld [vmem:[#allocation2 + $0x28] sm:$0x1]
        %v2734 = vld [vmem:[#allocation2] sm:$0xfc]
        %v2735 = vld [vmem:[#allocation2 + $0x20] sm:$0x3]
        %v2736 = vld [vmem:[#allocation2 + $0x8] sm:$0xfc]
        %v2737 = vld [vmem:[#allocation2 + $0x28] sm:$0x3]
        %2742 = vrot.lane.b32.xlu0 %v2726, 120
        %v2743 = vpop.permute.xlu0 %2742
        %2744 = vrot.lane.b32.xlu0 %v2728, 120
        %v2745 = vpop.permute.xlu0 %2744
        %2746 = vrot.lane.b32.xlu0 %v2727, 120
        %v2747 = vpop.permute.xlu0 %2746
        %2748 = vrot.lane.b32.xlu0 %v2729, 120
        %v2749 = vpop.permute.xlu0 %2748
        %v2750 = vsel %vm831, %v2743, %v2745
        %v2751 = vsel %vm831, %v2747, %v2749
        %2754 = vrot.lane.b32.xlu0 %v2726, 112
        %v2755 = vpop.permute.xlu0 %2754
        %2756 = vrot.lane.b32.xlu0 %v2728, 112
        %v2757 = vpop.permute.xlu0 %2756
        %2758 = vrot.lane.b32.xlu0 %v2727, 112
        %v2759 = vpop.permute.xlu0 %2758
        %2760 = vrot.lane.b32.xlu0 %v2729, 112
        %v2761 = vpop.permute.xlu0 %2760
        %v2762 = vsel %vm844, %v2755, %v2757
        %v2763 = vsel %vm844, %v2759, %v2761
        %v2768 = vrot.slane %v2730, 1
        %v2769 = vrot.slane %v2727, 1
        %v2770 = vsel %vm851, %v2768, %v2769
        %v2771 = vrot.slane %v2731, 1
        %v2772 = vsel %vm851, %v2769, %v2771
        %v2777 = vrot.slane %v2732, 1
        %v2778 = vrot.slane %v2729, 1
        %v2779 = vsel %vm851, %v2777, %v2778
        %v2780 = vrot.slane %v2733, 1
        %v2781 = vsel %vm851, %v2778, %v2780
        %2782 = vrot.lane.b32.xlu0 %v2770, 120
        %v2783 = vpop.permute.xlu0 %2782
        %2784 = vrot.lane.b32.xlu0 %v2779, 120
        %v2785 = vpop.permute.xlu0 %2784
        %2786 = vrot.lane.b32.xlu0 %v2772, 120
        %v2787 = vpop.permute.xlu0 %2786
        %2788 = vrot.lane.b32.xlu0 %v2781, 120
        %v2789 = vpop.permute.xlu0 %2788
        %v2790 = vsel %vm831, %v2783, %v2785
        %v2791 = vsel %vm831, %v2787, %v2789
        %2794 = vrot.lane.b32.xlu0 %v2770, 112
        %v2795 = vpop.permute.xlu0 %2794
        %2796 = vrot.lane.b32.xlu0 %v2779, 112
        %v2797 = vpop.permute.xlu0 %2796
        %2798 = vrot.lane.b32.xlu0 %v2772, 112
        %v2799 = vpop.permute.xlu0 %2798
        %2800 = vrot.lane.b32.xlu0 %v2781, 112
        %v2801 = vpop.permute.xlu0 %2800
        %v2802 = vsel %vm844, %v2795, %v2797
        %v2803 = vsel %vm844, %v2799, %v2801
        %v2808 = vrot.slane %v2734, 2
        %v2809 = vrot.slane %v2727, 2
        %v2810 = vsel %vm892, %v2808, %v2809
        %v2811 = vrot.slane %v2735, 2
        %v2812 = vsel %vm892, %v2809, %v2811
        %v2817 = vrot.slane %v2736, 2
        %v2818 = vrot.slane %v2729, 2
        %v2819 = vsel %vm892, %v2817, %v2818
        %v2820 = vrot.slane %v2737, 2
        %v2821 = vsel %vm892, %v2818, %v2820
        %2822 = vrot.lane.b32.xlu0 %v2810, 120
        %v2823 = vpop.permute.xlu0 %2822
        %2824 = vrot.lane.b32.xlu0 %v2819, 120
        %v2825 = vpop.permute.xlu0 %2824
        %2826 = vrot.lane.b32.xlu0 %v2812, 120
        %v2827 = vpop.permute.xlu0 %2826
        %2828 = vrot.lane.b32.xlu0 %v2821, 120
        %v2829 = vpop.permute.xlu0 %2828
        %v2830 = vsel %vm831, %v2823, %v2825
        %v2831 = vsel %vm831, %v2827, %v2829
        %2834 = vrot.lane.b32.xlu0 %v2810, 112
        %v2835 = vpop.permute.xlu0 %2834
        %2836 = vrot.lane.b32.xlu0 %v2819, 112
        %v2837 = vpop.permute.xlu0 %2836
        %2838 = vrot.lane.b32.xlu0 %v2812, 112
        %v2839 = vpop.permute.xlu0 %2838
        %2840 = vrot.lane.b32.xlu0 %v2821, 112
        %v2841 = vpop.permute.xlu0 %2840
        %v2842 = vsel %vm844, %v2835, %v2837
        %v2843 = vsel %vm844, %v2839, %v2841
        %v2846 = vpack.c.bf16 %v2727, %v2726
        %v2847 = vpack.c.bf16 %v2751, %v2750
        %v2848 = vpack.c.bf16 %v2763, %v2762
        %v2849 = vpack.c.bf16 %v2772, %v2770
        %v2850 = vpack.c.bf16 %v2791, %v2790
        %v2851 = vpack.c.bf16 %v2803, %v2802
        %v2852 = vpack.c.bf16 %v2812, %v2810
        %v2853 = vpack.c.bf16 %v2831, %v2830
        %v2854 = vpack.c.bf16 %v2843, %v2842
        %v2855 = vld [vmem:[#allocation8] sm:$0xf]
        %v2856 = vld [vmem:[#allocation8 + $0x4] sm:$0xf]
        %v2857 = vld [vmem:[#allocation8 + $0x8] sm:$0xf]
        %v2858 = vld [vmem:[#allocation8 + $0xc] sm:$0xf]
        %v2859 = vld [vmem:[#allocation8 + $0x10] sm:$0xf]
        %v2860 = vld [vmem:[#allocation8 + $0x14] sm:$0xf]
        %v2861 = vld [vmem:[#allocation8 + $0x18] sm:$0xf]
        %v2862 = vld [vmem:[#allocation8 + $0x1c] sm:$0xf]
        %v2863 = vld [vmem:[#allocation8 + $0x20] sm:$0xf]
        %v2864 = vld [vmem:[#allocation8 + $0x24] sm:$0xf]
        %v2865 = vld [vmem:[#allocation8 + $0x28] sm:$0xf]
        %v2866 = vld [vmem:[#allocation8 + $0x2c] sm:$0xf]
        %v2867 = vld [vmem:[#allocation8 + $0x30] sm:$0xf]
        %v2868 = vld [vmem:[#allocation8 + $0x34] sm:$0xf]
        %v2869 = vld [vmem:[#allocation8 + $0x38] sm:$0xf]
        %v2870 = vld [vmem:[#allocation8 + $0x3c] sm:$0xf]
        %v2871 = vld [vmem:[#allocation8 + $0x40] sm:$0xf]
        %v2872 = vld [vmem:[#allocation8 + $0x44] sm:$0xf]
        %v2873 = vld [vmem:[#allocation8 + $0x48] sm:$0xf]
        %v2874 = vld [vmem:[#allocation8 + $0x4c] sm:$0xf]
        %v2875 = vld [vmem:[#allocation8 + $0x50] sm:$0xf]
        %v2876 = vld [vmem:[#allocation8 + $0x54] sm:$0xf]
        %v2877 = vld [vmem:[#allocation8 + $0x58] sm:$0xf]
        %v2878 = vld [vmem:[#allocation8 + $0x5c] sm:$0xf]
        %v2879 = vld [vmem:[#allocation8 + $0x60] sm:$0xf]
        %v2880 = vld [vmem:[#allocation8 + $0x64] sm:$0xf]
        %v2881 = vld [vmem:[#allocation8 + $0x68] sm:$0xf]
        %v2882 = vld [vmem:[#allocation8 + $0x6c] sm:$0xf]
        %v2883 = vld [vmem:[#allocation8 + $0x70] sm:$0xf]
        %v2884 = vld [vmem:[#allocation8 + $0x74] sm:$0xf]
        %v2885 = vld [vmem:[#allocation8 + $0x78] sm:$0xf]
        %v2886 = vld [vmem:[#allocation8 + $0x7c] sm:$0xf]
        %v2887 = vld [vmem:[#allocation8 + $0x80] sm:$0xf]
        %v2888 = vld [vmem:[#allocation8 + $0x84] sm:$0xf]
        %v2889 = vld [vmem:[#allocation8 + $0x88] sm:$0xf]
        %v2890 = vld [vmem:[#allocation8 + $0x8c] sm:$0xf]
        %v2891 = vld [vmem:[#allocation8 + $0x90] sm:$0xf]
        %v2892 = vld [vmem:[#allocation8 + $0x94] sm:$0xf]
        %v2893 = vld [vmem:[#allocation8 + $0x98] sm:$0xf]
        %v2894 = vld [vmem:[#allocation8 + $0x9c] sm:$0xf]
        %v2895 = vld [vmem:[#allocation8 + $0xa0] sm:$0xf]
        %v2896 = vld [vmem:[#allocation8 + $0xa4] sm:$0xf]
        %v2897 = vld [vmem:[#allocation8 + $0xa8] sm:$0xf]
        %v2898 = vld [vmem:[#allocation8 + $0xac] sm:$0xf]
        %v2899 = vld [vmem:[#allocation8 + $0xb0] sm:$0xf]
        %v2900 = vld [vmem:[#allocation8 + $0xb4] sm:$0xf]
        %v2901 = vld [vmem:[#allocation8 + $0xb8] sm:$0xf]
        %v2902 = vld [vmem:[#allocation8 + $0xbc] sm:$0xf]
        %v2903 = vld [vmem:[#allocation8 + $0xc0] sm:$0xf]
        %v2904 = vld [vmem:[#allocation8 + $0xc4] sm:$0xf]
        %v2905 = vld [vmem:[#allocation8 + $0xc8] sm:$0xf]
        %v2906 = vld [vmem:[#allocation8 + $0xcc] sm:$0xf]
        %v2907 = vld [vmem:[#allocation8 + $0xd0] sm:$0xf]
        %v2908 = vld [vmem:[#allocation8 + $0xd4] sm:$0xf]
        %v2909 = vld [vmem:[#allocation8 + $0xd8] sm:$0xf]
        %v2910 = vld [vmem:[#allocation8 + $0xdc] sm:$0xf]
        %v2911 = vld [vmem:[#allocation8 + $0xe0] sm:$0xf]
        %v2912 = vld [vmem:[#allocation8 + $0xe4] sm:$0xf]
        %v2913 = vld [vmem:[#allocation8 + $0xe8] sm:$0xf]
        %v2914 = vld [vmem:[#allocation8 + $0xec] sm:$0xf]
        %v2915 = vld [vmem:[#allocation8 + $0xf0] sm:$0xf]
        %v2916 = vld [vmem:[#allocation8 + $0xf4] sm:$0xf]
        %v2917 = vld [vmem:[#allocation8 + $0xf8] sm:$0xf]
        %v2918 = vld [vmem:[#allocation8 + $0xfc] sm:$0xf]
        %v2919 = vld [vmem:[#allocation8 + $0x100] sm:$0xf]
        %v2920 = vld [vmem:[#allocation8 + $0x104] sm:$0xf]
        %v2921 = vld [vmem:[#allocation8 + $0x108] sm:$0xf]
        %v2922 = vld [vmem:[#allocation8 + $0x10c] sm:$0xf]
        %v2923 = vld [vmem:[#allocation8 + $0x110] sm:$0xf]
        %v2924 = vld [vmem:[#allocation8 + $0x114] sm:$0xf]
        %v2925 = vld [vmem:[#allocation8 + $0x118] sm:$0xf]
        %v2926 = vld [vmem:[#allocation8 + $0x11c] sm:$0xf]
        %v2927 = vld [vmem:[#allocation8 + $0x120] sm:$0xf]
        %v2928 = vld [vmem:[#allocation8 + $0x124] sm:$0xf]
        %v2929 = vld [vmem:[#allocation8 + $0x128] sm:$0xf]
        %v2930 = vld [vmem:[#allocation8 + $0x12c] sm:$0xf]
        %v2931 = vld [vmem:[#allocation8 + $0x130] sm:$0xf]
        %v2932 = vld [vmem:[#allocation8 + $0x134] sm:$0xf]
        %v2933 = vld [vmem:[#allocation8 + $0x138] sm:$0xf]
        %v2934 = vld [vmem:[#allocation8 + $0x13c] sm:$0xf]
        %v2935 = vld [vmem:[#allocation8 + $0x140] sm:$0xf]
        %v2936 = vld [vmem:[#allocation8 + $0x144] sm:$0xf]
        %v2937 = vld [vmem:[#allocation8 + $0x148] sm:$0xf]
        %v2938 = vld [vmem:[#allocation8 + $0x14c] sm:$0xf]
        %v2939 = vld [vmem:[#allocation8 + $0x150] sm:$0xf]
        %v2940 = vld [vmem:[#allocation8 + $0x154] sm:$0xf]
        %v2941 = vld [vmem:[#allocation8 + $0x158] sm:$0xf]
        %v2942 = vld [vmem:[#allocation8 + $0x15c] sm:$0xf]
        %v2943 = vld [vmem:[#allocation8 + $0x160] sm:$0xf]
        %v2944 = vld [vmem:[#allocation8 + $0x164] sm:$0xf]
        %v2945 = vld [vmem:[#allocation8 + $0x168] sm:$0xf]
        %v2946 = vld [vmem:[#allocation8 + $0x16c] sm:$0xf]
        %v2947 = vld [vmem:[#allocation8 + $0x170] sm:$0xf]
        %v2948 = vld [vmem:[#allocation8 + $0x174] sm:$0xf]
        %v2949 = vld [vmem:[#allocation8 + $0x178] sm:$0xf]
        %v2950 = vld [vmem:[#allocation8 + $0x17c] sm:$0xf]
        %v2951 = vld [vmem:[#allocation8 + $0x180] sm:$0xf]
        %v2952 = vld [vmem:[#allocation8 + $0x184] sm:$0xf]
        %v2953 = vld [vmem:[#allocation8 + $0x188] sm:$0xf]
        %v2954 = vld [vmem:[#allocation8 + $0x18c] sm:$0xf]
        %v2955 = vld [vmem:[#allocation8 + $0x190] sm:$0xf]
        %v2956 = vld [vmem:[#allocation8 + $0x194] sm:$0xf]
        %v2957 = vld [vmem:[#allocation8 + $0x198] sm:$0xf]
        %v2958 = vld [vmem:[#allocation8 + $0x19c] sm:$0xf]
        %v2959 = vld [vmem:[#allocation8 + $0x1a0] sm:$0xf]
        %v2960 = vld [vmem:[#allocation8 + $0x1a4] sm:$0xf]
        %v2961 = vld [vmem:[#allocation8 + $0x1a8] sm:$0xf]
        %v2962 = vld [vmem:[#allocation8 + $0x1ac] sm:$0xf]
        %v2963 = vld [vmem:[#allocation8 + $0x1b0] sm:$0xf]
        %v2964 = vld [vmem:[#allocation8 + $0x1b4] sm:$0xf]
        %v2965 = vld [vmem:[#allocation8 + $0x1b8] sm:$0xf]
        %v2966 = vld [vmem:[#allocation8 + $0x1bc] sm:$0xf]
        %v2967 = vld [vmem:[#allocation8 + $0x1c0] sm:$0xf]
        %v2968 = vld [vmem:[#allocation8 + $0x1c4] sm:$0xf]
        %v2969 = vld [vmem:[#allocation8 + $0x1c8] sm:$0xf]
        %v2970 = vld [vmem:[#allocation8 + $0x1cc] sm:$0xf]
        %v2971 = vld [vmem:[#allocation8 + $0x1d0] sm:$0xf]
        %v2972 = vld [vmem:[#allocation8 + $0x1d4] sm:$0xf]
        %v2973 = vld [vmem:[#allocation8 + $0x1d8] sm:$0xf]
        %v2974 = vld [vmem:[#allocation8 + $0x1dc] sm:$0xf]
        %v2975 = vld [vmem:[#allocation8 + $0x1e0] sm:$0xf]
        %v2976 = vld [vmem:[#allocation8 + $0x1e4] sm:$0xf]
        %v2977 = vld [vmem:[#allocation8 + $0x1e8] sm:$0xf]
        %v2978 = vld [vmem:[#allocation8 + $0x1ec] sm:$0xf]
        %v2979 = vld [vmem:[#allocation8 + $0x1f0] sm:$0xf]
        %v2980 = vld [vmem:[#allocation8 + $0x1f4] sm:$0xf]
        %v2981 = vld [vmem:[#allocation8 + $0x1f8] sm:$0xf]
        %v2982 = vld [vmem:[#allocation8 + $0x1fc] sm:$0xf]
        %v2983 = vld [vmem:[#allocation8 + $0x200] sm:$0xf]
        %v2984 = vld [vmem:[#allocation8 + $0x204] sm:$0xf]
        %v2985 = vld [vmem:[#allocation8 + $0x208] sm:$0xf]
        %v2986 = vld [vmem:[#allocation8 + $0x20c] sm:$0xf]
        %v2987 = vld [vmem:[#allocation8 + $0x210] sm:$0xf]
        %v2988 = vld [vmem:[#allocation8 + $0x214] sm:$0xf]
        %v2989 = vld [vmem:[#allocation8 + $0x218] sm:$0xf]
        %v2990 = vld [vmem:[#allocation8 + $0x21c] sm:$0xf]
        %v2991 = vld [vmem:[#allocation8 + $0x220] sm:$0xf]
        %v2992 = vld [vmem:[#allocation8 + $0x224] sm:$0xf]
        %v2993 = vld [vmem:[#allocation8 + $0x228] sm:$0xf]
        %v2994 = vld [vmem:[#allocation8 + $0x22c] sm:$0xf]
        %v2995 = vld [vmem:[#allocation8 + $0x230] sm:$0xf]
        %v2996 = vld [vmem:[#allocation8 + $0x234] sm:$0xf]
        %v2997 = vld [vmem:[#allocation8 + $0x238] sm:$0xf]
        %v2998 = vld [vmem:[#allocation8 + $0x23c] sm:$0xf]
        %v3143 = vunpack.c.l.b16 %v2855
        %v3144 = vunpack.c.l.b16 %v2856
        %v3145 = vunpack.c.l.b16 %v2857
        %v3146 = vunpack.c.l.b16 %v2858
        %v3147 = vunpack.c.l.b16 %v2859
        %v3148 = vunpack.c.l.b16 %v2860
        %v3149 = vunpack.c.l.b16 %v2861
        %v3150 = vunpack.c.l.b16 %v2862
        %v3151 = vunpack.c.l.b16 %v2863
        %v3152 = vunpack.c.l.b16 %v2864
        %v3153 = vunpack.c.l.b16 %v2865
        %v3154 = vunpack.c.l.b16 %v2866
        %v3155 = vunpack.c.l.b16 %v2867
        %v3156 = vunpack.c.l.b16 %v2868
        %v3157 = vunpack.c.l.b16 %v2869
        %v3158 = vunpack.c.l.b16 %v2870
        %v3159 = vunpack.c.l.b16 %v2871
        %v3160 = vunpack.c.l.b16 %v2872
        %v3161 = vunpack.c.l.b16 %v2873
        %v3162 = vunpack.c.l.b16 %v2874
        %v3163 = vunpack.c.l.b16 %v2875
        %v3164 = vunpack.c.l.b16 %v2876
        %v3165 = vunpack.c.l.b16 %v2877
        %v3166 = vunpack.c.l.b16 %v2878
        %v3167 = vunpack.c.l.b16 %v2879
        %v3168 = vunpack.c.l.b16 %v2880
        %v3169 = vunpack.c.l.b16 %v2881
        %v3170 = vunpack.c.l.b16 %v2882
        %v3171 = vunpack.c.l.b16 %v2883
        %v3172 = vunpack.c.l.b16 %v2884
        %v3173 = vunpack.c.l.b16 %v2885
        %v3174 = vunpack.c.l.b16 %v2886
        %v3175 = vunpack.c.l.b16 %v2887
        %v3176 = vunpack.c.l.b16 %v2888
        %v3177 = vunpack.c.l.b16 %v2889
        %v3178 = vunpack.c.l.b16 %v2890
        %v3179 = vunpack.c.l.b16 %v2891
        %v3180 = vunpack.c.l.b16 %v2892
        %v3181 = vunpack.c.l.b16 %v2893
        %v3182 = vunpack.c.l.b16 %v2894
        %v3183 = vunpack.c.l.b16 %v2895
        %v3184 = vunpack.c.l.b16 %v2896
        %v3185 = vunpack.c.l.b16 %v2897
        %v3186 = vunpack.c.l.b16 %v2898
        %v3187 = vunpack.c.l.b16 %v2899
        %v3188 = vunpack.c.l.b16 %v2900
        %v3189 = vunpack.c.l.b16 %v2901
        %v3190 = vunpack.c.l.b16 %v2902
        %v3191 = vunpack.c.l.b16 %v2903
        %v3192 = vunpack.c.l.b16 %v2904
        %v3193 = vunpack.c.l.b16 %v2905
        %v3194 = vunpack.c.l.b16 %v2906
        %v3195 = vunpack.c.l.b16 %v2907
        %v3196 = vunpack.c.l.b16 %v2908
        %v3197 = vunpack.c.l.b16 %v2909
        %v3198 = vunpack.c.l.b16 %v2910
        %v3199 = vunpack.c.l.b16 %v2911
        %v3200 = vunpack.c.l.b16 %v2912
        %v3201 = vunpack.c.l.b16 %v2913
        %v3202 = vunpack.c.l.b16 %v2914
        %v3203 = vunpack.c.l.b16 %v2915
        %v3204 = vunpack.c.l.b16 %v2916
        %v3205 = vunpack.c.l.b16 %v2917
        %v3206 = vunpack.c.l.b16 %v2918
        %v3207 = vunpack.c.l.b16 %v2919
        %v3208 = vunpack.c.l.b16 %v2920
        %v3209 = vunpack.c.l.b16 %v2921
        %v3210 = vunpack.c.l.b16 %v2922
        %v3211 = vunpack.c.l.b16 %v2923
        %v3212 = vunpack.c.l.b16 %v2924
        %v3213 = vunpack.c.l.b16 %v2925
        %v3214 = vunpack.c.l.b16 %v2926
        %v3215 = vunpack.c.l.b16 %v2927
        %v3216 = vunpack.c.l.b16 %v2928
        %v3217 = vunpack.c.l.b16 %v2929
        %v3218 = vunpack.c.l.b16 %v2930
        %v3219 = vunpack.c.l.b16 %v2931
        %v3220 = vunpack.c.l.b16 %v2932
        %v3221 = vunpack.c.l.b16 %v2933
        %v3222 = vunpack.c.l.b16 %v2934
        %v3223 = vunpack.c.l.b16 %v2935
        %v3224 = vunpack.c.l.b16 %v2936
        %v3225 = vunpack.c.l.b16 %v2937
        %v3226 = vunpack.c.l.b16 %v2938
        %v3227 = vunpack.c.l.b16 %v2939
        %v3228 = vunpack.c.l.b16 %v2940
        %v3229 = vunpack.c.l.b16 %v2941
        %v3230 = vunpack.c.l.b16 %v2942
        %v3231 = vunpack.c.l.b16 %v2943
        %v3232 = vunpack.c.l.b16 %v2944
        %v3233 = vunpack.c.l.b16 %v2945
        %v3234 = vunpack.c.l.b16 %v2946
        %v3235 = vunpack.c.l.b16 %v2947
        %v3236 = vunpack.c.l.b16 %v2948
        %v3237 = vunpack.c.l.b16 %v2949
        %v3238 = vunpack.c.l.b16 %v2950
        %v3239 = vunpack.c.l.b16 %v2951
        %v3240 = vunpack.c.l.b16 %v2952
        %v3241 = vunpack.c.l.b16 %v2953
        %v3242 = vunpack.c.l.b16 %v2954
        %v3243 = vunpack.c.l.b16 %v2955
        %v3244 = vunpack.c.l.b16 %v2956
        %v3245 = vunpack.c.l.b16 %v2957
        %v3246 = vunpack.c.l.b16 %v2958
        %v3247 = vunpack.c.l.b16 %v2959
        %v3248 = vunpack.c.l.b16 %v2960
        %v3249 = vunpack.c.l.b16 %v2961
        %v3250 = vunpack.c.l.b16 %v2962
        %v3251 = vunpack.c.l.b16 %v2963
        %v3252 = vunpack.c.l.b16 %v2964
        %v3253 = vunpack.c.l.b16 %v2965
        %v3254 = vunpack.c.l.b16 %v2966
        %v3255 = vunpack.c.l.b16 %v2967
        %v3256 = vunpack.c.l.b16 %v2968
        %v3257 = vunpack.c.l.b16 %v2969
        %v3258 = vunpack.c.l.b16 %v2970
        %v3259 = vunpack.c.l.b16 %v2971
        %v3260 = vunpack.c.l.b16 %v2972
        %v3261 = vunpack.c.l.b16 %v2973
        %v3262 = vunpack.c.l.b16 %v2974
        %v3263 = vunpack.c.l.b16 %v2975
        %v3264 = vunpack.c.l.b16 %v2976
        %v3265 = vunpack.c.l.b16 %v2977
        %v3266 = vunpack.c.l.b16 %v2978
        %v3267 = vunpack.c.l.b16 %v2979
        %v3268 = vunpack.c.l.b16 %v2980
        %v3269 = vunpack.c.l.b16 %v2981
        %v3270 = vunpack.c.l.b16 %v2982
        %v3271 = vunpack.c.l.b16 %v2983
        %v3272 = vunpack.c.l.b16 %v2984
        %v3273 = vunpack.c.l.b16 %v2985
        %v3274 = vunpack.c.l.b16 %v2986
        %v3275 = vunpack.c.l.b16 %v2987
        %v3276 = vunpack.c.l.b16 %v2988
        %v3277 = vunpack.c.l.b16 %v2989
        %v3278 = vunpack.c.l.b16 %v2990
        %v3279 = vunpack.c.l.b16 %v2991
        %v3280 = vunpack.c.l.b16 %v2992
        %v3281 = vunpack.c.l.b16 %v2993
        %v3282 = vunpack.c.l.b16 %v2994
        %v3283 = vunpack.c.l.b16 %v2995
        %v3284 = vunpack.c.l.b16 %v2996
        %v3285 = vunpack.c.l.b16 %v2997
        %v3286 = vunpack.c.l.b16 %v2998
        %v3287 = vpack.c.b16 %v3144, %v3143
        %v3288 = vpack.c.b16 %v3146, %v3145
        %v3289 = vpack.c.b16 %v3148, %v3147
        %v3290 = vpack.c.b16 %v3150, %v3149
        %v3291 = vpack.c.b16 %v3152, %v3151
        %v3292 = vpack.c.b16 %v3154, %v3153
        %v3293 = vpack.c.b16 %v3156, %v3155
        %v3294 = vpack.c.b16 %v3158, %v3157
        %v3295 = vpack.c.b16 %v3160, %v3159
        %v3296 = vpack.c.b16 %v3162, %v3161
        %v3297 = vpack.c.b16 %v3164, %v3163
        %v3298 = vpack.c.b16 %v3166, %v3165
        %v3299 = vpack.c.b16 %v3168, %v3167
        %v3300 = vpack.c.b16 %v3170, %v3169
        %v3301 = vpack.c.b16 %v3172, %v3171
        %v3302 = vpack.c.b16 %v3174, %v3173
        %v3303 = vpack.c.b16 %v3176, %v3175
        %v3304 = vpack.c.b16 %v3178, %v3177
        %v3305 = vpack.c.b16 %v3180, %v3179
        %v3306 = vpack.c.b16 %v3182, %v3181
        %v3307 = vpack.c.b16 %v3184, %v3183
        %v3308 = vpack.c.b16 %v3186, %v3185
        %v3309 = vpack.c.b16 %v3188, %v3187
        %v3310 = vpack.c.b16 %v3190, %v3189
        %v3311 = vpack.c.b16 %v3192, %v3191
        %v3312 = vpack.c.b16 %v3194, %v3193
        %v3313 = vpack.c.b16 %v3196, %v3195
        %v3314 = vpack.c.b16 %v3198, %v3197
        %v3315 = vpack.c.b16 %v3200, %v3199
        %v3316 = vpack.c.b16 %v3202, %v3201
        %v3317 = vpack.c.b16 %v3204, %v3203
        %v3318 = vpack.c.b16 %v3206, %v3205
        %v3319 = vpack.c.b16 %v3208, %v3207
        %v3320 = vpack.c.b16 %v3210, %v3209
        %v3321 = vpack.c.b16 %v3212, %v3211
        %v3322 = vpack.c.b16 %v3214, %v3213
        %v3323 = vpack.c.b16 %v3216, %v3215
        %v3324 = vpack.c.b16 %v3218, %v3217
        %v3325 = vpack.c.b16 %v3220, %v3219
        %v3326 = vpack.c.b16 %v3222, %v3221
        %v3327 = vpack.c.b16 %v3224, %v3223
        %v3328 = vpack.c.b16 %v3226, %v3225
        %v3329 = vpack.c.b16 %v3228, %v3227
        %v3330 = vpack.c.b16 %v3230, %v3229
        %v3331 = vpack.c.b16 %v3232, %v3231
        %v3332 = vpack.c.b16 %v3234, %v3233
        %v3333 = vpack.c.b16 %v3236, %v3235
        %v3334 = vpack.c.b16 %v3238, %v3237
        %v3335 = vpack.c.b16 %v3240, %v3239
        %v3336 = vpack.c.b16 %v3242, %v3241
        %v3337 = vpack.c.b16 %v3244, %v3243
        %v3338 = vpack.c.b16 %v3246, %v3245
        %v3339 = vpack.c.b16 %v3248, %v3247
        %v3340 = vpack.c.b16 %v3250, %v3249
        %v3341 = vpack.c.b16 %v3252, %v3251
        %v3342 = vpack.c.b16 %v3254, %v3253
        %v3343 = vpack.c.b16 %v3256, %v3255
        %v3344 = vpack.c.b16 %v3258, %v3257
        %v3345 = vpack.c.b16 %v3260, %v3259
        %v3346 = vpack.c.b16 %v3262, %v3261
        %v3347 = vpack.c.b16 %v3264, %v3263
        %v3348 = vpack.c.b16 %v3266, %v3265
        %v3349 = vpack.c.b16 %v3268, %v3267
        %v3350 = vpack.c.b16 %v3270, %v3269
        %v3351 = vpack.c.b16 %v3272, %v3271
        %v3352 = vpack.c.b16 %v3274, %v3273
        %v3353 = vpack.c.b16 %v3276, %v3275
        %v3354 = vpack.c.b16 %v3278, %v3277
        %v3355 = vpack.c.b16 %v3280, %v3279
        %v3356 = vpack.c.b16 %v3282, %v3281
        %v3357 = vpack.c.b16 %v3284, %v3283
        %v3358 = vpack.c.b16 %v3286, %v3285
        %3431 = vmatprep.subr.bf16.mxu0 0
        %3432 = vmatpush1.bf16.msra.mxu0 %v3287
        %3433 = vmatprep.subr.bf16.mxu0 0
        %3434 = vmatpush1.bf16.msra.mxu0 %v3288
        %3435 = vmatprep.subr.bf16.mxu0 0
        %3436 = vmatpush1.bf16.msra.mxu0 %v3289
        %3437 = vmatprep.subr.bf16.mxu0 0
        %3438 = vmatpush1.bf16.msra.mxu0 %v3290
        %3439 = vmatprep.subr.bf16.mxu0 0
        %3440 = vmatpush1.bf16.msra.mxu0 %v3291
        %3441 = vmatprep.subr.bf16.mxu0 0
        %3442 = vmatpush1.bf16.msra.mxu0 %v3292
        %3443 = vmatprep.subr.bf16.mxu0 0
        %3444 = vmatpush1.bf16.msra.mxu0 %v3293
        %3445 = vmatprep.subr.bf16.mxu0 0
        %3446 = vmatpush1.bf16.msra.mxu0 %v3294
        %3447 = vmatprep.subr.bf16.mxu0 0
        %3448 = vmatpush1.bf16.msra.mxu0 %v3295
        %3449 = vmatprep.subr.bf16.mxu0 0
        %3450 = vmatpush1.bf16.msra.mxu0 %v3296
        %3451 = vmatprep.subr.bf16.mxu0 0
        %3452 = vmatpush1.bf16.msra.mxu0 %v3297
        %3453 = vmatprep.subr.bf16.mxu0 0
        %3454 = vmatpush1.bf16.msra.mxu0 %v3298
        %3455 = vmatprep.subr.bf16.mxu0 0
        %3456 = vmatpush1.bf16.msra.mxu0 %v3299
        %3457 = vmatprep.subr.bf16.mxu0 0
        %3458 = vmatpush1.bf16.msra.mxu0 %v3300
        %3459 = vmatprep.subr.bf16.mxu0 0
        %3460 = vmatpush1.bf16.msra.mxu0 %v3301
        %3461 = vmatprep.subr.bf16.mxu0 0
        %3462 = vmatpush1.bf16.msra.mxu0 %v3302
        %3463 = vmatprep.mubr.bf16.mxu0 %v2847
        %3464 = vmatmul.mubr.bf16.gmra.mrb[0].mxu0 %v2846
        %v3465 = vpop.f32.mrb[0].mxu0
        %v3466 = vadd.f32 0.0, %v3465
        %v3467 = vpop.f32.mrb[0].mxu0
        %v3468 = vpop.f32.mrb[0].mxu0
        %v3469 = vadd.f32 0.0, %v3468
        %v3470 = vpop.f32.mrb[0].mxu0
        %3471 = vdwg.mxu0
        %3472 = vmatprep.subr.bf16.mxu0 0
        %3473 = vmatpush1.bf16.msra.mxu0 %v3303
        %3474 = vmatprep.subr.bf16.mxu0 0
        %3475 = vmatpush1.bf16.msra.mxu0 %v3304
        %3476 = vmatprep.subr.bf16.mxu0 0
        %3477 = vmatpush1.bf16.msra.mxu0 %v3305
        %3478 = vmatprep.subr.bf16.mxu0 0
        %3479 = vmatpush1.bf16.msra.mxu0 %v3306
        %3480 = vmatprep.subr.bf16.mxu0 0
        %3481 = vmatpush1.bf16.msra.mxu0 %v3307
        %3482 = vmatprep.subr.bf16.mxu0 0
        %3483 = vmatpush1.bf16.msra.mxu0 %v3308
        %3484 = vmatprep.subr.bf16.mxu0 0
        %3485 = vmatpush1.bf16.msra.mxu0 %v3309
        %3486 = vmatprep.subr.bf16.mxu0 0
        %3487 = vmatpush1.bf16.msra.mxu0 %v3310
        %3488 = vmatprep.subr.bf16.mxu0 0
        %3489 = vmatpush1.bf16.msra.mxu0 %v3311
        %3490 = vmatprep.subr.bf16.mxu0 0
        %3491 = vmatpush1.bf16.msra.mxu0 %v3312
        %3492 = vmatprep.subr.bf16.mxu0 0
        %3493 = vmatpush1.bf16.msra.mxu0 %v3313
        %3494 = vmatprep.subr.bf16.mxu0 0
        %3495 = vmatpush1.bf16.msra.mxu0 %v3314
        %3496 = vmatprep.subr.bf16.mxu0 0
        %3497 = vmatpush1.bf16.msra.mxu0 %v3315
        %3498 = vmatprep.subr.bf16.mxu0 0
        %3499 = vmatpush1.bf16.msra.mxu0 %v3316
        %3500 = vmatprep.subr.bf16.mxu0 0
        %3501 = vmatpush1.bf16.msra.mxu0 %v3317
        %3502 = vmatprep.subr.bf16.mxu0 0
        %3503 = vmatpush1.bf16.msra.mxu0 %v3318
        %3504 = vmatprep.mubr.bf16.mxu0 %v2849
        %3505 = vmatmul.mubr.bf16.gmra.mrb[0].mxu0 %v2848
        %v3506 = vpop.f32.mrb[0].mxu0
        %v3507 = vadd.f32 %v3466, %v3506
        %v3508 = vpop.f32.mrb[0].mxu0
        %v3509 = vpop.f32.mrb[0].mxu0
        %v3510 = vadd.f32 %v3469, %v3509
        %v3511 = vpop.f32.mrb[0].mxu0
        %3512 = vdwg.mxu0
        %3513 = vmatprep.subr.bf16.mxu0 0
        %3514 = vmatpush1.bf16.msra.mxu0 %v3319
        %3515 = vmatprep.subr.bf16.mxu0 0
        %3516 = vmatpush1.bf16.msra.mxu0 %v3320
        %3517 = vmatprep.subr.bf16.mxu0 0
        %3518 = vmatpush1.bf16.msra.mxu0 %v3321
        %3519 = vmatprep.subr.bf16.mxu0 0
        %3520 = vmatpush1.bf16.msra.mxu0 %v3322
        %3521 = vmatprep.subr.bf16.mxu0 0
        %3522 = vmatpush1.bf16.msra.mxu0 %v3323
        %3523 = vmatprep.subr.bf16.mxu0 0
        %3524 = vmatpush1.bf16.msra.mxu0 %v3324
        %3525 = vmatprep.subr.bf16.mxu0 0
        %3526 = vmatpush1.bf16.msra.mxu0 %v3325
        %3527 = vmatprep.subr.bf16.mxu0 0
        %3528 = vmatpush1.bf16.msra.mxu0 %v3326
        %3529 = vmatprep.subr.bf16.mxu0 0
        %3530 = vmatpush1.bf16.msra.mxu0 %v3327
        %3531 = vmatprep.subr.bf16.mxu0 0
        %3532 = vmatpush1.bf16.msra.mxu0 %v3328
        %3533 = vmatprep.subr.bf16.mxu0 0
        %3534 = vmatpush1.bf16.msra.mxu0 %v3329
        %3535 = vmatprep.subr.bf16.mxu0 0
        %3536 = vmatpush1.bf16.msra.mxu0 %v3330
        %3537 = vmatprep.subr.bf16.mxu0 0
        %3538 = vmatpush1.bf16.msra.mxu0 %v3331
        %3539 = vmatprep.subr.bf16.mxu0 0
        %3540 = vmatpush1.bf16.msra.mxu0 %v3332
        %3541 = vmatprep.subr.bf16.mxu0 0
        %3542 = vmatpush1.bf16.msra.mxu0 %v3333
        %3543 = vmatprep.subr.bf16.mxu0 0
        %3544 = vmatpush1.bf16.msra.mxu0 %v3334
        %3545 = vmatprep.mubr.bf16.mxu0 %v2851
        %3546 = vmatmul.mubr.bf16.gmra.mrb[0].mxu0 %v2850
        %v3547 = vpop.f32.mrb[0].mxu0
        %v3548 = vadd.f32 %v3507, %v3547
        %v3549 = vpop.f32.mrb[0].mxu0
        %v3550 = vpop.f32.mrb[0].mxu0
        %v3551 = vadd.f32 %v3510, %v3550
        %v3552 = vpop.f32.mrb[0].mxu0
        %3553 = vdwg.mxu0
        %3554 = vmatprep.subr.bf16.mxu0 0
        %3555 = vmatpush1.bf16.msra.mxu0 %v3335
        %3556 = vmatprep.subr.bf16.mxu0 0
        %3557 = vmatpush1.bf16.msra.mxu0 %v3336
        %3558 = vmatprep.subr.bf16.mxu0 0
        %3559 = vmatpush1.bf16.msra.mxu0 %v3337
        %3560 = vmatprep.subr.bf16.mxu0 0
        %3561 = vmatpush1.bf16.msra.mxu0 %v3338
        %3562 = vmatprep.subr.bf16.mxu0 0
        %3563 = vmatpush1.bf16.msra.mxu0 %v3339
        %3564 = vmatprep.subr.bf16.mxu0 0
        %3565 = vmatpush1.bf16.msra.mxu0 %v3340
        %3566 = vmatprep.subr.bf16.mxu0 0
        %3567 = vmatpush1.bf16.msra.mxu0 %v3341
        %3568 = vmatprep.subr.bf16.mxu0 0
        %3569 = vmatpush1.bf16.msra.mxu0 %v3342
        %3570 = vmatprep.subr.bf16.mxu0 0
        %3571 = vmatpush1.bf16.msra.mxu0 %v3343
        %3572 = vmatprep.subr.bf16.mxu0 0
        %3573 = vmatpush1.bf16.msra.mxu0 %v3344
        %3574 = vmatprep.subr.bf16.mxu0 0
        %3575 = vmatpush1.bf16.msra.mxu0 %v3345
        %3576 = vmatprep.subr.bf16.mxu0 0
        %3577 = vmatpush1.bf16.msra.mxu0 %v3346
        %3578 = vmatprep.subr.bf16.mxu0 0
        %3579 = vmatpush1.bf16.msra.mxu0 %v3347
        %3580 = vmatprep.subr.bf16.mxu0 0
        %3581 = vmatpush1.bf16.msra.mxu0 %v3348
        %3582 = vmatprep.subr.bf16.mxu0 0
        %3583 = vmatpush1.bf16.msra.mxu0 %v3349
        %3584 = vmatprep.subr.bf16.mxu0 0
        %3585 = vmatpush1.bf16.msra.mxu0 %v3350
        %3586 = vmatprep.mubr.bf16.mxu0 %v2853
        %3587 = vmatmul.mubr.bf16.gmra.mrb[0].mxu0 %v2852
        %v3588 = vpop.f32.mrb[0].mxu0
        %v3589 = vadd.f32 %v3548, %v3588
        %v3590 = vpop.f32.mrb[0].mxu0
        %v3591 = vpop.f32.mrb[0].mxu0
        %v3592 = vadd.f32 %v3551, %v3591
        %v3593 = vpop.f32.mrb[0].mxu0
        %3594 = vdwg.mxu0
        %3595 = vmatprep.subr.bf16.mxu0 0
        %3596 = vmatpush1.bf16.msra.mxu0 %v3351
        %3597 = vmatprep.subr.bf16.mxu0 0
        %3598 = vmatpush1.bf16.msra.mxu0 %v3352
        %3599 = vmatprep.subr.bf16.mxu0 0
        %3600 = vmatpush1.bf16.msra.mxu0 %v3353
        %3601 = vmatprep.subr.bf16.mxu0 0
        %3602 = vmatpush1.bf16.msra.mxu0 %v3354
        %3603 = vmatprep.subr.bf16.mxu0 0
        %3604 = vmatpush1.bf16.msra.mxu0 %v3355
        %3605 = vmatprep.subr.bf16.mxu0 0
        %3606 = vmatpush1.bf16.msra.mxu0 %v3356
        %3607 = vmatprep.subr.bf16.mxu0 0
        %3608 = vmatpush1.bf16.msra.mxu0 %v3357
        %3609 = vmatprep.subr.bf16.mxu0 0
        %3610 = vmatpush1.bf16.msra.mxu0 %v3358
        %3611 = vmatprep.subr.bf16.mxu0 0
        %3612 = vmatpush1.bf16.msra.mxu0 0
        %3613 = vmatprep.subr.bf16.mxu0 0
        %3614 = vmatpush1.bf16.msra.mxu0 0
        %3615 = vmatprep.subr.bf16.mxu0 0
        %3616 = vmatpush1.bf16.msra.mxu0 0
        %3617 = vmatprep.subr.bf16.mxu0 0
        %3618 = vmatpush1.bf16.msra.mxu0 0
        %3619 = vmatprep.subr.bf16.mxu0 0
        %3620 = vmatpush1.bf16.msra.mxu0 0
        %3621 = vmatprep.subr.bf16.mxu0 0
        %3622 = vmatpush1.bf16.msra.mxu0 0
        %3623 = vmatprep.subr.bf16.mxu0 0
        %3624 = vmatpush1.bf16.msra.mxu0 0
        %3625 = vmatprep.subr.bf16.mxu0 0
        %3626 = vmatpush1.bf16.msra.mxu0 0
        %3627 = vmatprep.mubr.bf16.mxu0 0
        %3628 = vmatmul.mubr.bf16.gmra.mrb[0].mxu0 %v2854
        %v3629 = vpop.f32.mrb[0].mxu0
        %v3630 = vadd.f32 %v3589, %v3629
        %v3631 = vpop.f32.mrb[0].mxu0
        %v3632 = vpop.f32.mrb[0].mxu0
        %v3633 = vadd.f32 %v3592, %v3632
        %v3634 = vpop.f32.mrb[0].mxu0
        %3635 = vdwg.mxu0
        %v3636 = vld [vmem:[%s9] sm:$0x1]
        %v3638 = vlaneseq
        %v3639 = vshrl.u32 %v3638, 7
        %v3640 = vsub.s32 0, %v3639
        %v3641 = vrot.slane %v3636, %v3640
        %v3643 = vmul.f32 %v3630, %v3641
        %v3644 = vmul.f32 %v3633, %v3641
        %v3645 = vld [vmem:[%s10] sm:$0x1]
        %v3647 = vlaneseq
        %v3648 = vshrl.u32 %v3647, 7
        %v3649 = vsub.s32 0, %v3648
        %v3650 = vrot.slane %v3645, %v3649
        %v3652 = vadd.f32 %v3643, %v3650
        %v3653 = vadd.f32 %v3644, %v3650
        %3654 = vst [vmem:[%s734] sm:$0xff] %v3652
        %3655 = vst [vmem:[%s734 + $0x8] sm:$0xff] %v3653
        %v3656 = vadd.f32 %v3652, %v1750
        %v3657 = vadd.f32 %v3653, %v1751
        %v3658 = vmax.f32 %v3656, 0.0
        %v3659 = vmax.f32 %v3657, 0.0
        %3660 = vst [vmem:[%s741] sm:$0xff] %v3658
        %3661 = vst [vmem:[%s741 + $0x8] sm:$0xff] %v3659
        %v3662 = vadd.f32 %v3658, %v3659
        %v3663 = vrot.slane %v3662, 4
        %v3664 = vadd.f32 %v3662, %v3663
        %v3665 = vrot.slane %v3664, 2
        %v3666 = vadd.f32 %v3664, %v3665
        %v3667 = vrot.slane %v3666, 1
        %v3668 = vadd.f32 %v3666, %v3667
        %v3669 = vld [vmem:[%s11] sm:$0xff]
        %v3670 = vld [vmem:[%s11 + $0x8] sm:$0xff]
        %v3671 = vld [vmem:[%s11 + $0x10] sm:$0xff]
        %v3672 = vld [vmem:[%s11 + $0x18] sm:$0xff]
        %v3673 = vld [vmem:[%s11 + $0x20] sm:$0xff]
        %v3674 = vld [vmem:[%s11 + $0x28] sm:$0xff]
        %v3675 = vld [vmem:[%s11 + $0x30] sm:$0xff]
        %v3676 = vld [vmem:[%s11 + $0x38] sm:$0xff]
        %v3677 = vld [vmem:[%s11 + $0x40] sm:$0xff]
        %v3678 = vld [vmem:[%s11 + $0x48] sm:$0xff]
        %v3679 = vld [vmem:[%s11 + $0x50] sm:$0xff]
        %v3680 = vld [vmem:[%s11 + $0x58] sm:$0xff]
        %v3681 = vld [vmem:[%s11 + $0x60] sm:$0xff]
        %v3682 = vld [vmem:[%s11 + $0x68] sm:$0xff]
        %v3683 = vld [vmem:[%s11 + $0x70] sm:$0xff]
        %v3684 = vld [vmem:[%s11 + $0x78] sm:$0xff]
        %3685 = vmatprep.subr.mxu0 0.0
        %3686 = vmatpush1.msra.mxu0 %v3669
        %3687 = vmatprep.subr.mxu0 0.0
        %3688 = vmatpush1.msra.mxu0 %v3670
        %3689 = vmatprep.subr.mxu0 0.0
        %3690 = vmatpush1.msra.mxu0 %v3671
        %3691 = vmatprep.subr.mxu0 0.0
        %3692 = vmatpush1.msra.mxu0 %v3672
        %3693 = vmatprep.subr.mxu0 0.0
        %3694 = vmatpush1.msra.mxu0 %v3673
        %3695 = vmatprep.subr.mxu0 0.0
        %3696 = vmatpush1.msra.mxu0 %v3674
        %3697 = vmatprep.subr.mxu0 0.0
        %3698 = vmatpush1.msra.mxu0 %v3675
        %3699 = vmatprep.subr.mxu0 0.0
        %3700 = vmatpush1.msra.mxu0 %v3676
        %3701 = vmatprep.subr.mxu0 0.0
        %3702 = vmatpush1.msra.mxu0 %v3677
        %3703 = vmatprep.subr.mxu0 0.0
        %3704 = vmatpush1.msra.mxu0 %v3678
        %3705 = vmatprep.subr.mxu0 0.0
        %3706 = vmatpush1.msra.mxu0 %v3679
        %3707 = vmatprep.subr.mxu0 0.0
        %3708 = vmatpush1.msra.mxu0 %v3680
        %3709 = vmatprep.subr.mxu0 0.0
        %3710 = vmatpush1.msra.mxu0 %v3681
        %3711 = vmatprep.subr.mxu0 0.0
        %3712 = vmatpush1.msra.mxu0 %v3682
        %3713 = vmatprep.subr.mxu0 0.0
        %3714 = vmatpush1.msra.mxu0 %v3683
        %3715 = vmatprep.subr.mxu0 0.0
        %3716 = vmatpush1.msra.mxu0 %v3684
        %3717 = vmatprep.subr.mxu0 0.0
        %3718 = vmatpush1.msra.mxu0 0.0
        %3719 = vmatprep.subr.mxu0 0.0
        %3720 = vmatpush1.msra.mxu0 0.0
        %3721 = vmatprep.subr.mxu0 0.0
        %3722 = vmatpush1.msra.mxu0 0.0
        %3723 = vmatprep.subr.mxu0 0.0
        %3724 = vmatpush1.msra.mxu0 0.0
        %3725 = vmatprep.subr.mxu0 0.0
        %3726 = vmatpush1.msra.mxu0 0.0
        %3727 = vmatprep.subr.mxu0 0.0
        %3728 = vmatpush1.msra.mxu0 0.0
        %3729 = vmatprep.subr.mxu0 0.0
        %3730 = vmatpush1.msra.mxu0 0.0
        %3731 = vmatprep.subr.mxu0 0.0
        %3732 = vmatpush1.msra.mxu0 0.0
        %3733 = vmatprep.subr.mxu0 0.0
        %3734 = vmatpush1.msra.mxu0 0.0
        %3735 = vmatprep.subr.mxu0 0.0
        %3736 = vmatpush1.msra.mxu0 0.0
        %3737 = vmatprep.subr.mxu0 0.0
        %3738 = vmatpush1.msra.mxu0 0.0
        %3739 = vmatprep.subr.mxu0 0.0
        %3740 = vmatpush1.msra.mxu0 0.0
        %3741 = vmatprep.subr.mxu0 0.0
        %3742 = vmatpush1.msra.mxu0 0.0
        %3743 = vmatprep.subr.mxu0 0.0
        %3744 = vmatpush1.msra.mxu0 0.0
        %3745 = vmatprep.subr.mxu0 0.0
        %3746 = vmatpush1.msra.mxu0 0.0
        %3747 = vmatprep.subr.mxu0 0.0
        %3748 = vmatpush1.msra.mxu0 0.0
        %3749 = vmatprep.mubr.f32.mxu0 0.0
        %3750 = vmatmul.mubr.f32.gmra.mrb[0].mxu0 %v3668
        %v3751 = vpop.f32.mrb[0].mxu0
        %v3752 = vadd.f32 0.0, %v3751
        %v3753 = vpop.f32.mrb[0].mxu0
        %3754 = vdwg.mxu0
        %3755 = vst.msk [vmem:[%s747] sm:$0x1] %vm805, %v3752
        %v3756 = vld [vmem:[%s12] sm:$0xff]
        %v3757 = vld [vmem:[%s13] sm:$0x1]
        %v3759 = vsel %vm769, %v3752, 0
        %3761 = vmatprep.subr.mxu0 0.0
        %3762 = vmatpush1.msra.mxu0 %v3756
        %3763 = vmatprep.subr.mxu0 0.0
        %3764 = vmatpush1.msra.mxu0 0.0
        %3765 = vmatprep.subr.mxu0 0.0
        %3766 = vmatpush1.msra.mxu0 0.0
        %3767 = vmatprep.subr.mxu0 0.0
        %3768 = vmatpush1.msra.mxu0 0.0
        %3769 = vmatprep.subr.mxu0 0.0
        %3770 = vmatpush1.msra.mxu0 0.0
        %3771 = vmatprep.subr.mxu0 0.0
        %3772 = vmatpush1.msra.mxu0 0.0
        %3773 = vmatprep.subr.mxu0 0.0
        %3774 = vmatpush1.msra.mxu0 0.0
        %3775 = vmatprep.subr.mxu0 0.0
        %3776 = vmatpush1.msra.mxu0 0.0
        %3777 = vmatprep.subr.mxu0 0.0
        %3778 = vmatpush1.msra.mxu0 0.0
        %3779 = vmatprep.subr.mxu0 0.0
        %3780 = vmatpush1.msra.mxu0 0.0
        %3781 = vmatprep.subr.mxu0 0.0
        %3782 = vmatpush1.msra.mxu0 0.0
        %3783 = vmatprep.subr.mxu0 0.0
        %3784 = vmatpush1.msra.mxu0 0.0
        %3785 = vmatprep.subr.mxu0 0.0
        %3786 = vmatpush1.msra.mxu0 0.0
        %3787 = vmatprep.subr.mxu0 0.0
        %3788 = vmatpush1.msra.mxu0 0.0
        %3789 = vmatprep.subr.mxu0 0.0
        %3790 = vmatpush1.msra.mxu0 0.0
        %3791 = vmatprep.subr.mxu0 0.0
        %3792 = vmatpush1.msra.mxu0 0.0
        %3793 = vmatprep.subr.mxu0 0.0
        %3794 = vmatpush1.msra.mxu0 0.0
        %3795 = vmatprep.subr.mxu0 0.0
        %3796 = vmatpush1.msra.mxu0 0.0
        %3797 = vmatprep.subr.mxu0 0.0
        %3798 = vmatpush1.msra.mxu0 0.0
        %3799 = vmatprep.subr.mxu0 0.0
        %3800 = vmatpush1.msra.mxu0 0.0
        %3801 = vmatprep.subr.mxu0 0.0
        %3802 = vmatpush1.msra.mxu0 0.0
        %3803 = vmatprep.subr.mxu0 0.0
        %3804 = vmatpush1.msra.mxu0 0.0
        %3805 = vmatprep.subr.mxu0 0.0
        %3806 = vmatpush1.msra.mxu0 0.0
        %3807 = vmatprep.subr.mxu0 0.0
        %3808 = vmatpush1.msra.mxu0 0.0
        %3809 = vmatprep.subr.mxu0 0.0
        %3810 = vmatpush1.msra.mxu0 0.0
        %3811 = vmatprep.subr.mxu0 0.0
        %3812 = vmatpush1.msra.mxu0 0.0
        %3813 = vmatprep.subr.mxu0 0.0
        %3814 = vmatpush1.msra.mxu0 0.0
        %3815 = vmatprep.subr.mxu0 0.0
        %3816 = vmatpush1.msra.mxu0 0.0
        %3817 = vmatprep.subr.mxu0 0.0
        %3818 = vmatpush1.msra.mxu0 0.0
        %3819 = vmatprep.subr.mxu0 0.0
        %3820 = vmatpush1.msra.mxu0 0.0
        %3821 = vmatprep.subr.mxu0 0.0
        %3822 = vmatpush1.msra.mxu0 0.0
        %3823 = vmatprep.subr.mxu0 0.0
        %3824 = vmatpush1.msra.mxu0 0.0
        %3825 = vmatprep.mubr.f32.mxu0 0.0
        %3826 = vmatmul.mubr.f32.gmra.mrb[0].mxu0 %v3759
        %v3827 = vpop.f32.mrb[0].mxu0
        %v3828 = vadd.f32 %v3757, %v3827
        %v3829 = vpop.f32.mrb[0].mxu0
        %3830 = vdwg.mxu0
        %vm3831 = vcmask 73728
        %3832 = vst.msk [vmem:[%s753] sm:$0x1] %vm3831, %v3828
        %s3833 = sand.u32 %s357, 1
        %s3834 = scalar_lea.sflag [#allocation5], %s3833
        %s3835 = sand.u32 %s357, 1
        %s3836 = smul.addr %s3835, 16
        %s3837 = scalar_lea.vmem [#allocation9], %s3836
        %s3838 = sand.u32 %s50, 1
        %s3839 = scalar_lea.sflag [#allocation11], %s3838
        %s3840 = sand.u32 %s383, 1
        %s3841 = smul.addr %s3840, 16
        %s3842 = scalar_lea.vmem [#allocation10], %s3841
        %s3843 = sand.u32 %s50, 1
        %s3844 = scalar_lea.sflag [#allocation11], %s3843
        %s3845 = sand.u32 %s409, 1
        %s3846 = smul.addr %s3845, 16
        %s3847 = scalar_lea.vmem [#allocation12], %s3846
        %s3848 = sand.u32 %s50, 1
        %s3849 = scalar_lea.sflag [#allocation14], %s3848
        %s3850 = sand.u32 %s435, 1
        %s3851 = smul.addr %s3850, 16
        %s3852 = scalar_lea.vmem [#allocation13], %s3851
        %s3853 = sand.u32 %s50, 1
        %s3854 = scalar_lea.sflag [#allocation14], %s3853
        %s3855 = sand.u32 %s461, 1
        %s3856 = smul.addr %s3855, 16
        %s3857 = scalar_lea.vmem [#allocation15], %s3856
        %s3858 = sand.u32 %s50, 1
        %s3859 = scalar_lea.sflag [#allocation17], %s3858
        %s3860 = sand.u32 %s487, 1
        %s3861 = smul.addr %s3860, 16
        %s3862 = scalar_lea.vmem [#allocation16], %s3861
        %s3863 = sand.u32 %s50, 1
        %s3864 = scalar_lea.sflag [#allocation17], %s3863
        %s3865 = sand.u32 %s513, 1
        %s3866 = scalar_lea.vmem [#allocation18], %s3865
        %s3867 = sand.u32 %s539, 1
        %s3868 = scalar_lea.sflag [#allocation20], %s3867
        %s3869 = sand.u32 %s539, 1
        %s3870 = scalar_lea.vmem [#allocation19], %s3869
        // Predicated region
        $region89: #{tpu_custom_call.1} parent=75 // pred_check
          %p3871 = pneg %p367
        $region90: #{tpu_custom_call.1} parent=75 // pred_check_branch
          %3873 = sbr.rel (%p3871) target = $region92
        $region91: #{tpu_custom_call.1} parent=75 // pred_region
          %s3875 = ssub.s32 256, 256
          %3876 = vsyncadd %s3834, %s3875
          %s3877 = smul.addr %s50, 2
          %s3878 = smul.addr %s3877, 128
          %s3879 = scalar_lea.hbm %s14, %s3878
          %s3880 = sshll.u32 %s3837, 4
          %s3881 = int_to_ptr.vmem [resolvable:$true] %s3880
          %3886 = dma.vmem_to_hbm [thread:$0]  %s3881, 256, %s3879, %s3834, 128, 128, 8
        $region92: #{tpu_custom_call.1} parent=75 // pred_fallthru
          _
        // Predicated region
        $region93: #{tpu_custom_call.1} parent=75 // pred_check
          %p3887 = pneg %p393
        $region94: #{tpu_custom_call.1} parent=75 // pred_check_branch
          %3889 = sbr.rel (%p3887) target = $region96
        $region95: #{tpu_custom_call.1} parent=75 // pred_region
          %s3891 = ssub.s32 256, 256
          %3892 = vsyncadd %s3839, %s3891
          %s3893 = smul.addr %s50, 2
          %s3894 = smul.addr %s3893, 128
          %s3895 = scalar_lea.hbm %s15, %s3894
          %s3896 = sshll.u32 %s3842, 4
          %s3897 = int_to_ptr.vmem [resolvable:$true] %s3896
          %3902 = dma.vmem_to_hbm [thread:$0]  %s3897, 256, %s3895, %s3839, 128, 128, 8
        $region96: #{tpu_custom_call.1} parent=75 // pred_fallthru
          _
        // Predicated region
        $region97: #{tpu_custom_call.1} parent=75 // pred_check
          %p3903 = pneg %p419
        $region98: #{tpu_custom_call.1} parent=75 // pred_check_branch
          %3905 = sbr.rel (%p3903) target = $region100
        $region99: #{tpu_custom_call.1} parent=75 // pred_region
          %s3907 = ssub.s32 256, 256
          %3908 = vsyncadd %s3844, %s3907
          %s3909 = smul.addr %s50, 2
          %s3910 = smul.addr %s3909, 128
          %s3911 = scalar_lea.hbm %s16, %s3910
          %s3912 = sshll.u32 %s3847, 4
          %s3913 = int_to_ptr.vmem [resolvable:$true] %s3912
          %3918 = dma.vmem_to_hbm [thread:$0]  %s3913, 256, %s3911, %s3844, 128, 128, 8
        $region100: #{tpu_custom_call.1} parent=75 // pred_fallthru
          _
        // Predicated region
        $region101: #{tpu_custom_call.1} parent=75 // pred_check
          %p3919 = pneg %p445
        $region102: #{tpu_custom_call.1} parent=75 // pred_check_branch
          %3921 = sbr.rel (%p3919) target = $region104
        $region103: #{tpu_custom_call.1} parent=75 // pred_region
          %s3923 = ssub.s32 256, 256
          %3924 = vsyncadd %s3849, %s3923
          %s3925 = smul.addr %s50, 2
          %s3926 = smul.addr %s3925, 128
          %s3927 = scalar_lea.hbm %s17, %s3926
          %s3928 = sshll.u32 %s3852, 4
          %s3929 = int_to_ptr.vmem [resolvable:$true] %s3928
          %3934 = dma.vmem_to_hbm [thread:$0]  %s3929, 256, %s3927, %s3849, 128, 128, 8
        $region104: #{tpu_custom_call.1} parent=75 // pred_fallthru
          _
        // Predicated region
        $region105: #{tpu_custom_call.1} parent=75 // pred_check
          %p3935 = pneg %p471
        $region106: #{tpu_custom_call.1} parent=75 // pred_check_branch
          %3937 = sbr.rel (%p3935) target = $region108
        $region107: #{tpu_custom_call.1} parent=75 // pred_region
          %s3939 = ssub.s32 256, 256
          %3940 = vsyncadd %s3854, %s3939
          %s3941 = smul.addr %s50, 2
          %s3942 = smul.addr %s3941, 128
          %s3943 = scalar_lea.hbm %s18, %s3942
          %s3944 = sshll.u32 %s3857, 4
          %s3945 = int_to_ptr.vmem [resolvable:$true] %s3944
          %3950 = dma.vmem_to_hbm [thread:$0]  %s3945, 256, %s3943, %s3854, 128, 128, 8
        $region108: #{tpu_custom_call.1} parent=75 // pred_fallthru
          _
        // Predicated region
        $region109: #{tpu_custom_call.1} parent=75 // pred_check
          %p3951 = pneg %p497
        $region110: #{tpu_custom_call.1} parent=75 // pred_check_branch
          %3953 = sbr.rel (%p3951) target = $region112
        $region111: #{tpu_custom_call.1} parent=75 // pred_region
          %s3955 = ssub.s32 256, 256
          %3956 = vsyncadd %s3859, %s3955
          %s3957 = smul.addr %s50, 2
          %s3958 = smul.addr %s3957, 128
          %s3959 = scalar_lea.hbm %s19, %s3958
          %s3960 = sshll.u32 %s3862, 4
          %s3961 = int_to_ptr.vmem [resolvable:$true] %s3960
          %3966 = dma.vmem_to_hbm [thread:$0]  %s3961, 256, %s3959, %s3859, 128, 128, 8
        $region112: #{tpu_custom_call.1} parent=75 // pred_fallthru
          _
        // Predicated region
        $region113: #{tpu_custom_call.1} parent=75 // pred_check
          %p3967 = pneg %p523
        $region114: #{tpu_custom_call.1} parent=75 // pred_check_branch
          %3969 = sbr.rel (%p3967) target = $region116
        $region115: #{tpu_custom_call.1} parent=75 // pred_region
          %s3971 = ssub.s32 16, 16
          %3972 = vsyncadd %s3864, %s3971
          %s3973 = smul.addr %s50, 16
          %s3974 = scalar_lea.hbm %s20, %s3973
          %s3976 = sshll.u32 %s3866, 4
          %s3977 = int_to_ptr.vmem [resolvable:$true] %s3976
          %3979 = dma.vmem_to_hbm [thread:$0]  %s3977, 16, %s3974, %s3864
        $region116: #{tpu_custom_call.1} parent=75 // pred_fallthru
          _
        // Predicated region
        $region117: #{tpu_custom_call.1} parent=75 // pred_check
          %p3980 = pneg %p549
        $region118: #{tpu_custom_call.1} parent=75 // pred_check_branch
          %3982 = sbr.rel (%p3980) target = $region120
        $region119: #{tpu_custom_call.1} parent=75 // pred_region
          %s3984 = ssub.s32 16, 16
          %3985 = vsyncadd %s3868, %s3984
          %s3986 = smul.addr %s50, 16
          %s3987 = scalar_lea.hbm %s21, %s3986
          %s3989 = sshll.u32 %s3870, 4
          %s3990 = int_to_ptr.vmem [resolvable:$true] %s3989
          %3992 = dma.vmem_to_hbm [thread:$0]  %s3990, 16, %s3987, %s3868
        $region120: #{tpu_custom_call.1} parent=75 // pred_fallthru
          _
      $region76: #{tpu_custom_call.1} parent=5 // pred_fallthru
        _
      %p3993 = scmp.le.s32.totalorder 2, %s45
      // Predicated region
      $region121: #{tpu_custom_call.1} parent=5 // pred_check
        %p3994 = pneg %p3993
      $region122: #{tpu_custom_call.1} parent=5 // pred_check_branch
        %3996 = sbr.rel (%p3994) target = $region124
      $region123: #{tpu_custom_call.1} parent=5 // pred_region
        %s3997 = ssub.s32 %s45, 2
        // Predicated region
        $region125: #{tpu_custom_call.1} parent=123 // pred_check
          %p3998 = pneg %p373
        $region126: #{tpu_custom_call.1} parent=123 // pred_check_branch
          %4000 = sbr.rel (%p3998) target = $region128
        $region127: #{tpu_custom_call.1} parent=123 // pred_region
          %s4001 = sand.u32 %s358, 1
          %s4002 = scalar_lea.sflag [#allocation5], %s4001
          %s4003 = sand.u32 %s358, 1
          %s4004 = smul.addr %s4003, 16
          %s4005 = scalar_lea.vmem [#allocation9], %s4004
          %4006 = dma.done %s4002, 256
        $region128: #{tpu_custom_call.1} parent=123 // pred_fallthru
          _
        // Predicated region
        $region129: #{tpu_custom_call.1} parent=123 // pred_check
          %p4007 = pneg %p399
        $region130: #{tpu_custom_call.1} parent=123 // pred_check_branch
          %4009 = sbr.rel (%p4007) target = $region132
        $region131: #{tpu_custom_call.1} parent=123 // pred_region
          %s4010 = sand.u32 %s51, 1
          %s4011 = scalar_lea.sflag [#allocation11], %s4010
          %s4012 = sand.u32 %s384, 1
          %s4013 = smul.addr %s4012, 16
          %s4014 = scalar_lea.vmem [#allocation10], %s4013
          %4015 = dma.done %s4011, 256
        $region132: #{tpu_custom_call.1} parent=123 // pred_fallthru
          _
        // Predicated region
        $region133: #{tpu_custom_call.1} parent=123 // pred_check
          %p4016 = pneg %p425
        $region134: #{tpu_custom_call.1} parent=123 // pred_check_branch
          %4018 = sbr.rel (%p4016) target = $region136
        $region135: #{tpu_custom_call.1} parent=123 // pred_region
          %s4019 = sand.u32 %s51, 1
          %s4020 = scalar_lea.sflag [#allocation11], %s4019
          %s4021 = sand.u32 %s410, 1
          %s4022 = smul.addr %s4021, 16
          %s4023 = scalar_lea.vmem [#allocation12], %s4022
          %4024 = dma.done %s4020, 256
        $region136: #{tpu_custom_call.1} parent=123 // pred_fallthru
          _
        // Predicated region
        $region137: #{tpu_custom_call.1} parent=123 // pred_check
          %p4025 = pneg %p451
        $region138: #{tpu_custom_call.1} parent=123 // pred_check_branch
          %4027 = sbr.rel (%p4025) target = $region140
        $region139: #{tpu_custom_call.1} parent=123 // pred_region
          %s4028 = sand.u32 %s51, 1
          %s4029 = scalar_lea.sflag [#allocation14], %s4028
          %s4030 = sand.u32 %s436, 1
          %s4031 = smul.addr %s4030, 16
          %s4032 = scalar_lea.vmem [#allocation13], %s4031
          %4033 = dma.done %s4029, 256
        $region140: #{tpu_custom_call.1} parent=123 // pred_fallthru
          _
        // Predicated region
        $region141: #{tpu_custom_call.1} parent=123 // pred_check
          %p4034 = pneg %p477
        $region142: #{tpu_custom_call.1} parent=123 // pred_check_branch
          %4036 = sbr.rel (%p4034) target = $region144
        $region143: #{tpu_custom_call.1} parent=123 // pred_region
          %s4037 = sand.u32 %s51, 1
          %s4038 = scalar_lea.sflag [#allocation14], %s4037
          %s4039 = sand.u32 %s462, 1
          %s4040 = smul.addr %s4039, 16
          %s4041 = scalar_lea.vmem [#allocation15], %s4040
          %4042 = dma.done %s4038, 256
        $region144: #{tpu_custom_call.1} parent=123 // pred_fallthru
          _
        // Predicated region
        $region145: #{tpu_custom_call.1} parent=123 // pred_check
          %p4043 = pneg %p503
        $region146: #{tpu_custom_call.1} parent=123 // pred_check_branch
          %4045 = sbr.rel (%p4043) target = $region148
        $region147: #{tpu_custom_call.1} parent=123 // pred_region
          %s4046 = sand.u32 %s51, 1
          %s4047 = scalar_lea.sflag [#allocation17], %s4046
          %s4048 = sand.u32 %s488, 1
          %s4049 = smul.addr %s4048, 16
          %s4050 = scalar_lea.vmem [#allocation16], %s4049
          %4051 = dma.done %s4047, 256
        $region148: #{tpu_custom_call.1} parent=123 // pred_fallthru
          _
        // Predicated region
        $region149: #{tpu_custom_call.1} parent=123 // pred_check
          %p4052 = pneg %p529
        $region150: #{tpu_custom_call.1} parent=123 // pred_check_branch
          %4054 = sbr.rel (%p4052) target = $region152
        $region151: #{tpu_custom_call.1} parent=123 // pred_region
          %s4055 = sand.u32 %s51, 1
          %s4056 = scalar_lea.sflag [#allocation17], %s4055
          %s4057 = sand.u32 %s514, 1
          %s4058 = scalar_lea.vmem [#allocation18], %s4057
          %4059 = dma.done %s4056, 16
        $region152: #{tpu_custom_call.1} parent=123 // pred_fallthru
          _
        // Predicated region
        $region153: #{tpu_custom_call.1} parent=123 // pred_check
          %p4060 = pneg %p555
        $region154: #{tpu_custom_call.1} parent=123 // pred_check_branch
          %4062 = sbr.rel (%p4060) target = $region156
        $region155: #{tpu_custom_call.1} parent=123 // pred_region
          %s4063 = sand.u32 %s540, 1
          %s4064 = scalar_lea.sflag [#allocation20], %s4063
          %s4065 = sand.u32 %s540, 1
          %s4066 = scalar_lea.vmem [#allocation19], %s4065
          %4067 = dma.done %s4064, 16
        $region156: #{tpu_custom_call.1} parent=123 // pred_fallthru
          _
      $region124: #{tpu_custom_call.1} parent=5 // pred_fallthru
        _
    $region6: #{tpu_custom_call.1} parent=1 // loop_footer
      %s49 = sadd.s32 1, %s45
    $region7: #{tpu_custom_call.1} parent=1 // loop_footer_branch
      %44 = sbr.rel target = $region3
    $region8: #{tpu_custom_call.1} parent=1 // loop_exit
      _
    %4068 = vsyncpa [#allocation4], 1
    %s4069 = scalar_lea.sflag [#allocation4], 1
    %4070 = vsyncpa %s4069, 1
    %4071 = vsyncpa [#allocation7], 1
    %4072 = vsyncpa [#allocation5], 1
    %s4073 = scalar_lea.sflag [#allocation5], 1
    %4074 = vsyncpa %s4073, 1
    %4075 = vsyncpa [#allocation11], 1
    %s4076 = scalar_lea.sflag [#allocation11], 1
    %4077 = vsyncpa %s4076, 1
    %4078 = vsyncpa [#allocation14], 1
    %s4079 = scalar_lea.sflag [#allocation14], 1
    %4080 = vsyncpa %s4079, 1
    %4081 = vsyncpa [#allocation17], 1
    %s4082 = scalar_lea.sflag [#allocation17], 1
    %4083 = vsyncpa %s4082, 1
    %4084 = vsyncpa [#allocation20], 1
    %s4085 = scalar_lea.sflag [#allocation20], 1
    %4086 = vsyncpa %s4085, 1

</llo_original>
